<compile_context>
chip_gen: v7x
topology: tpu7x:2x2x1
jax: 0.10.0
libtpu: 0.0.40
codegen_flags: <defaults>
</compile_context>

<pallas_src>
import math

import numpy as np
import jax
import jax.numpy as jnp
from jax import lax
from jax.experimental import pallas as pl
from jax.experimental.pallas import tpu as pltpu

EPS = 1e-5
NEG_SLOPE = 0.01                  # nn.LeakyReLU() default
L_TILE_MAX = 512                  # max conv-output rows per grid step
VMEM_LIMIT = 32 * 1024 * 1024

_TAPS = [(kh, kw) for kh in range(3) for kw in range(3)]


def _round_up(x, m):
    return (x + m - 1) // m * m


class ConvGeom:
    """Static (trace-time) geometry of one 3x3 / stride-2 / pad-1 conv layer in
    the 4-phase row-flattened layout."""

    def __init__(self, h, w):
        assert h % 2 == 0 and w % 2 == 0, "spatial dims must be even"
        self.h, self.w = h, w
        self.oh, self.ow = h // 2, w // 2
        self.owp = self.ow + 1                                # flattened row pitch
        self.plane = _round_up((self.oh + 1) * self.owp + 1, 8)   # rows per phase
        self.L = self.oh * self.owp                           # output rows (junk col incl.)
        self.n_lt = max(1, math.ceil(self.L / L_TILE_MAX))    # spatial grid tiles
        self.l_tile = _round_up(math.ceil(self.L / self.n_lt), 16)
        self.l_pad = self.n_lt * self.l_tile
        # rows of the flattened input: enough for the furthest tap window.
        self.rows = _round_up(3 * self.plane + self.owp + 1 + self.l_pad, 8)

    def tap_base(self, kh, kw):
        p = (kh % 2) * 2 + (kw % 2)
        return p * self.plane + (kh // 2) * self.owp + (kw // 2)

    def gather_plan(self, src_row_of):
        """Static row-gather mapping a source feature map (flattened rows) to
        this layer's 4-phase flattened, zero-padded input layout."""
        idx = np.zeros((self.rows,), np.int32)
        msk = np.zeros((self.rows, 1), np.float32)
        i = np.arange(self.oh + 1)[:, None]
        j = np.arange(self.owp)[None, :]
        for p in range(4):
            pr, pc = p // 2, p % 2
            r_src = 2 * i + pr - 1
            c_src = 2 * j + pc - 1
            valid = (r_src >= 0) & (r_src < self.h) & (c_src >= 0) & (c_src < self.w)
            src = np.where(valid, src_row_of(r_src, c_src), 0)
            dst = (p * self.plane + i * self.owp + j).reshape(-1)
            idx[dst] = src.reshape(-1)
            msk[dst, 0] = valid.reshape(-1).astype(np.float32)
        return jnp.asarray(idx), jnp.asarray(msk)


# ----------------------------------------------------------------------------
# Pallas kernels
# ----------------------------------------------------------------------------
def _emit_out_and_stats(acc, y_ref, s_ref, row0, geom):
    """Store the conv tile (bf16) + masked per-tile BN statistics from f32 acc."""
    y_ref[...] = acc.astype(y_ref.dtype)
    gidx = row0 + lax.broadcasted_iota(jnp.int32, (acc.shape[0], 1), 0)
    valid = ((gidx % geom.owp) != geom.ow) & (gidx < geom.L)
    av = jnp.where(valid, acc, 0.0)
    s_ref[0:1, :] = jnp.sum(av, axis=0, keepdims=True)
    s_ref[1:2, :] = jnp.sum(av * av, axis=0, keepdims=True)


def make_conv_kernel(geom, cin, cout, first_layer):
    l_tile = geom.l_tile

    def row_start(lt):
        if geom.n_lt == 1:
            return 0                                   # static tap slices
        return pl.multiple_of(lt * l_tile, 16)

    if first_layer:
        # Cin == 1 (raw image): VPU broadcast-FMA per tap; padding rows were
        # already zeroed by the wrapper; no BN affine on the input.
        def kernel(x_ref, w_ref, y_ref, s_ref):
            row0 = row_start(pl.program_id(1))
            acc = jnp.zeros((l_tile, cout), jnp.float32)
            for kh, kw in _TAPS:
                xt = x_ref[pl.ds(geom.tap_base(kh, kw) + row0, l_tile), :]
                acc = acc + xt * w_ref[kh, kw]          # (l_tile,1)*(1,cout)
            _emit_out_and_stats(acc, y_ref, s_ref, row0, geom)
        return kernel

    def kernel(x_ref, w_ref, scale_ref, shift_ref, mask_ref, y_ref, s_ref, act_ref):
        lt = pl.program_id(1)
        row0 = row_start(lt)

        @pl.when(lt == 0)
        def _():
            # Fused BatchNorm affine + LeakyReLU of the previous layer, applied
            # once per image to the whole flattened input block; the mask
            # zeroes the conv zero-padding / guard rows.
            a = x_ref[...].astype(jnp.float32) * scale_ref[...] + shift_ref[...]
            a = jnp.where(a > 0, a, NEG_SLOPE * a) * mask_ref[...]
            act_ref[...] = a

        # In-kernel im2col: the 9 taps are shifted row windows of act; they are
        # concatenated along K and fed to one MXU matmul (f32 accumulation).
        patch = jnp.concatenate(
            [act_ref[pl.ds(geom.tap_base(kh, kw) + row0, l_tile), :]
             for kh, kw in _TAPS],
            axis=-1)
        acc = jnp.dot(patch.astype(jnp.bfloat16), w_ref[...],
                      preferred_element_type=jnp.float32)
        _emit_out_and_stats(acc, y_ref, s_ref, row0, geom)

    return kernel


def make_head_kernel(geom):
    """Fused BN3 affine + LeakyReLU + AdaptiveAvgPool2d(1) + Linear(128, 1)."""
    inv_count = 1.0 / (geom.oh * geom.ow)

    def kernel(y_ref, scale_ref, shift_ref, wl_ref, bl_ref, o_ref):
        y = y_ref[...].astype(jnp.float32) * scale_ref[...] + shift_ref[...]
        a = jnp.where(y > 0, y, NEG_SLOPE * y)
        gidx = lax.broadcasted_iota(jnp.int32, (y.shape[0], 1), 0)
        valid = ((gidx % geom.owp) != geom.ow) & (gidx < geom.L)
        a = jnp.where(valid, a, 0.0)
        pooled = jnp.sum(a, axis=0, keepdims=True) * inv_count          # (1, C)
        logit = jnp.sum(pooled * wl_ref[...], axis=1, keepdims=True) + bl_ref[...]
        o_ref[...] = logit + jnp.zeros(o_ref.shape, jnp.float32)        # lane bcast

    return kernel


# ----------------------------------------------------------------------------
# Wrappers
# ----------------------------------------------------------------------------
def conv_layer(xf, w, geom, cout, scale=None, shift=None, mask=None):
    """One Conv2d(.,.,3,2,1) layer; the PREVIOUS layer's BN+LeakyReLU is fused
    into the input path.  Returns the raw bf16 conv output (pre-BN, in the
    junk-carrying flattened layout) plus per-(image, tile) BN statistics."""
    n, _, cin = xf.shape
    first = scale is None
    kernel = make_conv_kernel(geom, cin, cout, first)

    if first:
        in_specs = [
            pl.BlockSpec((None, geom.rows, cin), lambda i, l: (i, 0, 0)),
            pl.BlockSpec((3, 3, cin, cout), lambda i, l: (0, 0, 0, 0)),
        ]
        args = (xf, w)
        scratch = []
    else:
        in_specs = [
            pl.BlockSpec((None, geom.rows, cin), lambda i, l: (i, 0, 0)),
            pl.BlockSpec((9 * cin, cout), lambda i, l: (0, 0)),
            pl.BlockSpec((1, cin), lambda i, l: (0, 0)),
            pl.BlockSpec((1, cin), lambda i, l: (0, 0)),
            pl.BlockSpec((geom.rows, 1), lambda i, l: (0, 0)),
        ]
        args = (xf, w, scale.reshape(1, cin), shift.reshape(1, cin), mask)
        scratch = [pltpu.VMEM((geom.rows, cin), jnp.float32)]

    n_lt = geom.n_lt
    y, stats = pl.pallas_call(
        kernel,
        grid=(n, n_lt),
        in_specs=in_specs,
        out_specs=(
            pl.BlockSpec((None, geom.l_tile, cout), lambda i, l: (i, l, 0)),
            pl.BlockSpec((None, 2, cout), lambda i, l: (i * n_lt + l, 0, 0)),
        ),
        out_shape=(
            jax.ShapeDtypeStruct((n, geom.l_pad, cout), jnp.bfloat16),
            jax.ShapeDtypeStruct((n * n_lt, 2, cout), jnp.float32),
        ),
        scratch_shapes=scratch,
        compiler_params=pltpu.CompilerParams(
            dimension_semantics=("parallel", "arbitrary"),
            vmem_limit_bytes=VMEM_LIMIT,
        ),
    )(*args)
    return y, stats


def bn_scale_shift(stats, gamma, beta, count):
    """Fold per-(image, tile) (sum, sum_sq) into training-mode BN scale/shift."""
    tot = jnp.sum(stats, axis=0)                       # (2, C)
    mean = tot[0] / count
    var = jnp.maximum(tot[1] / count - mean * mean, 0.0)   # biased variance
    scale = gamma * lax.rsqrt(var + EPS)
    shift = beta - mean * scale
    return scale, shift


@jax.jit
def dnet_forward(x_nchw, params):
    # Accept NCHW (PyTorch); internally NHWC / row-flattened.
    x = jnp.transpose(x_nchw, (0, 2, 3, 1)).astype(jnp.float32)
    n, h, w, _ = x.shape
    assert h % 8 == 0 and w % 8 == 0, "spatial dims must be multiples of 8"

    geo1 = ConvGeom(h, w)
    geo2 = ConvGeom(h // 2, w // 2)
    geo3 = ConvGeom(h // 4, w // 4)

    # ---- layer 1: Conv2d(1,32,3,2,1); its BN+LeakyReLU is fused downstream --
    idx1, msk1 = geo1.gather_plan(lambda r, c: r * w + c)
    xf1 = jnp.take(x.reshape(n, h * w, 1), idx1, axis=1) * msk1
    w1 = jnp.transpose(params["w1"], (2, 3, 1, 0)).astype(jnp.float32)   # (3,3,1,32)
    y1, s1 = conv_layer(xf1, w1, geo1, 32)
    sc1, sh1 = bn_scale_shift(s1, params["g1"], params["be1"], n * geo1.oh * geo1.ow)

    # ---- layer 2: [BN1+LReLU fused] -> Conv2d(32,64,3,2,1) ------------------
    idx2, msk2 = geo2.gather_plan(lambda r, c: r * geo1.owp + c)
    xf2 = jnp.take(y1, idx2, axis=1)
    w2 = jnp.transpose(params["w2"], (2, 3, 1, 0)).reshape(9 * 32, 64).astype(jnp.bfloat16)
    y2, s2 = conv_layer(xf2, w2, geo2, 64, sc1, sh1, msk2)
    sc2, sh2 = bn_scale_shift(s2, params["g2"], params["be2"], n * geo2.oh * geo2.ow)

    # ---- layer 3: [BN2+LReLU fused] -> Conv2d(64,128,3,2,1) -----------------
    idx3, msk3 = geo3.gather_plan(lambda r, c: r * geo2.owp + c)
    xf3 = jnp.take(y2, idx3, axis=1)
    w3 = jnp.transpose(params["w3"], (2, 3, 1, 0)).reshape(9 * 64, 128).astype(jnp.bfloat16)
    y3, s3 = conv_layer(xf3, w3, geo3, 128, sc2, sh2, msk3)
    sc3, sh3 = bn_scale_shift(s3, params["g3"], params["be3"], n * geo3.oh * geo3.ow)

    # ---- head: [BN3+LReLU fused] + AdaptiveAvgPool2d(1) + Linear(128,1) -----
    out = pl.pallas_call(
        make_head_kernel(geo3),
        grid=(n,),
        in_specs=[
            pl.BlockSpec((None, geo3.l_pad, 128), lambda i: (i, 0, 0)),
            pl.BlockSpec((1, 128), lambda i: (0, 0)),
            pl.BlockSpec((1, 128), lambda i: (0, 0)),
            pl.BlockSpec((1, 128), lambda i: (0, 0)),
            pl.BlockSpec((1, 1), lambda i: (0, 0)),
        ],
        out_specs=pl.BlockSpec((None, 1, 128), lambda i: (i, 0, 0)),
        out_shape=jax.ShapeDtypeStruct((n, 1, 128), jnp.float32),
        compiler_params=pltpu.CompilerParams(
            dimension_semantics=("parallel",),
            vmem_limit_bytes=VMEM_LIMIT,
        ),
    )(y3, sc3.reshape(1, 128), sh3.reshape(1, 128),
      params["wl"].reshape(1, 128), params["bl"].reshape(1, 1))
    return out[:, 0, :1]                               # (N, 1)


# ----------------------------------------------------------------------------
# Deterministic parameter init (matches nn.Module shapes; synthetic values)
# ----------------------------------------------------------------------------
def init_params(key):
    ks = jax.random.split(key, 8)
    return {
        # Conv2d(1,32,3,2,1).  b1/b2/b3 mirror nn.Conv2d but are unused:
        # training-mode BN mean subtraction cancels the conv bias exactly.
        "w1": 0.1 * jax.random.normal(ks[0], (32, 1, 3, 3), jnp.float32),
        "b1": 0.01 * jax.random.normal(ks[1], (32,), jnp.float32),
        "g1": jnp.ones((32,), jnp.float32),
        "be1": jnp.zeros((32,), jnp.float32),
        # Conv2d(32,64,3,2,1)
        "w2": 0.1 * jax.random.normal(ks[2], (64, 32, 3, 3), jnp.float32),
        "b2": 0.01 * jax.random.normal(ks[3], (64,), jnp.float32),
        "g2": jnp.ones((64,), jnp.float32),
        "be2": jnp.zeros((64,), jnp.float32),
        # Conv2d(64,128,3,2,1)
        "w3": 0.1 * jax.random.normal(ks[4], (128, 64, 3, 3), jnp.float32),
        "b3": 0.01 * jax.random.normal(ks[5], (128,), jnp.float32),
        "g3": jnp.ones((128,), jnp.float32),
        "be3": jnp.zeros((128,), jnp.float32),
        # Linear(128,1): PyTorch layout (out, in) and (out,)
        "wl": 0.1 * jax.random.normal(ks[6], (1, 128), jnp.float32),
        "bl": 0.01 * jax.random.normal(ks[7], (1,), jnp.float32),
    }


if __name__ == "__main__":
    key = jax.random.PRNGKey(0)
    k_x, k_p = jax.random.split(key)
    # Input consistent with Conv2d(1, ...): (N=2, C=1, H=16, W=16)
    x = jax.random.normal(k_x, (2, 1, 16, 16), jnp.float32)
    params = init_params(k_p)

    out = dnet_forward(x, params)
    jax.block_until_ready(out)
    assert out.shape == (2, 1), out.shape
    assert bool(jnp.all(jnp.isfinite(out))), "non-finite output"
    print("KERNEL_OK")
</pallas_src>

<mosaic_0001>
module attributes {stable_mosaic.version = 11 : i64} {
  func.func @kernel(%arg0: i32, %arg1: i32, %arg2: memref<1x360x1xf32, #tpu.memory_space<vmem>>, %arg3: memref<3x3x1x32xf32, #tpu.memory_space<vmem>>, %arg4: memref<1x80x32xbf16, #tpu.memory_space<vmem>>, %arg5: memref<1x2x32xf32, #tpu.memory_space<vmem>>) attributes {dimension_semantics = [#tpu.dimension_semantics<parallel>, #tpu.dimension_semantics<arbitrary>], iteration_bounds = array<i64: 2, 1>, scalar_prefetch = 0 : i64, scratch_operands = 0 : i64, tpu.core_type = #tpu.core_type<tc>, window_params = [{transform_indices = @transform_0, window_bounds = array<i64: 1, 360, 1>}, {pipeline_mode = #tpu.pipeline_mode<synchronous>, transform_indices = @transform_1, window_bounds = array<i64: 3, 3, 1, 32>}, {transform_indices = @transform_2, window_bounds = array<i64: 1, 80, 32>}, {transform_indices = @transform_3, window_bounds = array<i64: 1, 2, 32>}]} {
    %cst = arith.constant 0.000000e+00 : f32
    %0 = vector.broadcast %cst : f32 to vector<80x32xf32>
    %c0 = arith.constant 0 : index
    %c0_0 = arith.constant 0 : index
    %c0_1 = arith.constant 0 : index
    %1 = vector.load %arg2[%c0, %c0_0, %c0_1] : memref<1x360x1xf32, #tpu.memory_space<vmem>>, vector<1x80x1xf32>
    %2 = vector.shape_cast %1 : vector<1x80x1xf32> to vector<80x1xf32>
    %c0_2 = arith.constant 0 : index
    %c0_3 = arith.constant 0 : index
    %c0_4 = arith.constant 0 : index
    %c0_5 = arith.constant 0 : index
    %3 = vector.load %arg3[%c0_2, %c0_3, %c0_4, %c0_5] : memref<3x3x1x32xf32, #tpu.memory_space<vmem>>, vector<1x1x1x32xf32>
    %4 = vector.shape_cast %3 : vector<1x1x1x32xf32> to vector<1x32xf32>
    %5 = vector.broadcast %2 : vector<80x1xf32> to vector<80x32xf32>
    %6 = vector.broadcast %4 : vector<1x32xf32> to vector<80x32xf32>
    %7 = arith.mulf %5, %6 : vector<80x32xf32>
    %8 = arith.addf %0, %7 : vector<80x32xf32>
    %c0_6 = arith.constant 0 : index
    %c88 = arith.constant 88 : index
    %c0_7 = arith.constant 0 : index
    %9 = vector.load %arg2[%c0_6, %c88, %c0_7] : memref<1x360x1xf32, #tpu.memory_space<vmem>>, vector<1x80x1xf32>
    %10 = vector.shape_cast %9 : vector<1x80x1xf32> to vector<80x1xf32>
    %c0_8 = arith.constant 0 : index
    %c1 = arith.constant 1 : index
    %c0_9 = arith.constant 0 : index
    %c0_10 = arith.constant 0 : index
    %11 = vector.load %arg3[%c0_8, %c1, %c0_9, %c0_10] : memref<3x3x1x32xf32, #tpu.memory_space<vmem>>, vector<1x1x1x32xf32>
    %12 = vector.shape_cast %11 : vector<1x1x1x32xf32> to vector<1x32xf32>
    %13 = vector.broadcast %10 : vector<80x1xf32> to vector<80x32xf32>
    %14 = vector.broadcast %12 : vector<1x32xf32> to vector<80x32xf32>
    %15 = arith.mulf %13, %14 : vector<80x32xf32>
    %16 = arith.addf %8, %15 : vector<80x32xf32>
    %c0_11 = arith.constant 0 : index
    %c1_12 = arith.constant 1 : index
    %c0_13 = arith.constant 0 : index
    %17 = vector.load %arg2[%c0_11, %c1_12, %c0_13] : memref<1x360x1xf32, #tpu.memory_space<vmem>>, vector<1x80x1xf32>
    %18 = vector.shape_cast %17 : vector<1x80x1xf32> to vector<80x1xf32>
    %c0_14 = arith.constant 0 : index
    %c2 = arith.constant 2 : index
    %c0_15 = arith.constant 0 : index
    %c0_16 = arith.constant 0 : index
    %19 = vector.load %arg3[%c0_14, %c2, %c0_15, %c0_16] : memref<3x3x1x32xf32, #tpu.memory_space<vmem>>, vector<1x1x1x32xf32>
    %20 = vector.shape_cast %19 : vector<1x1x1x32xf32> to vector<1x32xf32>
    %21 = vector.broadcast %18 : vector<80x1xf32> to vector<80x32xf32>
    %22 = vector.broadcast %20 : vector<1x32xf32> to vector<80x32xf32>
    %23 = arith.mulf %21, %22 : vector<80x32xf32>
    %24 = arith.addf %16, %23 : vector<80x32xf32>
    %c0_17 = arith.constant 0 : index
    %c176 = arith.constant 176 : index
    %c0_18 = arith.constant 0 : index
    %25 = vector.load %arg2[%c0_17, %c176, %c0_18] : memref<1x360x1xf32, #tpu.memory_space<vmem>>, vector<1x80x1xf32>
    %26 = vector.shape_cast %25 : vector<1x80x1xf32> to vector<80x1xf32>
    %c1_19 = arith.constant 1 : index
    %c0_20 = arith.constant 0 : index
    %c0_21 = arith.constant 0 : index
    %c0_22 = arith.constant 0 : index
    %27 = vector.load %arg3[%c1_19, %c0_20, %c0_21, %c0_22] : memref<3x3x1x32xf32, #tpu.memory_space<vmem>>, vector<1x1x1x32xf32>
    %28 = vector.shape_cast %27 : vector<1x1x1x32xf32> to vector<1x32xf32>
    %29 = vector.broadcast %26 : vector<80x1xf32> to vector<80x32xf32>
    %30 = vector.broadcast %28 : vector<1x32xf32> to vector<80x32xf32>
    %31 = arith.mulf %29, %30 : vector<80x32xf32>
    %32 = arith.addf %24, %31 : vector<80x32xf32>
    %c0_23 = arith.constant 0 : index
    %c264 = arith.constant 264 : index
    %c0_24 = arith.constant 0 : index
    %33 = vector.load %arg2[%c0_23, %c264, %c0_24] : memref<1x360x1xf32, #tpu.memory_space<vmem>>, vector<1x80x1xf32>
    %34 = vector.shape_cast %33 : vector<1x80x1xf32> to vector<80x1xf32>
    %c1_25 = arith.constant 1 : index
    %c1_26 = arith.constant 1 : index
    %c0_27 = arith.constant 0 : index
    %c0_28 = arith.constant 0 : index
    %35 = vector.load %arg3[%c1_25, %c1_26, %c0_27, %c0_28] : memref<3x3x1x32xf32, #tpu.memory_space<vmem>>, vector<1x1x1x32xf32>
    %36 = vector.shape_cast %35 : vector<1x1x1x32xf32> to vector<1x32xf32>
    %37 = vector.broadcast %34 : vector<80x1xf32> to vector<80x32xf32>
    %38 = vector.broadcast %36 : vector<1x32xf32> to vector<80x32xf32>
    %39 = arith.mulf %37, %38 : vector<80x32xf32>
    %40 = arith.addf %32, %39 : vector<80x32xf32>
    %c0_29 = arith.constant 0 : index
    %c177 = arith.constant 177 : index
    %c0_30 = arith.constant 0 : index
    %41 = vector.load %arg2[%c0_29, %c177, %c0_30] : memref<1x360x1xf32, #tpu.memory_space<vmem>>, vector<1x80x1xf32>
    %42 = vector.shape_cast %41 : vector<1x80x1xf32> to vector<80x1xf32>
    %c1_31 = arith.constant 1 : index
    %c2_32 = arith.constant 2 : index
    %c0_33 = arith.constant 0 : index
    %c0_34 = arith.constant 0 : index
    %43 = vector.load %arg3[%c1_31, %c2_32, %c0_33, %c0_34] : memref<3x3x1x32xf32, #tpu.memory_space<vmem>>, vector<1x1x1x32xf32>
    %44 = vector.shape_cast %43 : vector<1x1x1x32xf32> to vector<1x32xf32>
    %45 = vector.broadcast %42 : vector<80x1xf32> to vector<80x32xf32>
    %46 = vector.broadcast %44 : vector<1x32xf32> to vector<80x32xf32>
    %47 = arith.mulf %45, %46 : vector<80x32xf32>
    %48 = arith.addf %40, %47 : vector<80x32xf32>
    %c0_35 = arith.constant 0 : index
    %c9 = arith.constant 9 : index
    %c0_36 = arith.constant 0 : index
    %49 = vector.load %arg2[%c0_35, %c9, %c0_36] : memref<1x360x1xf32, #tpu.memory_space<vmem>>, vector<1x80x1xf32>
    %50 = vector.shape_cast %49 : vector<1x80x1xf32> to vector<80x1xf32>
    %c2_37 = arith.constant 2 : index
    %c0_38 = arith.constant 0 : index
    %c0_39 = arith.constant 0 : index
    %c0_40 = arith.constant 0 : index
    %51 = vector.load %arg3[%c2_37, %c0_38, %c0_39, %c0_40] : memref<3x3x1x32xf32, #tpu.memory_space<vmem>>, vector<1x1x1x32xf32>
    %52 = vector.shape_cast %51 : vector<1x1x1x32xf32> to vector<1x32xf32>
    %53 = vector.broadcast %50 : vector<80x1xf32> to vector<80x32xf32>
    %54 = vector.broadcast %52 : vector<1x32xf32> to vector<80x32xf32>
    %55 = arith.mulf %53, %54 : vector<80x32xf32>
    %56 = arith.addf %48, %55 : vector<80x32xf32>
    %c0_41 = arith.constant 0 : index
    %c97 = arith.constant 97 : index
    %c0_42 = arith.constant 0 : index
    %57 = vector.load %arg2[%c0_41, %c97, %c0_42] : memref<1x360x1xf32, #tpu.memory_space<vmem>>, vector<1x80x1xf32>
    %58 = vector.shape_cast %57 : vector<1x80x1xf32> to vector<80x1xf32>
    %c2_43 = arith.constant 2 : index
    %c1_44 = arith.constant 1 : index
    %c0_45 = arith.constant 0 : index
    %c0_46 = arith.constant 0 : index
    %59 = vector.load %arg3[%c2_43, %c1_44, %c0_45, %c0_46] : memref<3x3x1x32xf32, #tpu.memory_space<vmem>>, vector<1x1x1x32xf32>
    %60 = vector.shape_cast %59 : vector<1x1x1x32xf32> to vector<1x32xf32>
    %61 = vector.broadcast %58 : vector<80x1xf32> to vector<80x32xf32>
    %62 = vector.broadcast %60 : vector<1x32xf32> to vector<80x32xf32>
    %63 = arith.mulf %61, %62 : vector<80x32xf32>
    %64 = arith.addf %56, %63 : vector<80x32xf32>
    %c0_47 = arith.constant 0 : index
    %c10 = arith.constant 10 : index
    %c0_48 = arith.constant 0 : index
    %65 = vector.load %arg2[%c0_47, %c10, %c0_48] : memref<1x360x1xf32, #tpu.memory_space<vmem>>, vector<1x80x1xf32>
    %66 = vector.shape_cast %65 : vector<1x80x1xf32> to vector<80x1xf32>
    %c2_49 = arith.constant 2 : index
    %c2_50 = arith.constant 2 : index
    %c0_51 = arith.constant 0 : index
    %c0_52 = arith.constant 0 : index
    %67 = vector.load %arg3[%c2_49, %c2_50, %c0_51, %c0_52] : memref<3x3x1x32xf32, #tpu.memory_space<vmem>>, vector<1x1x1x32xf32>
    %68 = vector.shape_cast %67 : vector<1x1x1x32xf32> to vector<1x32xf32>
    %69 = vector.broadcast %66 : vector<80x1xf32> to vector<80x32xf32>
    %70 = vector.broadcast %68 : vector<1x32xf32> to vector<80x32xf32>
    %71 = arith.mulf %69, %70 : vector<80x32xf32>
    %72 = arith.addf %64, %71 : vector<80x32xf32>
    %73 = arith.truncf %72 : vector<80x32xf32> to vector<80x32xbf16>
    %c0_53 = arith.constant 0 : index
    %c0_54 = arith.constant 0 : index
    %c0_55 = arith.constant 0 : index
    %74 = vector.load %arg4[%c0_53, %c0_54, %c0_55] : memref<1x80x32xbf16, #tpu.memory_space<vmem>>, vector<1x80x32xbf16>
    %75 = vector.shape_cast %74 : vector<1x80x32xbf16> to vector<80x32xbf16>
    %76 = vector.shape_cast %73 : vector<80x32xbf16> to vector<1x80x32xbf16>
    tpu.vector_store %arg4[%c0_53, %c0_54, %c0_55], %76 {strides = array<i32>} : memref<1x80x32xbf16, #tpu.memory_space<vmem>>, vector<1x80x32xbf16>,
    %77 = tpu.iota {dimensions = array<i32: 0>} : vector<80x1xi32>
    %c0_i32 = arith.constant 0 : i32
    %78 = vector.broadcast %c0_i32 : i32 to vector<80x1xi32>
    %79 = arith.addi %78, %77 : vector<80x1xi32>
    %c9_i32 = arith.constant 9 : i32
    %c0_i32_56 = arith.constant 0 : i32
    %80 = arith.cmpi eq, %c9_i32, %c0_i32_56 : i32
    %c1_i32 = arith.constant 1 : i32
    %81 = arith.select %80, %c1_i32, %c9_i32 : i32
    %82 = vector.broadcast %81 : i32 to vector<80x1xi32>
    %83 = arith.remsi %79, %82 : vector<80x1xi32>
    %c0_i32_57 = arith.constant 0 : i32
    %84 = vector.broadcast %c0_i32_57 : i32 to vector<80x1xi32>
    %85 = arith.cmpi ne, %83, %84 : vector<80x1xi32>
    %c0_i32_58 = arith.constant 0 : i32
    %86 = vector.broadcast %c0_i32_58 : i32 to vector<80x1xi32>
    %87 = arith.cmpi slt, %83, %86 : vector<80x1xi32>
    %c0_i32_59 = arith.constant 0 : i32
    %88 = arith.cmpi slt, %81, %c0_i32_59 : i32
    %89 = vector.broadcast %88 : i1 to vector<80x1xi1>
    %90 = vector.broadcast %89 : vector<80x1xi1> to vector<80x1xi1>
    %91 = arith.xori %87, %90 : vector<80x1xi1>
    %92 = arith.andi %91, %85 : vector<80x1xi1>
    %93 = vector.broadcast %81 : i32 to vector<80x1xi32>
    %94 = arith.addi %83, %93 : vector<80x1xi32>
    %95 = arith.select %92, %94, %83 : vector<80x1xi1>, vector<80x1xi32>
    %c8_i32 = arith.constant 8 : i32
    %96 = vector.broadcast %c8_i32 : i32 to vector<80x1xi32>
    %97 = arith.cmpi ne, %95, %96 : vector<80x1xi32>
    %c72_i32 = arith.constant 72 : i32
    %98 = vector.broadcast %c72_i32 : i32 to vector<80x1xi32>
    %99 = arith.cmpi slt, %79, %98 : vector<80x1xi32>
    %100 = arith.andi %97, %99 : vector<80x1xi1>
    %cst_60 = arith.constant 0.000000e+00 : f32
    %101 = vector.shape_cast %100 : vector<80x1xi1> to vector<80x1xi1>
    %102 = vector.broadcast %101 : vector<80x1xi1> to vector<80x32xi1>
    %103 = vector.broadcast %cst_60 : f32 to vector<80x32xf32>
    %104 = arith.select %102, %72, %103 : vector<80x32xi1>, vector<80x32xf32>
    %cst_61 = arith.constant dense<0.000000e+00> : vector<32xf32>
    %105 = vector.multi_reduction <add>, %104, %cst_61 [0] : vector<80x32xf32> to vector<32xf32>
    %106 = vector.shape_cast %105 : vector<32xf32> to vector<1x32xf32>
    %c0_62 = arith.constant 0 : index
    %c0_63 = arith.constant 0 : index
    %c0_64 = arith.constant 0 : index
    %107 = vector.load %arg5[%c0_62, %c0_63, %c0_64] : memref<1x2x32xf32, #tpu.memory_space<vmem>>, vector<1x1x32xf32>
    %108 = vector.shape_cast %107 : vector<1x1x32xf32> to vector<1x32xf32>
    %109 = vector.shape_cast %106 : vector<1x32xf32> to vector<1x1x32xf32>
    tpu.vector_store %arg5[%c0_62, %c0_63, %c0_64], %109 {strides = array<i32>} : memref<1x2x32xf32, #tpu.memory_space<vmem>>, vector<1x1x32xf32>,
    %110 = arith.mulf %104, %104 : vector<80x32xf32>
    %cst_65 = arith.constant dense<0.000000e+00> : vector<32xf32>
    %111 = vector.multi_reduction <add>, %110, %cst_65 [0] : vector<80x32xf32> to vector<32xf32>
    %112 = vector.shape_cast %111 : vector<32xf32> to vector<1x32xf32>
    %c0_66 = arith.constant 0 : index
    %c1_67 = arith.constant 1 : index
    %c0_68 = arith.constant 0 : index
    %113 = vector.load %arg5[%c0_66, %c1_67, %c0_68] : memref<1x2x32xf32, #tpu.memory_space<vmem>>, vector<1x1x32xf32>
    %114 = vector.shape_cast %113 : vector<1x1x32xf32> to vector<1x32xf32>
    %115 = vector.shape_cast %112 : vector<1x32xf32> to vector<1x1x32xf32>
    tpu.vector_store %arg5[%c0_66, %c1_67, %c0_68], %115 {strides = array<i32>} : memref<1x2x32xf32, #tpu.memory_space<vmem>>, vector<1x1x32xf32>,
    return
  }
  func.func @transform_0(%arg0: i32, %arg1: i32) -> (i32, i32, i32) {
    %c0_i32 = arith.constant 0 : i32
    %c0_i32_0 = arith.constant 0 : i32
    %c0_i32_1 = arith.constant 0 : i32
    return %arg0, %c0_i32, %c0_i32_0 : i32, i32, i32
  }
  func.func @transform_1(%arg0: i32, %arg1: i32) -> (i32, i32, i32, i32) {
    %c0_i32 = arith.constant 0 : i32
    %c0_i32_0 = arith.constant 0 : i32
    %c0_i32_1 = arith.constant 0 : i32
    %c0_i32_2 = arith.constant 0 : i32
    %c0_i32_3 = arith.constant 0 : i32
    return %c0_i32, %c0_i32_0, %c0_i32_1, %c0_i32_2 : i32, i32, i32, i32
  }
  func.func @transform_2(%arg0: i32, %arg1: i32) -> (i32, i32, i32) {
    %c0_i32 = arith.constant 0 : i32
    %c0_i32_0 = arith.constant 0 : i32
    return %arg0, %arg1, %c0_i32 : i32, i32, i32
  }
  func.func @transform_3(%arg0: i32, %arg1: i32) -> (i32, i32, i32) {
    %c1_i32 = arith.constant 1 : i32
    %0 = arith.muli %arg0, %c1_i32 : i32
    %1 = arith.addi %0, %arg1 : i32
    %c0_i32 = arith.constant 0 : i32
    %c0_i32_0 = arith.constant 0 : i32
    %c0_i32_1 = arith.constant 0 : i32
    return %1, %c0_i32, %c0_i32_0 : i32, i32, i32
  }
}

module attributes {stable_mosaic.version = 11 : i64} {
  func.func @kernel(%arg0: i32, %arg1: i32, %arg2: memref<1x136x32xbf16, #tpu.memory_space<vmem>>, %arg3: memref<288x64xbf16, #tpu.memory_space<vmem>>, %arg4: memref<1x32xf32, #tpu.memory_space<vmem>>, %arg5: memref<1x32xf32, #tpu.memory_space<vmem>>, %arg6: memref<136x1xf32, #tpu.memory_space<vmem>>, %arg7: memref<1x32x64xbf16, #tpu.memory_space<vmem>>, %arg8: memref<1x2x64xf32, #tpu.memory_space<vmem>>, %arg9: memref<136x32xf32, #tpu.memory_space<vmem>>) attributes {dimension_semantics = [#tpu.dimension_semantics<parallel>, #tpu.dimension_semantics<arbitrary>], iteration_bounds = array<i64: 2, 1>, scalar_prefetch = 0 : i64, scratch_operands = 1 : i64, tpu.core_type = #tpu.core_type<tc>, window_params = [{transform_indices = @transform_0, window_bounds = array<i64: 1, 136, 32>}, {pipeline_mode = #tpu.pipeline_mode<synchronous>, transform_indices = @transform_1, window_bounds = array<i64: 288, 64>}, {pipeline_mode = #tpu.pipeline_mode<synchronous>, transform_indices = @transform_2, window_bounds = array<i64: 1, 32>}, {pipeline_mode = #tpu.pipeline_mode<synchronous>, transform_indices = @transform_3, window_bounds = array<i64: 1, 32>}, {pipeline_mode = #tpu.pipeline_mode<synchronous>, transform_indices = @transform_4, window_bounds = array<i64: 136, 1>}, {transform_indices = @transform_5, window_bounds = array<i64: 1, 32, 64>}, {transform_indices = @transform_6, window_bounds = array<i64: 1, 2, 64>}]} {
    %c0_i32 = arith.constant 0 : i32
    %0 = arith.cmpi eq, %arg1, %c0_i32 : i32
    %1 = arith.extui %0 : i1 to i32
    %c0_i32_0 = arith.constant 0 : i32
    %2 = arith.cmpi ne, %1, %c0_i32_0 : i32
    scf.if %2 {
      %c0_29 = arith.constant 0 : index
      %c0_30 = arith.constant 0 : index
      %c0_31 = arith.constant 0 : index
      %59 = vector.load %arg2[%c0_29, %c0_30, %c0_31] : memref<1x136x32xbf16, #tpu.memory_space<vmem>>, vector<1x136x32xbf16>
      %60 = vector.shape_cast %59 : vector<1x136x32xbf16> to vector<136x32xbf16>
      %61 = arith.extf %60 : vector<136x32xbf16> to vector<136x32xf32>
      %c0_32 = arith.constant 0 : index
      %c0_33 = arith.constant 0 : index
      %62 = vector.load %arg4[%c0_32, %c0_33] : memref<1x32xf32, #tpu.memory_space<vmem>>, vector<1x32xf32>
      %63 = vector.broadcast %62 : vector<1x32xf32> to vector<136x32xf32>
      %64 = arith.mulf %61, %63 : vector<136x32xf32>
      %c0_34 = arith.constant 0 : index
      %c0_35 = arith.constant 0 : index
      %65 = vector.load %arg5[%c0_34, %c0_35] : memref<1x32xf32, #tpu.memory_space<vmem>>, vector<1x32xf32>
      %66 = vector.broadcast %65 : vector<1x32xf32> to vector<136x32xf32>
      %67 = arith.addf %64, %66 : vector<136x32xf32>
      %cst_36 = arith.constant 0.000000e+00 : f32
      %68 = vector.broadcast %cst_36 : f32 to vector<136x32xf32>
      %69 = arith.cmpf ogt, %67, %68 : vector<136x32xf32>
      %cst_37 = arith.constant 0.00999999977 : f32
      %70 = vector.broadcast %cst_37 : f32 to vector<136x32xf32>
      %71 = arith.mulf %70, %67 : vector<136x32xf32>
      %72 = arith.select %69, %67, %71 : vector<136x32xi1>, vector<136x32xf32>
      %c0_38 = arith.constant 0 : index
      %c0_39 = arith.constant 0 : index
      %73 = vector.load %arg6[%c0_38, %c0_39] : memref<136x1xf32, #tpu.memory_space<vmem>>, vector<136x1xf32>
      %74 = vector.broadcast %73 : vector<136x1xf32> to vector<136x32xf32>
      %75 = arith.mulf %72, %74 : vector<136x32xf32>
      %c0_40 = arith.constant 0 : index
      %c0_41 = arith.constant 0 : index
      %76 = vector.load %arg9[%c0_40, %c0_41] : memref<136x32xf32, #tpu.memory_space<vmem>>, vector<136x32xf32>
      tpu.vector_store %arg9[%c0_40, %c0_41], %75 {strides = array<i32>} : memref<136x32xf32, #tpu.memory_space<vmem>>, vector<136x32xf32>,
    } else {
    }
    %c0 = arith.constant 0 : index
    %c0_1 = arith.constant 0 : index
    %3 = vector.load %arg9[%c0, %c0_1] : memref<136x32xf32, #tpu.memory_space<vmem>>, vector<32x32xf32>
    %c32 = arith.constant 32 : index
    %c0_2 = arith.constant 0 : index
    %4 = vector.load %arg9[%c32, %c0_2] : memref<136x32xf32, #tpu.memory_space<vmem>>, vector<32x32xf32>
    %c1 = arith.constant 1 : index
    %c0_3 = arith.constant 0 : index
    %5 = vector.load %arg9[%c1, %c0_3] : memref<136x32xf32, #tpu.memory_space<vmem>>, vector<32x32xf32>
    %c64 = arith.constant 64 : index
    %c0_4 = arith.constant 0 : index
    %6 = vector.load %arg9[%c64, %c0_4] : memref<136x32xf32, #tpu.memory_space<vmem>>, vector<32x32xf32>
    %c96 = arith.constant 96 : index
    %c0_5 = arith.constant 0 : index
    %7 = vector.load %arg9[%c96, %c0_5] : memref<136x32xf32, #tpu.memory_space<vmem>>, vector<32x32xf32>
    %c65 = arith.constant 65 : index
    %c0_6 = arith.constant 0 : index
    %8 = vector.load %arg9[%c65, %c0_6] : memref<136x32xf32, #tpu.memory_space<vmem>>, vector<32x32xf32>
    %c5 = arith.constant 5 : index
    %c0_7 = arith.constant 0 : index
    %9 = vector.load %arg9[%c5, %c0_7] : memref<136x32xf32, #tpu.memory_space<vmem>>, vector<32x32xf32>
    %c37 = arith.constant 37 : index
    %c0_8 = arith.constant 0 : index
    %10 = vector.load %arg9[%c37, %c0_8] : memref<136x32xf32, #tpu.memory_space<vmem>>, vector<32x32xf32>
    %c6 = arith.constant 6 : index
    %c0_9 = arith.constant 0 : index
    %11 = vector.load %arg9[%c6, %c0_9] : memref<136x32xf32, #tpu.memory_space<vmem>>, vector<32x32xf32>
    %12 = tpu.concatenate %3, %4, %5, %6, %7, %8, %9, %10, %11 in 1 : vector<32x32xf32>, vector<32x32xf32>, vector<32x32xf32>, vector<32x32xf32>, vector<32x32xf32>, vector<32x32xf32>, vector<32x32xf32>, vector<32x32xf32>, vector<32x32xf32> -> vector<32x288xf32>
    %13 = arith.truncf %12 : vector<32x288xf32> to vector<32x288xbf16>
    %c0_10 = arith.constant 0 : index
    %c0_11 = arith.constant 0 : index
    %14 = vector.load %arg3[%c0_10, %c0_11] : memref<288x64xbf16, #tpu.memory_space<vmem>>, vector<288x64xbf16>
    %cst = arith.constant dense<0.000000e+00> : vector<32x64xf32>
    %15 = tpu.matmul %13, %14, %cst {dimension_numbers = #tpu.dot_dimension_numbers<[1], [0], [0], [1], [0, 0, 1, 1], [], []>} : vector<32x288xbf16>, vector<288x64xbf16>, vector<32x64xf32> -> vector<32x64xf32>
    %16 = arith.truncf %15 : vector<32x64xf32> to vector<32x64xbf16>
    %c0_12 = arith.constant 0 : index
    %c0_13 = arith.constant 0 : index
    %c0_14 = arith.constant 0 : index
    %17 = vector.load %arg7[%c0_12, %c0_13, %c0_14] : memref<1x32x64xbf16, #tpu.memory_space<vmem>>, vector<1x32x64xbf16>
    %18 = vector.shape_cast %17 : vector<1x32x64xbf16> to vector<32x64xbf16>
    %19 = vector.shape_cast %16 : vector<32x64xbf16> to vector<1x32x64xbf16>
    tpu.vector_store %arg7[%c0_12, %c0_13, %c0_14], %19 {strides = array<i32>} : memref<1x32x64xbf16, #tpu.memory_space<vmem>>, vector<1x32x64xbf16>,
    %20 = tpu.iota {dimensions = array<i32: 0>} : vector<32x1xi32>
    %c0_i32_15 = arith.constant 0 : i32
    %21 = vector.broadcast %c0_i32_15 : i32 to vector<32x1xi32>
    %22 = arith.addi %21, %20 : vector<32x1xi32>
    %c5_i32 = arith.constant 5 : i32
    %c0_i32_16 = arith.constant 0 : i32
    %23 = arith.cmpi eq, %c5_i32, %c0_i32_16 : i32
    %c1_i32 = arith.constant 1 : i32
    %24 = arith.select %23, %c1_i32, %c5_i32 : i32
    %25 = vector.broadcast %24 : i32 to vector<32x1xi32>
    %26 = arith.remsi %22, %25 : vector<32x1xi32>
    %c0_i32_17 = arith.constant 0 : i32
    %27 = vector.broadcast %c0_i32_17 : i32 to vector<32x1xi32>
    %28 = arith.cmpi ne, %26, %27 : vector<32x1xi32>
    %c0_i32_18 = arith.constant 0 : i32
    %29 = vector.broadcast %c0_i32_18 : i32 to vector<32x1xi32>
    %30 = arith.cmpi slt, %26, %29 : vector<32x1xi32>
    %c0_i32_19 = arith.constant 0 : i32
    %31 = arith.cmpi slt, %24, %c0_i32_19 : i32
    %32 = vector.broadcast %31 : i1 to vector<32x1xi1>
    %33 = vector.broadcast %32 : vector<32x1xi1> to vector<32x1xi1>
    %34 = arith.xori %30, %33 : vector<32x1xi1>
    %35 = arith.andi %34, %28 : vector<32x1xi1>
    %36 = vector.broadcast %24 : i32 to vector<32x1xi32>
    %37 = arith.addi %26, %36 : vector<32x1xi32>
    %38 = arith.select %35, %37, %26 : vector<32x1xi1>, vector<32x1xi32>
    %c4_i32 = arith.constant 4 : i32
    %39 = vector.broadcast %c4_i32 : i32 to vector<32x1xi32>
    %40 = arith.cmpi ne, %38, %39 : vector<32x1xi32>
    %c20_i32 = arith.constant 20 : i32
    %41 = vector.broadcast %c20_i32 : i32 to vector<32x1xi32>
    %42 = arith.cmpi slt, %22, %41 : vector<32x1xi32>
    %43 = arith.andi %40, %42 : vector<32x1xi1>
    %cst_20 = arith.constant 0.000000e+00 : f32
    %44 = vector.shape_cast %43 : vector<32x1xi1> to vector<32x1xi1>
    %45 = vector.broadcast %44 : vector<32x1xi1> to vector<32x64xi1>
    %46 = vector.broadcast %cst_20 : f32 to vector<32x64xf32>
    %47 = arith.select %45, %15, %46 : vector<32x64xi1>, vector<32x64xf32>
    %cst_21 = arith.constant dense<0.000000e+00> : vector<64xf32>
    %48 = vector.multi_reduction <add>, %47, %cst_21 [0] : vector<32x64xf32> to vector<64xf32>
    %49 = vector.shape_cast %48 : vector<64xf32> to vector<1x64xf32>
    %c0_22 = arith.constant 0 : index
    %c0_23 = arith.constant 0 : index
    %c0_24 = arith.constant 0 : index
    %50 = vector.load %arg8[%c0_22, %c0_23, %c0_24] : memref<1x2x64xf32, #tpu.memory_space<vmem>>, vector<1x1x64xf32>
    %51 = vector.shape_cast %50 : vector<1x1x64xf32> to vector<1x64xf32>
    %52 = vector.shape_cast %49 : vector<1x64xf32> to vector<1x1x64xf32>
    tpu.vector_store %arg8[%c0_22, %c0_23, %c0_24], %52 {strides = array<i32>} : memref<1x2x64xf32, #tpu.memory_space<vmem>>, vector<1x1x64xf32>,
    %53 = arith.mulf %47, %47 : vector<32x64xf32>
    %cst_25 = arith.constant dense<0.000000e+00> : vector<64xf32>
    %54 = vector.multi_reduction <add>, %53, %cst_25 [0] : vector<32x64xf32> to vector<64xf32>
    %55 = vector.shape_cast %54 : vector<64xf32> to vector<1x64xf32>
    %c0_26 = arith.constant 0 : index
    %c1_27 = arith.constant 1 : index
    %c0_28 = arith.constant 0 : index
    %56 = vector.load %arg8[%c0_26, %c1_27, %c0_28] : memref<1x2x64xf32, #tpu.memory_space<vmem>>, vector<1x1x64xf32>
    %57 = vector.shape_cast %56 : vector<1x1x64xf32> to vector<1x64xf32>
    %58 = vector.shape_cast %55 : vector<1x64xf32> to vector<1x1x64xf32>
    tpu.vector_store %arg8[%c0_26, %c1_27, %c0_28], %58 {strides = array<i32>} : memref<1x2x64xf32, #tpu.memory_space<vmem>>, vector<1x1x64xf32>,
    return
  }
  func.func @transform_0(%arg0: i32, %arg1: i32) -> (i32, i32, i32) {
    %c0_i32 = arith.constant 0 : i32
    %c0_i32_0 = arith.constant 0 : i32
    %c0_i32_1 = arith.constant 0 : i32
    return %arg0, %c0_i32, %c0_i32_0 : i32, i32, i32
  }
  func.func @transform_1(%arg0: i32, %arg1: i32) -> (i32, i32) {
    %c0_i32 = arith.constant 0 : i32
    %c0_i32_0 = arith.constant 0 : i32
    %c0_i32_1 = arith.constant 0 : i32
    return %c0_i32, %c0_i32_0 : i32, i32
  }
  func.func @transform_2(%arg0: i32, %arg1: i32) -> (i32, i32) {
    %c0_i32 = arith.constant 0 : i32
    %c0_i32_0 = arith.constant 0 : i32
    %c0_i32_1 = arith.constant 0 : i32
    return %c0_i32, %c0_i32_0 : i32, i32
  }
  func.func @transform_3(%arg0: i32, %arg1: i32) -> (i32, i32) {
    %c0_i32 = arith.constant 0 : i32
    %c0_i32_0 = arith.constant 0 : i32
    %c0_i32_1 = arith.constant 0 : i32
    return %c0_i32, %c0_i32_0 : i32, i32
  }
  func.func @transform_4(%arg0: i32, %arg1: i32) -> (i32, i32) {
    %c0_i32 = arith.constant 0 : i32
    %c0_i32_0 = arith.constant 0 : i32
    %c0_i32_1 = arith.constant 0 : i32
    return %c0_i32, %c0_i32_0 : i32, i32
  }
  func.func @transform_5(%arg0: i32, %arg1: i32) -> (i32, i32, i32) {
    %c0_i32 = arith.constant 0 : i32
    %c0_i32_0 = arith.constant 0 : i32
    return %arg0, %arg1, %c0_i32 : i32, i32, i32
  }
  func.func @transform_6(%arg0: i32, %arg1: i32) -> (i32, i32, i32) {
    %c1_i32 = arith.constant 1 : i32
    %0 = arith.muli %arg0, %c1_i32 : i32
    %1 = arith.addi %0, %arg1 : i32
    %c0_i32 = arith.constant 0 : i32
    %c0_i32_0 = arith.constant 0 : i32
    %c0_i32_1 = arith.constant 0 : i32
    return %1, %c0_i32, %c0_i32_0 : i32, i32, i32
  }
}

module attributes {stable_mosaic.version = 11 : i64} {
  func.func @kernel(%arg0: i32, %arg1: i32, %arg2: memref<1x72x64xbf16, #tpu.memory_space<vmem>>, %arg3: memref<576x128xbf16, #tpu.memory_space<vmem>>, %arg4: memref<1x64xf32, #tpu.memory_space<vmem>>, %arg5: memref<1x64xf32, #tpu.memory_space<vmem>>, %arg6: memref<72x1xf32, #tpu.memory_space<vmem>>, %arg7: memref<1x16x128xbf16, #tpu.memory_space<vmem>>, %arg8: memref<1x2x128xf32, #tpu.memory_space<vmem>>, %arg9: memref<72x64xf32, #tpu.memory_space<vmem>>) attributes {dimension_semantics = [#tpu.dimension_semantics<parallel>, #tpu.dimension_semantics<arbitrary>], iteration_bounds = array<i64: 2, 1>, scalar_prefetch = 0 : i64, scratch_operands = 1 : i64, tpu.core_type = #tpu.core_type<tc>, window_params = [{transform_indices = @transform_0, window_bounds = array<i64: 1, 72, 64>}, {pipeline_mode = #tpu.pipeline_mode<synchronous>, transform_indices = @transform_1, window_bounds = array<i64: 576, 128>}, {pipeline_mode = #tpu.pipeline_mode<synchronous>, transform_indices = @transform_2, window_bounds = array<i64: 1, 64>}, {pipeline_mode = #tpu.pipeline_mode<synchronous>, transform_indices = @transform_3, window_bounds = array<i64: 1, 64>}, {pipeline_mode = #tpu.pipeline_mode<synchronous>, transform_indices = @transform_4, window_bounds = array<i64: 72, 1>}, {transform_indices = @transform_5, window_bounds = array<i64: 1, 16, 128>}, {transform_indices = @transform_6, window_bounds = array<i64: 1, 2, 128>}]} {
    %c0_i32 = arith.constant 0 : i32
    %0 = arith.cmpi eq, %arg1, %c0_i32 : i32
    %1 = arith.extui %0 : i1 to i32
    %c0_i32_0 = arith.constant 0 : i32
    %2 = arith.cmpi ne, %1, %c0_i32_0 : i32
    scf.if %2 {
      %c0_29 = arith.constant 0 : index
      %c0_30 = arith.constant 0 : index
      %c0_31 = arith.constant 0 : index
      %59 = vector.load %arg2[%c0_29, %c0_30, %c0_31] : memref<1x72x64xbf16, #tpu.memory_space<vmem>>, vector<1x72x64xbf16>
      %60 = vector.shape_cast %59 : vector<1x72x64xbf16> to vector<72x64xbf16>
      %61 = arith.extf %60 : vector<72x64xbf16> to vector<72x64xf32>
      %c0_32 = arith.constant 0 : index
      %c0_33 = arith.constant 0 : index
      %62 = vector.load %arg4[%c0_32, %c0_33] : memref<1x64xf32, #tpu.memory_space<vmem>>, vector<1x64xf32>
      %63 = vector.broadcast %62 : vector<1x64xf32> to vector<72x64xf32>
      %64 = arith.mulf %61, %63 : vector<72x64xf32>
      %c0_34 = arith.constant 0 : index
      %c0_35 = arith.constant 0 : index
      %65 = vector.load %arg5[%c0_34, %c0_35] : memref<1x64xf32, #tpu.memory_space<vmem>>, vector<1x64xf32>
      %66 = vector.broadcast %65 : vector<1x64xf32> to vector<72x64xf32>
      %67 = arith.addf %64, %66 : vector<72x64xf32>
      %cst_36 = arith.constant 0.000000e+00 : f32
      %68 = vector.broadcast %cst_36 : f32 to vector<72x64xf32>
      %69 = arith.cmpf ogt, %67, %68 : vector<72x64xf32>
      %cst_37 = arith.constant 0.00999999977 : f32
      %70 = vector.broadcast %cst_37 : f32 to vector<72x64xf32>
      %71 = arith.mulf %70, %67 : vector<72x64xf32>
      %72 = arith.select %69, %67, %71 : vector<72x64xi1>, vector<72x64xf32>
      %c0_38 = arith.constant 0 : index
      %c0_39 = arith.constant 0 : index
      %73 = vector.load %arg6[%c0_38, %c0_39] : memref<72x1xf32, #tpu.memory_space<vmem>>, vector<72x1xf32>
      %74 = vector.broadcast %73 : vector<72x1xf32> to vector<72x64xf32>
      %75 = arith.mulf %72, %74 : vector<72x64xf32>
      %c0_40 = arith.constant 0 : index
      %c0_41 = arith.constant 0 : index
      %76 = vector.load %arg9[%c0_40, %c0_41] : memref<72x64xf32, #tpu.memory_space<vmem>>, vector<72x64xf32>
      tpu.vector_store %arg9[%c0_40, %c0_41], %75 {strides = array<i32>} : memref<72x64xf32, #tpu.memory_space<vmem>>, vector<72x64xf32>,
    } else {
    }
    %c0 = arith.constant 0 : index
    %c0_1 = arith.constant 0 : index
    %3 = vector.load %arg9[%c0, %c0_1] : memref<72x64xf32, #tpu.memory_space<vmem>>, vector<16x64xf32>
    %c16 = arith.constant 16 : index
    %c0_2 = arith.constant 0 : index
    %4 = vector.load %arg9[%c16, %c0_2] : memref<72x64xf32, #tpu.memory_space<vmem>>, vector<16x64xf32>
    %c1 = arith.constant 1 : index
    %c0_3 = arith.constant 0 : index
    %5 = vector.load %arg9[%c1, %c0_3] : memref<72x64xf32, #tpu.memory_space<vmem>>, vector<16x64xf32>
    %c32 = arith.constant 32 : index
    %c0_4 = arith.constant 0 : index
    %6 = vector.load %arg9[%c32, %c0_4] : memref<72x64xf32, #tpu.memory_space<vmem>>, vector<16x64xf32>
    %c48 = arith.constant 48 : index
    %c0_5 = arith.constant 0 : index
    %7 = vector.load %arg9[%c48, %c0_5] : memref<72x64xf32, #tpu.memory_space<vmem>>, vector<16x64xf32>
    %c33 = arith.constant 33 : index
    %c0_6 = arith.constant 0 : index
    %8 = vector.load %arg9[%c33, %c0_6] : memref<72x64xf32, #tpu.memory_space<vmem>>, vector<16x64xf32>
    %c3 = arith.constant 3 : index
    %c0_7 = arith.constant 0 : index
    %9 = vector.load %arg9[%c3, %c0_7] : memref<72x64xf32, #tpu.memory_space<vmem>>, vector<16x64xf32>
    %c19 = arith.constant 19 : index
    %c0_8 = arith.constant 0 : index
    %10 = vector.load %arg9[%c19, %c0_8] : memref<72x64xf32, #tpu.memory_space<vmem>>, vector<16x64xf32>
    %c4 = arith.constant 4 : index
    %c0_9 = arith.constant 0 : index
    %11 = vector.load %arg9[%c4, %c0_9] : memref<72x64xf32, #tpu.memory_space<vmem>>, vector<16x64xf32>
    %12 = tpu.concatenate %3, %4, %5, %6, %7, %8, %9, %10, %11 in 1 : vector<16x64xf32>, vector<16x64xf32>, vector<16x64xf32>, vector<16x64xf32>, vector<16x64xf32>, vector<16x64xf32>, vector<16x64xf32>, vector<16x64xf32>, vector<16x64xf32> -> vector<16x576xf32>
    %13 = arith.truncf %12 : vector<16x576xf32> to vector<16x576xbf16>
    %c0_10 = arith.constant 0 : index
    %c0_11 = arith.constant 0 : index
    %14 = vector.load %arg3[%c0_10, %c0_11] : memref<576x128xbf16, #tpu.memory_space<vmem>>, vector<576x128xbf16>
    %cst = arith.constant dense<0.000000e+00> : vector<16x128xf32>
    %15 = tpu.matmul %13, %14, %cst {dimension_numbers = #tpu.dot_dimension_numbers<[1], [0], [0], [1], [0, 0, 1, 1], [], []>} : vector<16x576xbf16>, vector<576x128xbf16>, vector<16x128xf32> -> vector<16x128xf32>
    %16 = arith.truncf %15 : vector<16x128xf32> to vector<16x128xbf16>
    %c0_12 = arith.constant 0 : index
    %c0_13 = arith.constant 0 : index
    %c0_14 = arith.constant 0 : index
    %17 = vector.load %arg7[%c0_12, %c0_13, %c0_14] : memref<1x16x128xbf16, #tpu.memory_space<vmem>>, vector<1x16x128xbf16>
    %18 = vector.shape_cast %17 : vector<1x16x128xbf16> to vector<16x128xbf16>
    %19 = vector.shape_cast %16 : vector<16x128xbf16> to vector<1x16x128xbf16>
    tpu.vector_store %arg7[%c0_12, %c0_13, %c0_14], %19 {strides = array<i32>} : memref<1x16x128xbf16, #tpu.memory_space<vmem>>, vector<1x16x128xbf16>,
    %20 = tpu.iota {dimensions = array<i32: 0>} : vector<16x1xi32>
    %c0_i32_15 = arith.constant 0 : i32
    %21 = vector.broadcast %c0_i32_15 : i32 to vector<16x1xi32>
    %22 = arith.addi %21, %20 : vector<16x1xi32>
    %c3_i32 = arith.constant 3 : i32
    %c0_i32_16 = arith.constant 0 : i32
    %23 = arith.cmpi eq, %c3_i32, %c0_i32_16 : i32
    %c1_i32 = arith.constant 1 : i32
    %24 = arith.select %23, %c1_i32, %c3_i32 : i32
    %25 = vector.broadcast %24 : i32 to vector<16x1xi32>
    %26 = arith.remsi %22, %25 : vector<16x1xi32>
    %c0_i32_17 = arith.constant 0 : i32
    %27 = vector.broadcast %c0_i32_17 : i32 to vector<16x1xi32>
    %28 = arith.cmpi ne, %26, %27 : vector<16x1xi32>
    %c0_i32_18 = arith.constant 0 : i32
    %29 = vector.broadcast %c0_i32_18 : i32 to vector<16x1xi32>
    %30 = arith.cmpi slt, %26, %29 : vector<16x1xi32>
    %c0_i32_19 = arith.constant 0 : i32
    %31 = arith.cmpi slt, %24, %c0_i32_19 : i32
    %32 = vector.broadcast %31 : i1 to vector<16x1xi1>
    %33 = vector.broadcast %32 : vector<16x1xi1> to vector<16x1xi1>
    %34 = arith.xori %30, %33 : vector<16x1xi1>
    %35 = arith.andi %34, %28 : vector<16x1xi1>
    %36 = vector.broadcast %24 : i32 to vector<16x1xi32>
    %37 = arith.addi %26, %36 : vector<16x1xi32>
    %38 = arith.select %35, %37, %26 : vector<16x1xi1>, vector<16x1xi32>
    %c2_i32 = arith.constant 2 : i32
    %39 = vector.broadcast %c2_i32 : i32 to vector<16x1xi32>
    %40 = arith.cmpi ne, %38, %39 : vector<16x1xi32>
    %c6_i32 = arith.constant 6 : i32
    %41 = vector.broadcast %c6_i32 : i32 to vector<16x1xi32>
    %42 = arith.cmpi slt, %22, %41 : vector<16x1xi32>
    %43 = arith.andi %40, %42 : vector<16x1xi1>
    %cst_20 = arith.constant 0.000000e+00 : f32
    %44 = vector.shape_cast %43 : vector<16x1xi1> to vector<16x1xi1>
    %45 = vector.broadcast %44 : vector<16x1xi1> to vector<16x128xi1>
    %46 = vector.broadcast %cst_20 : f32 to vector<16x128xf32>
    %47 = arith.select %45, %15, %46 : vector<16x128xi1>, vector<16x128xf32>
    %cst_21 = arith.constant dense<0.000000e+00> : vector<128xf32>
    %48 = vector.multi_reduction <add>, %47, %cst_21 [0] : vector<16x128xf32> to vector<128xf32>
    %49 = vector.shape_cast %48 : vector<128xf32> to vector<1x128xf32>
    %c0_22 = arith.constant 0 : index
    %c0_23 = arith.constant 0 : index
    %c0_24 = arith.constant 0 : index
    %50 = vector.load %arg8[%c0_22, %c0_23, %c0_24] : memref<1x2x128xf32, #tpu.memory_space<vmem>>, vector<1x1x128xf32>
    %51 = vector.shape_cast %50 : vector<1x1x128xf32> to vector<1x128xf32>
    %52 = vector.shape_cast %49 : vector<1x128xf32> to vector<1x1x128xf32>
    tpu.vector_store %arg8[%c0_22, %c0_23, %c0_24], %52 {strides = array<i32>} : memref<1x2x128xf32, #tpu.memory_space<vmem>>, vector<1x1x128xf32>,
    %53 = arith.mulf %47, %47 : vector<16x128xf32>
    %cst_25 = arith.constant dense<0.000000e+00> : vector<128xf32>
    %54 = vector.multi_reduction <add>, %53, %cst_25 [0] : vector<16x128xf32> to vector<128xf32>
    %55 = vector.shape_cast %54 : vector<128xf32> to vector<1x128xf32>
    %c0_26 = arith.constant 0 : index
    %c1_27 = arith.constant 1 : index
    %c0_28 = arith.constant 0 : index
    %56 = vector.load %arg8[%c0_26, %c1_27, %c0_28] : memref<1x2x128xf32, #tpu.memory_space<vmem>>, vector<1x1x128xf32>
    %57 = vector.shape_cast %56 : vector<1x1x128xf32> to vector<1x128xf32>
    %58 = vector.shape_cast %55 : vector<1x128xf32> to vector<1x1x128xf32>
    tpu.vector_store %arg8[%c0_26, %c1_27, %c0_28], %58 {strides = array<i32>} : memref<1x2x128xf32, #tpu.memory_space<vmem>>, vector<1x1x128xf32>,
    return
  }
  func.func @transform_0(%arg0: i32, %arg1: i32) -> (i32, i32, i32) {
    %c0_i32 = arith.constant 0 : i32
    %c0_i32_0 = arith.constant 0 : i32
    %c0_i32_1 = arith.constant 0 : i32
    return %arg0, %c0_i32, %c0_i32_0 : i32, i32, i32
  }
  func.func @transform_1(%arg0: i32, %arg1: i32) -> (i32, i32) {
    %c0_i32 = arith.constant 0 : i32
    %c0_i32_0 = arith.constant 0 : i32
    %c0_i32_1 = arith.constant 0 : i32
    return %c0_i32, %c0_i32_0 : i32, i32
  }
  func.func @transform_2(%arg0: i32, %arg1: i32) -> (i32, i32) {
    %c0_i32 = arith.constant 0 : i32
    %c0_i32_0 = arith.constant 0 : i32
    %c0_i32_1 = arith.constant 0 : i32
    return %c0_i32, %c0_i32_0 : i32, i32
  }
  func.func @transform_3(%arg0: i32, %arg1: i32) -> (i32, i32) {
    %c0_i32 = arith.constant 0 : i32
    %c0_i32_0 = arith.constant 0 : i32
    %c0_i32_1 = arith.constant 0 : i32
    return %c0_i32, %c0_i32_0 : i32, i32
  }
  func.func @transform_4(%arg0: i32, %arg1: i32) -> (i32, i32) {
    %c0_i32 = arith.constant 0 : i32
    %c0_i32_0 = arith.constant 0 : i32
    %c0_i32_1 = arith.constant 0 : i32
    return %c0_i32, %c0_i32_0 : i32, i32
  }
  func.func @transform_5(%arg0: i32, %arg1: i32) -> (i32, i32, i32) {
    %c0_i32 = arith.constant 0 : i32
    %c0_i32_0 = arith.constant 0 : i32
    return %arg0, %arg1, %c0_i32 : i32, i32, i32
  }
  func.func @transform_6(%arg0: i32, %arg1: i32) -> (i32, i32, i32) {
    %c1_i32 = arith.constant 1 : i32
    %0 = arith.muli %arg0, %c1_i32 : i32
    %1 = arith.addi %0, %arg1 : i32
    %c0_i32 = arith.constant 0 : i32
    %c0_i32_0 = arith.constant 0 : i32
    %c0_i32_1 = arith.constant 0 : i32
    return %1, %c0_i32, %c0_i32_0 : i32, i32, i32
  }
}

module attributes {stable_mosaic.version = 11 : i64} {
  func.func @kernel(%arg0: i32, %arg1: memref<1x16x128xbf16, #tpu.memory_space<vmem>>, %arg2: memref<1x128xf32, #tpu.memory_space<vmem>>, %arg3: memref<1x128xf32, #tpu.memory_space<vmem>>, %arg4: memref<1x128xf32, #tpu.memory_space<vmem>>, %arg5: memref<1x1xf32, #tpu.memory_space<vmem>>, %arg6: memref<1x1x128xf32, #tpu.memory_space<vmem>>) attributes {dimension_semantics = [#tpu.dimension_semantics<parallel>], iteration_bounds = array<i64: 2>, scalar_prefetch = 0 : i64, scratch_operands = 0 : i64, tpu.core_type = #tpu.core_type<tc>, window_params = [{transform_indices = @transform_0, window_bounds = array<i64: 1, 16, 128>}, {pipeline_mode = #tpu.pipeline_mode<synchronous>, transform_indices = @transform_1, window_bounds = array<i64: 1, 128>}, {pipeline_mode = #tpu.pipeline_mode<synchronous>, transform_indices = @transform_2, window_bounds = array<i64: 1, 128>}, {pipeline_mode = #tpu.pipeline_mode<synchronous>, transform_indices = @transform_3, window_bounds = array<i64: 1, 128>}, {pipeline_mode = #tpu.pipeline_mode<synchronous>, transform_indices = @transform_4, window_bounds = array<i64: 1, 1>}, {transform_indices = @transform_5, window_bounds = array<i64: 1, 1, 128>}]} {
    %c0 = arith.constant 0 : index
    %c0_0 = arith.constant 0 : index
    %c0_1 = arith.constant 0 : index
    %0 = vector.load %arg1[%c0, %c0_0, %c0_1] : memref<1x16x128xbf16, #tpu.memory_space<vmem>>, vector<1x16x128xbf16>
    %1 = vector.shape_cast %0 : vector<1x16x128xbf16> to vector<16x128xbf16>
    %2 = arith.extf %1 : vector<16x128xbf16> to vector<16x128xf32>
    %c0_2 = arith.constant 0 : index
    %c0_3 = arith.constant 0 : index
    %3 = vector.load %arg2[%c0_2, %c0_3] : memref<1x128xf32, #tpu.memory_space<vmem>>, vector<1x128xf32>
    %4 = vector.broadcast %3 : vector<1x128xf32> to vector<16x128xf32>
    %5 = arith.mulf %2, %4 : vector<16x128xf32>
    %c0_4 = arith.constant 0 : index
    %c0_5 = arith.constant 0 : index
    %6 = vector.load %arg3[%c0_4, %c0_5] : memref<1x128xf32, #tpu.memory_space<vmem>>, vector<1x128xf32>
    %7 = vector.broadcast %6 : vector<1x128xf32> to vector<16x128xf32>
    %8 = arith.addf %5, %7 : vector<16x128xf32>
    %cst = arith.constant 0.000000e+00 : f32
    %9 = vector.broadcast %cst : f32 to vector<16x128xf32>
    %10 = arith.cmpf ogt, %8, %9 : vector<16x128xf32>
    %cst_6 = arith.constant 0.00999999977 : f32
    %11 = vector.broadcast %cst_6 : f32 to vector<16x128xf32>
    %12 = arith.mulf %11, %8 : vector<16x128xf32>
    %13 = arith.select %10, %8, %12 : vector<16x128xi1>, vector<16x128xf32>
    %14 = tpu.iota {dimensions = array<i32: 0>} : vector<16x1xi32>
    %c3_i32 = arith.constant 3 : i32
    %c0_i32 = arith.constant 0 : i32
    %15 = arith.cmpi eq, %c3_i32, %c0_i32 : i32
    %c1_i32 = arith.constant 1 : i32
    %16 = arith.select %15, %c1_i32, %c3_i32 : i32
    %17 = vector.broadcast %16 : i32 to vector<16x1xi32>
    %18 = arith.remsi %14, %17 : vector<16x1xi32>
    %c0_i32_7 = arith.constant 0 : i32
    %19 = vector.broadcast %c0_i32_7 : i32 to vector<16x1xi32>
    %20 = arith.cmpi ne, %18, %19 : vector<16x1xi32>
    %c0_i32_8 = arith.constant 0 : i32
    %21 = vector.broadcast %c0_i32_8 : i32 to vector<16x1xi32>
    %22 = arith.cmpi slt, %18, %21 : vector<16x1xi32>
    %c0_i32_9 = arith.constant 0 : i32
    %23 = arith.cmpi slt, %16, %c0_i32_9 : i32
    %24 = vector.broadcast %23 : i1 to vector<16x1xi1>
    %25 = vector.broadcast %24 : vector<16x1xi1> to vector<16x1xi1>
    %26 = arith.xori %22, %25 : vector<16x1xi1>
    %27 = arith.andi %26, %20 : vector<16x1xi1>
    %28 = vector.broadcast %16 : i32 to vector<16x1xi32>
    %29 = arith.addi %18, %28 : vector<16x1xi32>
    %30 = arith.select %27, %29, %18 : vector<16x1xi1>, vector<16x1xi32>
    %c2_i32 = arith.constant 2 : i32
    %31 = vector.broadcast %c2_i32 : i32 to vector<16x1xi32>
    %32 = arith.cmpi ne, %30, %31 : vector<16x1xi32>
    %c6_i32 = arith.constant 6 : i32
    %33 = vector.broadcast %c6_i32 : i32 to vector<16x1xi32>
    %34 = arith.cmpi slt, %14, %33 : vector<16x1xi32>
    %35 = arith.andi %32, %34 : vector<16x1xi1>
    %cst_10 = arith.constant 0.000000e+00 : f32
    %36 = vector.shape_cast %35 : vector<16x1xi1> to vector<16x1xi1>
    %37 = vector.broadcast %36 : vector<16x1xi1> to vector<16x128xi1>
    %38 = vector.broadcast %cst_10 : f32 to vector<16x128xf32>
    %39 = arith.select %37, %13, %38 : vector<16x128xi1>, vector<16x128xf32>
    %cst_11 = arith.constant dense<0.000000e+00> : vector<128xf32>
    %40 = vector.multi_reduction <add>, %39, %cst_11 [0] : vector<16x128xf32> to vector<128xf32>
    %41 = vector.shape_cast %40 : vector<128xf32> to vector<1x128xf32>
    %cst_12 = arith.constant 2.500000e-01 : f32
    %42 = vector.broadcast %cst_12 : f32 to vector<1x128xf32>
    %43 = arith.mulf %41, %42 : vector<1x128xf32>
    %c0_13 = arith.constant 0 : index
    %c0_14 = arith.constant 0 : index
    %44 = vector.load %arg4[%c0_13, %c0_14] : memref<1x128xf32, #tpu.memory_space<vmem>>, vector<1x128xf32>
    %45 = arith.mulf %43, %44 : vector<1x128xf32>
    %cst_15 = arith.constant dense<0.000000e+00> : vector<1xf32>
    %46 = vector.multi_reduction <add>, %45, %cst_15 [1] : vector<1x128xf32> to vector<1xf32>
    %47 = vector.shape_cast %46 : vector<1xf32> to vector<1x1xf32>
    %c0_16 = arith.constant 0 : index
    %c0_17 = arith.constant 0 : index
    %48 = vector.load %arg5[%c0_16, %c0_17] : memref<1x1xf32, #tpu.memory_space<vmem>>, vector<1x1xf32>
    %49 = arith.addf %47, %48 : vector<1x1xf32>
    %cst_18 = arith.constant 0.000000e+00 : f32
    %50 = vector.broadcast %cst_18 : f32 to vector<1x128xf32>
    %51 = vector.broadcast %49 : vector<1x1xf32> to vector<1x128xf32>
    %52 = arith.addf %51, %50 : vector<1x128xf32>
    %c0_19 = arith.constant 0 : index
    %c0_20 = arith.constant 0 : index
    %c0_21 = arith.constant 0 : index
    %53 = vector.load %arg6[%c0_19, %c0_20, %c0_21] : memref<1x1x128xf32, #tpu.memory_space<vmem>>, vector<1x1x128xf32>
    %54 = vector.shape_cast %53 : vector<1x1x128xf32> to vector<1x128xf32>
    %55 = vector.shape_cast %52 : vector<1x128xf32> to vector<1x1x128xf32>
    tpu.vector_store %arg6[%c0_19, %c0_20, %c0_21], %55 {strides = array<i32>} : memref<1x1x128xf32, #tpu.memory_space<vmem>>, vector<1x1x128xf32>,
    return
  }
  func.func @transform_0(%arg0: i32) -> (i32, i32, i32) {
    %c0_i32 = arith.constant 0 : i32
    %c0_i32_0 = arith.constant 0 : i32
    %c0_i32_1 = arith.constant 0 : i32
    return %arg0, %c0_i32, %c0_i32_0 : i32, i32, i32
  }
  func.func @transform_1(%arg0: i32) -> (i32, i32) {
    %c0_i32 = arith.constant 0 : i32
    %c0_i32_0 = arith.constant 0 : i32
    %c0_i32_1 = arith.constant 0 : i32
    return %c0_i32, %c0_i32_0 : i32, i32
  }
  func.func @transform_2(%arg0: i32) -> (i32, i32) {
    %c0_i32 = arith.constant 0 : i32
    %c0_i32_0 = arith.constant 0 : i32
    %c0_i32_1 = arith.constant 0 : i32
    return %c0_i32, %c0_i32_0 : i32, i32
  }
  func.func @transform_3(%arg0: i32) -> (i32, i32) {
    %c0_i32 = arith.constant 0 : i32
    %c0_i32_0 = arith.constant 0 : i32
    %c0_i32_1 = arith.constant 0 : i32
    return %c0_i32, %c0_i32_0 : i32, i32
  }
  func.func @transform_4(%arg0: i32) -> (i32, i32) {
    %c0_i32 = arith.constant 0 : i32
    %c0_i32_0 = arith.constant 0 : i32
    %c0_i32_1 = arith.constant 0 : i32
    return %c0_i32, %c0_i32_0 : i32, i32
  }
  func.func @transform_5(%arg0: i32) -> (i32, i32, i32) {
    %c0_i32 = arith.constant 0 : i32
    %c0_i32_0 = arith.constant 0 : i32
    %c0_i32_1 = arith.constant 0 : i32
    return %arg0, %c0_i32, %c0_i32_0 : i32, i32, i32
  }
}

</mosaic_0001>

<llo_original>
// kernel: dnet_forward.4
$region0: #{dnet_forward.4}
  #allocation0 [shape = 'u32[]', space=smem, size = 0x4, offset = 0x4, fixed_abs, tag = 'smem constant byte address 0x4 - core index']
  #allocation1 [shape = 'u32[144,128]{1,0:T(1,128)}', space=vmem, size = 0x12000, scoped, tag = 'internal scratch']
  %s0 = inlined_call_operand.vmem [shape: f32[2,360,1], index: 0, kind: input, shape index: {}]
  %s1 = inlined_call_operand.vmem [shape: f32[3,3,1,32], index: 1, kind: input, shape index: {}]
  %s2 = inlined_call_operand.vmem [shape: bf16[2,80,32], index: 2, kind: output, shape index: {0}]
  %s3 = inlined_call_operand.vmem [shape: f32[2,2,32], index: 3, kind: output, shape index: {1}]
  %4 = xla_tuple %s2, %s3
  %s5 = sld [smem:[#allocation0]]
  $region49: #{dnet_forward.4} parent=0
    _
  %s7 = ssub.s32 1, %s5
  %s8 = scalar_select 0, %s7, %s5
  loop: start=0, step=1, limit=4
  $region2: #{dnet_forward.4} parent=0 // loop_pre_header
    _
  $region3: #{dnet_forward.4} parent=0 // loop_header
    %s10 = sphi 0, %s14
    %p11 = scmp.ge.s32.totalorder %s10, 4
    %s17 = sphi 0, %s29
    %s18 = sphi 0, %s25
    %s19 = sphi 0, %s17
    %s20 = sphi 0, %s18
    %s21 = sphi 0, %s19
    %s22 = sphi 0, %s20
    %s32 = sphi 0, %s34
    %s35 = sphi 0, %s32
    %s36 = sphi 0, %s35
    %s52 = sphi 0, %s36
    %s56 = sphi 0, %s56
    %s58 = sphi 0, %s56
    %s59 = sphi 0, %s58
    %s73 = sphi 0, %s59
    %s81 = sphi 0, %s83
    %s84 = sphi 0, %s81
    %s85 = sphi 0, %s84
    %s101 = sphi 0, %s85
    %s109 = sphi 0, %s111
    %s112 = sphi 0, %s109
    %s113 = sphi 0, %s112
    %s129 = sphi 0, %s113
  $region4: #{dnet_forward.4} parent=0 // loop_header_branch
    %13 = sbr.rel (%p11) target = $region8
  $region5: #{dnet_forward.4} parent=0 // loop_body
    %s15 = ssub.s32 %s10, 1
    %s16 = ssub.s32 %s10, 2
    %s23 = sadd.s32 1, %s18
    %p24 = scmp.ge.s32.totalorder %s23, 1
    %s25 = scalar_select %p24, 0, %s23
    %s26 = sadd.s32 1, %s17
    %s27 = scalar_select %p24, %s26, %s17
    %p28 = scmp.ge.s32.totalorder %s27, 2
    %s29 = scalar_select %p28, 0, %s27
    %s30 = ssub.s32 %s17, %s29
    %p31 = scmp.eq.s32.totalorder %s30, 0
    %s33 = sadd.s32 %s32, 1
    %s34 = scalar_select %p31, %s32, %s33
    %p37 = pneg %p31
    %p38 = scmp.eq.s32.totalorder %s10, 1
    %p39 = por %p37, %p38
    %p40 = scmp.ne.s32.totalorder %s32, %s35
    %p41 = scmp.eq.s32.totalorder %s10, 0
    %p42 = por %p40, %p41
    %p43 = scmp.ne.s32.totalorder %s32, %s35
    %p44 = scmp.eq.s32.totalorder %s15, 1
    %p45 = por %p43, %p44
    %p46 = scmp.ne.s32.totalorder %s35, %s36
    %p47 = scmp.eq.s32.totalorder %s15, 0
    %p48 = por %p46, %p47
    %p49 = scmp.ne.s32.totalorder %s35, %s36
    %p50 = scmp.eq.s32.totalorder %s16, 1
    %p51 = por %p49, %p50
    %p53 = scmp.ne.s32.totalorder %s36, %s52
    %p54 = scmp.eq.s32.totalorder %s16, 0
    %p55 = por %p53, %p54
    %s57 = sadd.s32 %s56, 1
    %p60 = scmp.eq.s32.totalorder %s10, 1
    %p61 = scmp.ne.s32.totalorder %s56, %s58
    %p62 = scmp.eq.s32.totalorder %s10, 0
    %p63 = por %p61, %p62
    %p64 = scmp.ne.s32.totalorder %s56, %s58
    %p65 = scmp.eq.s32.totalorder %s15, 1
    %p66 = por %p64, %p65
    %p67 = scmp.ne.s32.totalorder %s58, %s59
    %p68 = scmp.eq.s32.totalorder %s15, 0
    %p69 = por %p67, %p68
    %p70 = scmp.ne.s32.totalorder %s58, %s59
    %p71 = scmp.eq.s32.totalorder %s16, 1
    %p72 = por %p70, %p71
    %p74 = scmp.ne.s32.totalorder %s59, %s73
    %p75 = scmp.eq.s32.totalorder %s16, 0
    %p76 = por %p74, %p75
    %s77 = ssub.s32 %s17, %s29
    %s78 = ssub.s32 %s18, %s25
    %s79 = sor.u32 %s77, %s78
    %p80 = scmp.eq.s32.totalorder %s79, 0
    %s82 = sadd.s32 %s81, 1
    %s83 = scalar_select %p80, %s81, %s82
    %p86 = pneg %p80
    %p87 = scmp.eq.s32.totalorder %s10, 1
    %p88 = por %p86, %p87
    %p89 = scmp.ne.s32.totalorder %s81, %s84
    %p90 = scmp.eq.s32.totalorder %s10, 0
    %p91 = por %p89, %p90
    %p92 = scmp.ne.s32.totalorder %s81, %s84
    %p93 = scmp.eq.s32.totalorder %s15, 1
    %p94 = por %p92, %p93
    %p95 = scmp.ne.s32.totalorder %s84, %s85
    %p96 = scmp.eq.s32.totalorder %s15, 0
    %p97 = por %p95, %p96
    %p98 = scmp.ne.s32.totalorder %s84, %s85
    %p99 = scmp.eq.s32.totalorder %s16, 1
    %p100 = por %p98, %p99
    %p102 = scmp.ne.s32.totalorder %s85, %s101
    %p103 = scmp.eq.s32.totalorder %s16, 0
    %p104 = por %p102, %p103
    %s105 = sadd.s32 %s17, %s18
    %s106 = sadd.s32 %s29, %s25
    %s107 = ssub.s32 %s105, %s106
    %p108 = scmp.eq.s32.totalorder %s107, 0
    %s110 = sadd.s32 %s109, 1
    %s111 = scalar_select %p108, %s109, %s110
    %p114 = pneg %p108
    %p115 = scmp.eq.s32.totalorder %s10, 1
    %p116 = por %p114, %p115
    %p117 = scmp.ne.s32.totalorder %s109, %s112
    %p118 = scmp.eq.s32.totalorder %s10, 0
    %p119 = por %p117, %p118
    %p120 = scmp.ne.s32.totalorder %s109, %s112
    %p121 = scmp.eq.s32.totalorder %s15, 1
    %p122 = por %p120, %p121
    %p123 = scmp.ne.s32.totalorder %s112, %s113
    %p124 = scmp.eq.s32.totalorder %s15, 0
    %p125 = por %p123, %p124
    %p126 = scmp.ne.s32.totalorder %s112, %s113
    %p127 = scmp.eq.s32.totalorder %s16, 1
    %p128 = por %p126, %p127
    %p130 = scmp.ne.s32.totalorder %s113, %s129
    %p131 = scmp.eq.s32.totalorder %s16, 0
    %p132 = por %p130, %p131
    %p133 = scmp.le.s32.totalorder 1, %s10
    %p134 = scmp.lt.s32.totalorder %s10, 3
    %p135 = pnand %p133, %p134
    %p136 = pneg %p135
    // Predicated region
    $region9: #{dnet_forward.4} parent=5 // pred_check
      _
    $region10: #{dnet_forward.4} parent=5 // pred_check_branch
      %138 = sbr.rel (%p135) target = $region12
    $region11: #{dnet_forward.4} parent=5 // pred_region
      %s139 = ssub.s32 %s10, 1
      // Predicated region
      $region13: #{dnet_forward.4} parent=11 // pred_check
        %p140 = pneg %p69
      $region14: #{dnet_forward.4} parent=11 // pred_check_branch
        %142 = sbr.rel (%p140) target = $region16
      $region15: #{dnet_forward.4} parent=11 // pred_region
        _
      $region16: #{dnet_forward.4} parent=11 // pred_fallthru
        _
    $region12: #{dnet_forward.4} parent=5 // pred_fallthru
      _
    %p143 = scmp.lt.s32.totalorder %s10, 2
    // Predicated region
    $region17: #{dnet_forward.4} parent=5 // pred_check
      %p144 = pneg %p143
    $region18: #{dnet_forward.4} parent=5 // pred_check_branch
      %146 = sbr.rel (%p144) target = $region20
    $region19: #{dnet_forward.4} parent=5 // pred_region
      // Predicated region
      $region21: #{dnet_forward.4} parent=19 // pred_check
        %p147 = pneg %p42
      $region22: #{dnet_forward.4} parent=19 // pred_check_branch
        %149 = sbr.rel (%p147) target = $region24
      $region23: #{dnet_forward.4} parent=19 // pred_region
        %p150 = scmp.lt.s32.totalorder %s17, 1
        %s151 = scalar_select %p150, %s17, 1
        %s152 = smul.addr %s151, 45
        %s153 = smul.addr %s152, 8
        %s154 = scalar_lea.vmem %s0, %s153
      $region24: #{dnet_forward.4} parent=19 // pred_fallthru
        _
    $region20: #{dnet_forward.4} parent=5 // pred_fallthru
      _
    %p155 = scmp.le.s32.totalorder 1, %s10
    %p156 = scmp.lt.s32.totalorder %s10, 3
    %p157 = pnand %p155, %p156
    %p158 = pneg %p157
    // Predicated region
    $region25: #{dnet_forward.4} parent=5 // pred_check
      _
    $region26: #{dnet_forward.4} parent=5 // pred_check_branch
      %160 = sbr.rel (%p157) target = $region28
    $region27: #{dnet_forward.4} parent=5 // pred_region
      %s161 = ssub.s32 %s10, 1
      %p162 = scmp.lt.s32.totalorder %s19, 1
      %s163 = scalar_select %p162, %s19, 1
      %s164 = smul.addr %s163, 45
      %s165 = smul.addr %s164, 8
      %s166 = scalar_lea.vmem %s0, %s165
      %p167 = pneg %p48
      %p168 = pneg %p45
      %p169 = pneg %p69
      %p170 = pneg %p66
      %p171 = pneg %p97
      %p172 = pneg %p94
      %s173 = smul.u32 10, %s20
      %p174 = scmp.lt.s32.totalorder %s19, 1
      %s175 = scalar_select %p174, %s19, 1
      %p176 = scmp.lt.s32.totalorder %s173, 9
      %s177 = scalar_select %p176, %s173, 9
      %s178 = smul.addr %s175, 10
      %s179 = sadd.s32 %s177, %s178
      %s180 = smul.addr %s179, 4
      %s181 = scalar_lea.vmem %s2, %s180
      %p182 = pneg %p125
      %p183 = pneg %p122
      %s184 = sadd.s32 %s19, %s20
      %p185 = scmp.lt.s32.totalorder %s184, 1
      %s186 = scalar_select %p185, %s184, 1
      %s187 = smul.addr %s186, 2
      %s188 = scalar_lea.vmem %s3, %s187
      %p189 = scmp.lt.s32.totalorder %s19, 1
      %s190 = scalar_select %p189, %s19, 1
      %s191 = smul.addr %s190, 45
      %s192 = smul.addr %s191, 8
      %s193 = scalar_lea.vmem %s0, %s192
      %s194 = smul.u32 10, %s20
      %p195 = scmp.lt.s32.totalorder %s19, 1
      %s196 = scalar_select %p195, %s19, 1
      %p197 = scmp.lt.s32.totalorder %s194, 9
      %s198 = scalar_select %p197, %s194, 9
      %s199 = smul.addr %s196, 10
      %s200 = sadd.s32 %s198, %s199
      %s201 = smul.addr %s200, 4
      %s202 = scalar_lea.vmem %s2, %s201
      %s203 = smul.u32 10, %s20
      %s204 = sadd.s32 %s19, %s20
      %p205 = scmp.lt.s32.totalorder %s204, 1
      %s206 = scalar_select %p205, %s204, 1
      %s207 = smul.addr %s206, 2
      %s208 = scalar_lea.vmem %s3, %s207
      %s209 = sadd.s32 %s19, %s20
      %v210 = vld [vmem:[%s193] sm:$0xff]
      %v211 = vld [vmem:[%s193 + $0x8] sm:$0xff]
      %v212 = vld [vmem:[%s193 + $0x10] sm:$0xff]
      %v213 = vld [vmem:[%s193 + $0x18] sm:$0xff]
      %v214 = vld [vmem:[%s193 + $0x20] sm:$0xff]
      %v215 = vld [vmem:[%s193 + $0x28] sm:$0xff]
      %v216 = vld [vmem:[%s193 + $0x30] sm:$0xff]
      %v217 = vld [vmem:[%s193 + $0x38] sm:$0xff]
      %v218 = vld [vmem:[%s193 + $0x40] sm:$0xff]
      %v219 = vld [vmem:[%s193 + $0x48] sm:$0xff]
      %v220 = vld [vmem:[%s1] sm:$0x1]
      %222 = vset.pattern.permute.xlu0 0
      %223 = vperm.xlu0 %222, %v210
      %v224 = vpop.permute.xlu0 %223
      %227 = vset.pattern.permute.xlu0 0
      %228 = vperm.xlu0 %227, %v211
      %v229 = vpop.permute.xlu0 %228
      %232 = vset.pattern.permute.xlu0 0
      %233 = vperm.xlu0 %232, %v212
      %v234 = vpop.permute.xlu0 %233
      %237 = vset.pattern.permute.xlu0 0
      %238 = vperm.xlu0 %237, %v213
      %v239 = vpop.permute.xlu0 %238
      %242 = vset.pattern.permute.xlu0 0
      %243 = vperm.xlu0 %242, %v214
      %v244 = vpop.permute.xlu0 %243
      %247 = vset.pattern.permute.xlu0 0
      %248 = vperm.xlu0 %247, %v215
      %v249 = vpop.permute.xlu0 %248
      %252 = vset.pattern.permute.xlu0 0
      %253 = vperm.xlu0 %252, %v216
      %v254 = vpop.permute.xlu0 %253
      %257 = vset.pattern.permute.xlu0 0
      %258 = vperm.xlu0 %257, %v217
      %v259 = vpop.permute.xlu0 %258
      %262 = vset.pattern.permute.xlu0 0
      %263 = vperm.xlu0 %262, %v218
      %v264 = vpop.permute.xlu0 %263
      %267 = vset.pattern.permute.xlu0 0
      %268 = vperm.xlu0 %267, %v219
      %v269 = vpop.permute.xlu0 %268
      %v272 = vlaneseq
      %v273 = vshrl.u32 %v272, 7
      %v274 = vsub.s32 0, %v273
      %v275 = vrot.slane %v220, %v274
      %v277 = vmul.f32 %v224, %v275
      %v278 = vmul.f32 %v229, %v275
      %v279 = vmul.f32 %v234, %v275
      %v280 = vmul.f32 %v239, %v275
      %v281 = vmul.f32 %v244, %v275
      %v282 = vmul.f32 %v249, %v275
      %v283 = vmul.f32 %v254, %v275
      %v284 = vmul.f32 %v259, %v275
      %v285 = vmul.f32 %v264, %v275
      %v286 = vmul.f32 %v269, %v275
      %v287 = vadd.f32 %v277, 0.0
      %v288 = vadd.f32 %v278, 0.0
      %v289 = vadd.f32 %v279, 0.0
      %v290 = vadd.f32 %v280, 0.0
      %v291 = vadd.f32 %v281, 0.0
      %v292 = vadd.f32 %v282, 0.0
      %v293 = vadd.f32 %v283, 0.0
      %v294 = vadd.f32 %v284, 0.0
      %v295 = vadd.f32 %v285, 0.0
      %v296 = vadd.f32 %v286, 0.0
      %v297 = vld [vmem:[%s193 + $0x58] sm:$0xff]
      %v298 = vld [vmem:[%s193 + $0x60] sm:$0xff]
      %v299 = vld [vmem:[%s193 + $0x68] sm:$0xff]
      %v300 = vld [vmem:[%s193 + $0x70] sm:$0xff]
      %v301 = vld [vmem:[%s193 + $0x78] sm:$0xff]
      %v302 = vld [vmem:[%s193 + $0x80] sm:$0xff]
      %v303 = vld [vmem:[%s193 + $0x88] sm:$0xff]
      %v304 = vld [vmem:[%s193 + $0x90] sm:$0xff]
      %v305 = vld [vmem:[%s193 + $0x98] sm:$0xff]
      %v306 = vld [vmem:[%s193 + $0xa0] sm:$0xff]
      %s307 = scalar_lea.vmem %s1, 1
      %v308 = vld [vmem:[%s307] sm:$0x1]
      %310 = vset.pattern.permute.xlu0 0
      %311 = vperm.xlu0 %310, %v297
      %v312 = vpop.permute.xlu0 %311
      %315 = vset.pattern.permute.xlu0 0
      %316 = vperm.xlu0 %315, %v298
      %v317 = vpop.permute.xlu0 %316
      %320 = vset.pattern.permute.xlu0 0
      %321 = vperm.xlu0 %320, %v299
      %v322 = vpop.permute.xlu0 %321
      %325 = vset.pattern.permute.xlu0 0
      %326 = vperm.xlu0 %325, %v300
      %v327 = vpop.permute.xlu0 %326
      %330 = vset.pattern.permute.xlu0 0
      %331 = vperm.xlu0 %330, %v301
      %v332 = vpop.permute.xlu0 %331
      %335 = vset.pattern.permute.xlu0 0
      %336 = vperm.xlu0 %335, %v302
      %v337 = vpop.permute.xlu0 %336
      %340 = vset.pattern.permute.xlu0 0
      %341 = vperm.xlu0 %340, %v303
      %v342 = vpop.permute.xlu0 %341
      %345 = vset.pattern.permute.xlu0 0
      %346 = vperm.xlu0 %345, %v304
      %v347 = vpop.permute.xlu0 %346
      %350 = vset.pattern.permute.xlu0 0
      %351 = vperm.xlu0 %350, %v305
      %v352 = vpop.permute.xlu0 %351
      %355 = vset.pattern.permute.xlu0 0
      %356 = vperm.xlu0 %355, %v306
      %v357 = vpop.permute.xlu0 %356
      %v360 = vlaneseq
      %v361 = vshrl.u32 %v360, 7
      %v362 = vsub.s32 0, %v361
      %v363 = vrot.slane %v308, %v362
      %v365 = vmul.f32 %v312, %v363
      %v366 = vmul.f32 %v317, %v363
      %v367 = vmul.f32 %v322, %v363
      %v368 = vmul.f32 %v327, %v363
      %v369 = vmul.f32 %v332, %v363
      %v370 = vmul.f32 %v337, %v363
      %v371 = vmul.f32 %v342, %v363
      %v372 = vmul.f32 %v347, %v363
      %v373 = vmul.f32 %v352, %v363
      %v374 = vmul.f32 %v357, %v363
      %v375 = vadd.f32 %v287, %v365
      %v376 = vadd.f32 %v288, %v366
      %v377 = vadd.f32 %v289, %v367
      %v378 = vadd.f32 %v290, %v368
      %v379 = vadd.f32 %v291, %v369
      %v380 = vadd.f32 %v292, %v370
      %v381 = vadd.f32 %v293, %v371
      %v382 = vadd.f32 %v294, %v372
      %v383 = vadd.f32 %v295, %v373
      %v384 = vadd.f32 %v296, %v374
      %v385 = vld [vmem:[%s193 + $0x1] sm:$0xff]
      %v386 = vld [vmem:[%s193 + $0x9] sm:$0xff]
      %v387 = vld [vmem:[%s193 + $0x11] sm:$0xff]
      %v388 = vld [vmem:[%s193 + $0x19] sm:$0xff]
      %v389 = vld [vmem:[%s193 + $0x21] sm:$0xff]
      %v390 = vld [vmem:[%s193 + $0x29] sm:$0xff]
      %v391 = vld [vmem:[%s193 + $0x31] sm:$0xff]
      %v392 = vld [vmem:[%s193 + $0x39] sm:$0xff]
      %v393 = vld [vmem:[%s193 + $0x41] sm:$0xff]
      %v394 = vld [vmem:[%s193 + $0x49] sm:$0xff]
      %s395 = scalar_lea.vmem %s1, 2
      %v396 = vld [vmem:[%s395] sm:$0x1]
      %398 = vset.pattern.permute.xlu0 0
      %399 = vperm.xlu0 %398, %v385
      %v400 = vpop.permute.xlu0 %399
      %403 = vset.pattern.permute.xlu0 0
      %404 = vperm.xlu0 %403, %v386
      %v405 = vpop.permute.xlu0 %404
      %408 = vset.pattern.permute.xlu0 0
      %409 = vperm.xlu0 %408, %v387
      %v410 = vpop.permute.xlu0 %409
      %413 = vset.pattern.permute.xlu0 0
      %414 = vperm.xlu0 %413, %v388
      %v415 = vpop.permute.xlu0 %414
      %418 = vset.pattern.permute.xlu0 0
      %419 = vperm.xlu0 %418, %v389
      %v420 = vpop.permute.xlu0 %419
      %423 = vset.pattern.permute.xlu0 0
      %424 = vperm.xlu0 %423, %v390
      %v425 = vpop.permute.xlu0 %424
      %428 = vset.pattern.permute.xlu0 0
      %429 = vperm.xlu0 %428, %v391
      %v430 = vpop.permute.xlu0 %429
      %433 = vset.pattern.permute.xlu0 0
      %434 = vperm.xlu0 %433, %v392
      %v435 = vpop.permute.xlu0 %434
      %438 = vset.pattern.permute.xlu0 0
      %439 = vperm.xlu0 %438, %v393
      %v440 = vpop.permute.xlu0 %439
      %443 = vset.pattern.permute.xlu0 0
      %444 = vperm.xlu0 %443, %v394
      %v445 = vpop.permute.xlu0 %444
      %v448 = vlaneseq
      %v449 = vshrl.u32 %v448, 7
      %v450 = vsub.s32 0, %v449
      %v451 = vrot.slane %v396, %v450
      %v453 = vmul.f32 %v400, %v451
      %v454 = vmul.f32 %v405, %v451
      %v455 = vmul.f32 %v410, %v451
      %v456 = vmul.f32 %v415, %v451
      %v457 = vmul.f32 %v420, %v451
      %v458 = vmul.f32 %v425, %v451
      %v459 = vmul.f32 %v430, %v451
      %v460 = vmul.f32 %v435, %v451
      %v461 = vmul.f32 %v440, %v451
      %v462 = vmul.f32 %v445, %v451
      %v463 = vadd.f32 %v375, %v453
      %v464 = vadd.f32 %v376, %v454
      %v465 = vadd.f32 %v377, %v455
      %v466 = vadd.f32 %v378, %v456
      %v467 = vadd.f32 %v379, %v457
      %v468 = vadd.f32 %v380, %v458
      %v469 = vadd.f32 %v381, %v459
      %v470 = vadd.f32 %v382, %v460
      %v471 = vadd.f32 %v383, %v461
      %v472 = vadd.f32 %v384, %v462
      %v473 = vld [vmem:[%s193 + $0xb0] sm:$0xff]
      %v474 = vld [vmem:[%s193 + $0xb8] sm:$0xff]
      %v475 = vld [vmem:[%s193 + $0xc0] sm:$0xff]
      %v476 = vld [vmem:[%s193 + $0xc8] sm:$0xff]
      %v477 = vld [vmem:[%s193 + $0xd0] sm:$0xff]
      %v478 = vld [vmem:[%s193 + $0xd8] sm:$0xff]
      %v479 = vld [vmem:[%s193 + $0xe0] sm:$0xff]
      %v480 = vld [vmem:[%s193 + $0xe8] sm:$0xff]
      %v481 = vld [vmem:[%s193 + $0xf0] sm:$0xff]
      %v482 = vld [vmem:[%s193 + $0xf8] sm:$0xff]
      %s483 = scalar_lea.vmem %s1, 3
      %v484 = vld [vmem:[%s483] sm:$0x1]
      %486 = vset.pattern.permute.xlu0 0
      %487 = vperm.xlu0 %486, %v473
      %v488 = vpop.permute.xlu0 %487
      %491 = vset.pattern.permute.xlu0 0
      %492 = vperm.xlu0 %491, %v474
      %v493 = vpop.permute.xlu0 %492
      %496 = vset.pattern.permute.xlu0 0
      %497 = vperm.xlu0 %496, %v475
      %v498 = vpop.permute.xlu0 %497
      %501 = vset.pattern.permute.xlu0 0
      %502 = vperm.xlu0 %501, %v476
      %v503 = vpop.permute.xlu0 %502
      %506 = vset.pattern.permute.xlu0 0
      %507 = vperm.xlu0 %506, %v477
      %v508 = vpop.permute.xlu0 %507
      %511 = vset.pattern.permute.xlu0 0
      %512 = vperm.xlu0 %511, %v478
      %v513 = vpop.permute.xlu0 %512
      %516 = vset.pattern.permute.xlu0 0
      %517 = vperm.xlu0 %516, %v479
      %v518 = vpop.permute.xlu0 %517
      %521 = vset.pattern.permute.xlu0 0
      %522 = vperm.xlu0 %521, %v480
      %v523 = vpop.permute.xlu0 %522
      %526 = vset.pattern.permute.xlu0 0
      %527 = vperm.xlu0 %526, %v481
      %v528 = vpop.permute.xlu0 %527
      %531 = vset.pattern.permute.xlu0 0
      %532 = vperm.xlu0 %531, %v482
      %v533 = vpop.permute.xlu0 %532
      %v536 = vlaneseq
      %v537 = vshrl.u32 %v536, 7
      %v538 = vsub.s32 0, %v537
      %v539 = vrot.slane %v484, %v538
      %v541 = vmul.f32 %v488, %v539
      %v542 = vmul.f32 %v493, %v539
      %v543 = vmul.f32 %v498, %v539
      %v544 = vmul.f32 %v503, %v539
      %v545 = vmul.f32 %v508, %v539
      %v546 = vmul.f32 %v513, %v539
      %v547 = vmul.f32 %v518, %v539
      %v548 = vmul.f32 %v523, %v539
      %v549 = vmul.f32 %v528, %v539
      %v550 = vmul.f32 %v533, %v539
      %v551 = vadd.f32 %v463, %v541
      %v552 = vadd.f32 %v464, %v542
      %v553 = vadd.f32 %v465, %v543
      %v554 = vadd.f32 %v466, %v544
      %v555 = vadd.f32 %v467, %v545
      %v556 = vadd.f32 %v468, %v546
      %v557 = vadd.f32 %v469, %v547
      %v558 = vadd.f32 %v470, %v548
      %v559 = vadd.f32 %v471, %v549
      %v560 = vadd.f32 %v472, %v550
      %v561 = vld [vmem:[%s193 + $0x108] sm:$0xff]
      %v562 = vld [vmem:[%s193 + $0x110] sm:$0xff]
      %v563 = vld [vmem:[%s193 + $0x118] sm:$0xff]
      %v564 = vld [vmem:[%s193 + $0x120] sm:$0xff]
      %v565 = vld [vmem:[%s193 + $0x128] sm:$0xff]
      %v566 = vld [vmem:[%s193 + $0x130] sm:$0xff]
      %v567 = vld [vmem:[%s193 + $0x138] sm:$0xff]
      %v568 = vld [vmem:[%s193 + $0x140] sm:$0xff]
      %v569 = vld [vmem:[%s193 + $0x148] sm:$0xff]
      %v570 = vld [vmem:[%s193 + $0x150] sm:$0xff]
      %s571 = scalar_lea.vmem %s1, 4
      %v572 = vld [vmem:[%s571] sm:$0x1]
      %574 = vset.pattern.permute.xlu0 0
      %575 = vperm.xlu0 %574, %v561
      %v576 = vpop.permute.xlu0 %575
      %579 = vset.pattern.permute.xlu0 0
      %580 = vperm.xlu0 %579, %v562
      %v581 = vpop.permute.xlu0 %580
      %584 = vset.pattern.permute.xlu0 0
      %585 = vperm.xlu0 %584, %v563
      %v586 = vpop.permute.xlu0 %585
      %589 = vset.pattern.permute.xlu0 0
      %590 = vperm.xlu0 %589, %v564
      %v591 = vpop.permute.xlu0 %590
      %594 = vset.pattern.permute.xlu0 0
      %595 = vperm.xlu0 %594, %v565
      %v596 = vpop.permute.xlu0 %595
      %599 = vset.pattern.permute.xlu0 0
      %600 = vperm.xlu0 %599, %v566
      %v601 = vpop.permute.xlu0 %600
      %604 = vset.pattern.permute.xlu0 0
      %605 = vperm.xlu0 %604, %v567
      %v606 = vpop.permute.xlu0 %605
      %609 = vset.pattern.permute.xlu0 0
      %610 = vperm.xlu0 %609, %v568
      %v611 = vpop.permute.xlu0 %610
      %614 = vset.pattern.permute.xlu0 0
      %615 = vperm.xlu0 %614, %v569
      %v616 = vpop.permute.xlu0 %615
      %619 = vset.pattern.permute.xlu0 0
      %620 = vperm.xlu0 %619, %v570
      %v621 = vpop.permute.xlu0 %620
      %v624 = vlaneseq
      %v625 = vshrl.u32 %v624, 7
      %v626 = vsub.s32 0, %v625
      %v627 = vrot.slane %v572, %v626
      %v629 = vmul.f32 %v576, %v627
      %v630 = vmul.f32 %v581, %v627
      %v631 = vmul.f32 %v586, %v627
      %v632 = vmul.f32 %v591, %v627
      %v633 = vmul.f32 %v596, %v627
      %v634 = vmul.f32 %v601, %v627
      %v635 = vmul.f32 %v606, %v627
      %v636 = vmul.f32 %v611, %v627
      %v637 = vmul.f32 %v616, %v627
      %v638 = vmul.f32 %v621, %v627
      %v639 = vadd.f32 %v551, %v629
      %v640 = vadd.f32 %v552, %v630
      %v641 = vadd.f32 %v553, %v631
      %v642 = vadd.f32 %v554, %v632
      %v643 = vadd.f32 %v555, %v633
      %v644 = vadd.f32 %v556, %v634
      %v645 = vadd.f32 %v557, %v635
      %v646 = vadd.f32 %v558, %v636
      %v647 = vadd.f32 %v559, %v637
      %v648 = vadd.f32 %v560, %v638
      %v649 = vld [vmem:[%s193 + $0xb1] sm:$0xff]
      %v650 = vld [vmem:[%s193 + $0xb9] sm:$0xff]
      %v651 = vld [vmem:[%s193 + $0xc1] sm:$0xff]
      %v652 = vld [vmem:[%s193 + $0xc9] sm:$0xff]
      %v653 = vld [vmem:[%s193 + $0xd1] sm:$0xff]
      %v654 = vld [vmem:[%s193 + $0xd9] sm:$0xff]
      %v655 = vld [vmem:[%s193 + $0xe1] sm:$0xff]
      %v656 = vld [vmem:[%s193 + $0xe9] sm:$0xff]
      %v657 = vld [vmem:[%s193 + $0xf1] sm:$0xff]
      %v658 = vld [vmem:[%s193 + $0xf9] sm:$0xff]
      %s659 = scalar_lea.vmem %s1, 5
      %v660 = vld [vmem:[%s659] sm:$0x1]
      %662 = vset.pattern.permute.xlu0 0
      %663 = vperm.xlu0 %662, %v649
      %v664 = vpop.permute.xlu0 %663
      %667 = vset.pattern.permute.xlu0 0
      %668 = vperm.xlu0 %667, %v650
      %v669 = vpop.permute.xlu0 %668
      %672 = vset.pattern.permute.xlu0 0
      %673 = vperm.xlu0 %672, %v651
      %v674 = vpop.permute.xlu0 %673
      %677 = vset.pattern.permute.xlu0 0
      %678 = vperm.xlu0 %677, %v652
      %v679 = vpop.permute.xlu0 %678
      %682 = vset.pattern.permute.xlu0 0
      %683 = vperm.xlu0 %682, %v653
      %v684 = vpop.permute.xlu0 %683
      %687 = vset.pattern.permute.xlu0 0
      %688 = vperm.xlu0 %687, %v654
      %v689 = vpop.permute.xlu0 %688
      %692 = vset.pattern.permute.xlu0 0
      %693 = vperm.xlu0 %692, %v655
      %v694 = vpop.permute.xlu0 %693
      %697 = vset.pattern.permute.xlu0 0
      %698 = vperm.xlu0 %697, %v656
      %v699 = vpop.permute.xlu0 %698
      %702 = vset.pattern.permute.xlu0 0
      %703 = vperm.xlu0 %702, %v657
      %v704 = vpop.permute.xlu0 %703
      %707 = vset.pattern.permute.xlu0 0
      %708 = vperm.xlu0 %707, %v658
      %v709 = vpop.permute.xlu0 %708
      %v712 = vlaneseq
      %v713 = vshrl.u32 %v712, 7
      %v714 = vsub.s32 0, %v713
      %v715 = vrot.slane %v660, %v714
      %v717 = vmul.f32 %v664, %v715
      %v718 = vmul.f32 %v669, %v715
      %v719 = vmul.f32 %v674, %v715
      %v720 = vmul.f32 %v679, %v715
      %v721 = vmul.f32 %v684, %v715
      %v722 = vmul.f32 %v689, %v715
      %v723 = vmul.f32 %v694, %v715
      %v724 = vmul.f32 %v699, %v715
      %v725 = vmul.f32 %v704, %v715
      %v726 = vmul.f32 %v709, %v715
      %v727 = vadd.f32 %v639, %v717
      %v728 = vadd.f32 %v640, %v718
      %v729 = vadd.f32 %v641, %v719
      %v730 = vadd.f32 %v642, %v720
      %v731 = vadd.f32 %v643, %v721
      %v732 = vadd.f32 %v644, %v722
      %v733 = vadd.f32 %v645, %v723
      %v734 = vadd.f32 %v646, %v724
      %v735 = vadd.f32 %v647, %v725
      %v736 = vadd.f32 %v648, %v726
      %v737 = vld [vmem:[%s193 + $0x9] sm:$0xff]
      %v738 = vld [vmem:[%s193 + $0x11] sm:$0xff]
      %v739 = vld [vmem:[%s193 + $0x19] sm:$0xff]
      %v740 = vld [vmem:[%s193 + $0x21] sm:$0xff]
      %v741 = vld [vmem:[%s193 + $0x29] sm:$0xff]
      %v742 = vld [vmem:[%s193 + $0x31] sm:$0xff]
      %v743 = vld [vmem:[%s193 + $0x39] sm:$0xff]
      %v744 = vld [vmem:[%s193 + $0x41] sm:$0xff]
      %v745 = vld [vmem:[%s193 + $0x49] sm:$0xff]
      %v746 = vld [vmem:[%s193 + $0x51] sm:$0xff]
      %s747 = scalar_lea.vmem %s1, 6
      %v748 = vld [vmem:[%s747] sm:$0x1]
      %750 = vset.pattern.permute.xlu0 0
      %751 = vperm.xlu0 %750, %v737
      %v752 = vpop.permute.xlu0 %751
      %755 = vset.pattern.permute.xlu0 0
      %756 = vperm.xlu0 %755, %v738
      %v757 = vpop.permute.xlu0 %756
      %760 = vset.pattern.permute.xlu0 0
      %761 = vperm.xlu0 %760, %v739
      %v762 = vpop.permute.xlu0 %761
      %765 = vset.pattern.permute.xlu0 0
      %766 = vperm.xlu0 %765, %v740
      %v767 = vpop.permute.xlu0 %766
      %770 = vset.pattern.permute.xlu0 0
      %771 = vperm.xlu0 %770, %v741
      %v772 = vpop.permute.xlu0 %771
      %775 = vset.pattern.permute.xlu0 0
      %776 = vperm.xlu0 %775, %v742
      %v777 = vpop.permute.xlu0 %776
      %780 = vset.pattern.permute.xlu0 0
      %781 = vperm.xlu0 %780, %v743
      %v782 = vpop.permute.xlu0 %781
      %785 = vset.pattern.permute.xlu0 0
      %786 = vperm.xlu0 %785, %v744
      %v787 = vpop.permute.xlu0 %786
      %790 = vset.pattern.permute.xlu0 0
      %791 = vperm.xlu0 %790, %v745
      %v792 = vpop.permute.xlu0 %791
      %795 = vset.pattern.permute.xlu0 0
      %796 = vperm.xlu0 %795, %v746
      %v797 = vpop.permute.xlu0 %796
      %v800 = vlaneseq
      %v801 = vshrl.u32 %v800, 7
      %v802 = vsub.s32 0, %v801
      %v803 = vrot.slane %v748, %v802
      %v805 = vmul.f32 %v752, %v803
      %v806 = vmul.f32 %v757, %v803
      %v807 = vmul.f32 %v762, %v803
      %v808 = vmul.f32 %v767, %v803
      %v809 = vmul.f32 %v772, %v803
      %v810 = vmul.f32 %v777, %v803
      %v811 = vmul.f32 %v782, %v803
      %v812 = vmul.f32 %v787, %v803
      %v813 = vmul.f32 %v792, %v803
      %v814 = vmul.f32 %v797, %v803
      %v815 = vadd.f32 %v727, %v805
      %v816 = vadd.f32 %v728, %v806
      %v817 = vadd.f32 %v729, %v807
      %v818 = vadd.f32 %v730, %v808
      %v819 = vadd.f32 %v731, %v809
      %v820 = vadd.f32 %v732, %v810
      %v821 = vadd.f32 %v733, %v811
      %v822 = vadd.f32 %v734, %v812
      %v823 = vadd.f32 %v735, %v813
      %v824 = vadd.f32 %v736, %v814
      %v825 = vld [vmem:[%s193 + $0x61] sm:$0xff]
      %v826 = vld [vmem:[%s193 + $0x69] sm:$0xff]
      %v827 = vld [vmem:[%s193 + $0x71] sm:$0xff]
      %v828 = vld [vmem:[%s193 + $0x79] sm:$0xff]
      %v829 = vld [vmem:[%s193 + $0x81] sm:$0xff]
      %v830 = vld [vmem:[%s193 + $0x89] sm:$0xff]
      %v831 = vld [vmem:[%s193 + $0x91] sm:$0xff]
      %v832 = vld [vmem:[%s193 + $0x99] sm:$0xff]
      %v833 = vld [vmem:[%s193 + $0xa1] sm:$0xff]
      %v834 = vld [vmem:[%s193 + $0xa9] sm:$0xff]
      %s835 = scalar_lea.vmem %s1, 7
      %v836 = vld [vmem:[%s835] sm:$0x1]
      %838 = vset.pattern.permute.xlu0 0
      %839 = vperm.xlu0 %838, %v825
      %v840 = vpop.permute.xlu0 %839
      %843 = vset.pattern.permute.xlu0 0
      %844 = vperm.xlu0 %843, %v826
      %v845 = vpop.permute.xlu0 %844
      %848 = vset.pattern.permute.xlu0 0
      %849 = vperm.xlu0 %848, %v827
      %v850 = vpop.permute.xlu0 %849
      %853 = vset.pattern.permute.xlu0 0
      %854 = vperm.xlu0 %853, %v828
      %v855 = vpop.permute.xlu0 %854
      %858 = vset.pattern.permute.xlu0 0
      %859 = vperm.xlu0 %858, %v829
      %v860 = vpop.permute.xlu0 %859
      %863 = vset.pattern.permute.xlu0 0
      %864 = vperm.xlu0 %863, %v830
      %v865 = vpop.permute.xlu0 %864
      %868 = vset.pattern.permute.xlu0 0
      %869 = vperm.xlu0 %868, %v831
      %v870 = vpop.permute.xlu0 %869
      %873 = vset.pattern.permute.xlu0 0
      %874 = vperm.xlu0 %873, %v832
      %v875 = vpop.permute.xlu0 %874
      %878 = vset.pattern.permute.xlu0 0
      %879 = vperm.xlu0 %878, %v833
      %v880 = vpop.permute.xlu0 %879
      %883 = vset.pattern.permute.xlu0 0
      %884 = vperm.xlu0 %883, %v834
      %v885 = vpop.permute.xlu0 %884
      %v888 = vlaneseq
      %v889 = vshrl.u32 %v888, 7
      %v890 = vsub.s32 0, %v889
      %v891 = vrot.slane %v836, %v890
      %v893 = vmul.f32 %v840, %v891
      %v894 = vmul.f32 %v845, %v891
      %v895 = vmul.f32 %v850, %v891
      %v896 = vmul.f32 %v855, %v891
      %v897 = vmul.f32 %v860, %v891
      %v898 = vmul.f32 %v865, %v891
      %v899 = vmul.f32 %v870, %v891
      %v900 = vmul.f32 %v875, %v891
      %v901 = vmul.f32 %v880, %v891
      %v902 = vmul.f32 %v885, %v891
      %v903 = vadd.f32 %v815, %v893
      %v904 = vadd.f32 %v816, %v894
      %v905 = vadd.f32 %v817, %v895
      %v906 = vadd.f32 %v818, %v896
      %v907 = vadd.f32 %v819, %v897
      %v908 = vadd.f32 %v820, %v898
      %v909 = vadd.f32 %v821, %v899
      %v910 = vadd.f32 %v822, %v900
      %v911 = vadd.f32 %v823, %v901
      %v912 = vadd.f32 %v824, %v902
      %v913 = vld [vmem:[%s193 + $0xa] sm:$0xff]
      %v914 = vld [vmem:[%s193 + $0x12] sm:$0xff]
      %v915 = vld [vmem:[%s193 + $0x1a] sm:$0xff]
      %v916 = vld [vmem:[%s193 + $0x22] sm:$0xff]
      %v917 = vld [vmem:[%s193 + $0x2a] sm:$0xff]
      %v918 = vld [vmem:[%s193 + $0x32] sm:$0xff]
      %v919 = vld [vmem:[%s193 + $0x3a] sm:$0xff]
      %v920 = vld [vmem:[%s193 + $0x42] sm:$0xff]
      %v921 = vld [vmem:[%s193 + $0x4a] sm:$0xff]
      %v922 = vld [vmem:[%s193 + $0x52] sm:$0xff]
      %s923 = scalar_lea.vmem %s1, 8
      %v924 = vld [vmem:[%s923] sm:$0x1]
      %926 = vset.pattern.permute.xlu0 0
      %927 = vperm.xlu0 %926, %v913
      %v928 = vpop.permute.xlu0 %927
      %931 = vset.pattern.permute.xlu0 0
      %932 = vperm.xlu0 %931, %v914
      %v933 = vpop.permute.xlu0 %932
      %936 = vset.pattern.permute.xlu0 0
      %937 = vperm.xlu0 %936, %v915
      %v938 = vpop.permute.xlu0 %937
      %941 = vset.pattern.permute.xlu0 0
      %942 = vperm.xlu0 %941, %v916
      %v943 = vpop.permute.xlu0 %942
      %946 = vset.pattern.permute.xlu0 0
      %947 = vperm.xlu0 %946, %v917
      %v948 = vpop.permute.xlu0 %947
      %951 = vset.pattern.permute.xlu0 0
      %952 = vperm.xlu0 %951, %v918
      %v953 = vpop.permute.xlu0 %952
      %956 = vset.pattern.permute.xlu0 0
      %957 = vperm.xlu0 %956, %v919
      %v958 = vpop.permute.xlu0 %957
      %961 = vset.pattern.permute.xlu0 0
      %962 = vperm.xlu0 %961, %v920
      %v963 = vpop.permute.xlu0 %962
      %966 = vset.pattern.permute.xlu0 0
      %967 = vperm.xlu0 %966, %v921
      %v968 = vpop.permute.xlu0 %967
      %971 = vset.pattern.permute.xlu0 0
      %972 = vperm.xlu0 %971, %v922
      %v973 = vpop.permute.xlu0 %972
      %v976 = vlaneseq
      %v977 = vshrl.u32 %v976, 7
      %v978 = vsub.s32 0, %v977
      %v979 = vrot.slane %v924, %v978
      %v981 = vmul.f32 %v928, %v979
      %v982 = vmul.f32 %v933, %v979
      %v983 = vmul.f32 %v938, %v979
      %v984 = vmul.f32 %v943, %v979
      %v985 = vmul.f32 %v948, %v979
      %v986 = vmul.f32 %v953, %v979
      %v987 = vmul.f32 %v958, %v979
      %v988 = vmul.f32 %v963, %v979
      %v989 = vmul.f32 %v968, %v979
      %v990 = vmul.f32 %v973, %v979
      %v991 = vadd.f32 %v903, %v981
      %v992 = vadd.f32 %v904, %v982
      %v993 = vadd.f32 %v905, %v983
      %v994 = vadd.f32 %v906, %v984
      %v995 = vadd.f32 %v907, %v985
      %v996 = vadd.f32 %v908, %v986
      %v997 = vadd.f32 %v909, %v987
      %v998 = vadd.f32 %v910, %v988
      %v999 = vadd.f32 %v911, %v989
      %v1000 = vadd.f32 %v912, %v990
      %v1001 = vpack.c.bf16 %v992, %v991
      %v1002 = vpack.c.bf16 %v994, %v993
      %v1003 = vpack.c.bf16 %v996, %v995
      %v1004 = vpack.c.bf16 %v998, %v997
      %v1005 = vpack.c.bf16 %v1000, %v999
      %v1011 = vunpack.c.l.b16 %v1001
      %v1012 = vunpack.c.h.b16 %v1001
      %v1013 = vunpack.c.l.b16 %v1002
      %v1014 = vunpack.c.h.b16 %v1002
      %v1015 = vunpack.c.l.b16 %v1003
      %v1016 = vunpack.c.h.b16 %v1003
      %v1017 = vunpack.c.l.b16 %v1004
      %v1018 = vunpack.c.h.b16 %v1004
      %v1019 = vunpack.c.l.b16 %v1005
      %v1020 = vunpack.c.h.b16 %v1005
      %v1021 = vpack.c.b16 %v1011, %v1011
      %v1022 = vpack.c.b16 %v1012, %v1012
      %v1023 = vpack.c.b16 %v1013, %v1013
      %v1024 = vpack.c.b16 %v1014, %v1014
      %v1025 = vpack.c.b16 %v1015, %v1015
      %v1026 = vpack.c.b16 %v1016, %v1016
      %v1027 = vpack.c.b16 %v1017, %v1017
      %v1028 = vpack.c.b16 %v1018, %v1018
      %v1029 = vpack.c.b16 %v1019, %v1019
      %v1030 = vpack.c.b16 %v1020, %v1020
      %vm1041 = vcmask 257024
      %1042 = vst.msk [vmem:[%s202] sm:$0xf] %vm1041, %v1021
      %1043 = vst.msk [vmem:[%s202 + $0x4] sm:$0xf] %vm1041, %v1022
      %1044 = vst.msk [vmem:[%s202 + $0x8] sm:$0xf] %vm1041, %v1023
      %1045 = vst.msk [vmem:[%s202 + $0xc] sm:$0xf] %vm1041, %v1024
      %1046 = vst.msk [vmem:[%s202 + $0x10] sm:$0xf] %vm1041, %v1025
      %1047 = vst.msk [vmem:[%s202 + $0x14] sm:$0xf] %vm1041, %v1026
      %1048 = vst.msk [vmem:[%s202 + $0x18] sm:$0xf] %vm1041, %v1027
      %1049 = vst.msk [vmem:[%s202 + $0x1c] sm:$0xf] %vm1041, %v1028
      %1050 = vst.msk [vmem:[%s202 + $0x20] sm:$0xf] %vm1041, %v1029
      %1051 = vst.msk [vmem:[%s202 + $0x24] sm:$0xf] %vm1041, %v1030
      %v1052 = vlaneseq
      %v1053 = vshrl.u32 %v1052, 7
      %v1054 = vadd.s32 %v1053, 8
      %v1055 = vadd.s32 %v1053, 16
      %v1056 = vadd.s32 %v1053, 24
      %v1057 = vadd.s32 %v1053, 32
      %v1058 = vadd.s32 %v1053, 40
      %v1059 = vadd.s32 %v1053, 48
      %v1060 = vadd.s32 %v1053, 56
      %v1061 = vadd.s32 %v1053, 64
      %v1062 = vadd.s32 %v1053, 72
      %vm1063 = vcmp.lt.s32.totalorder %v1053, 0
      %v1064 = vsub.s32 0, %v1053
      %v1065 = vsel %vm1063, %v1064, %v1053
      %v1066 = vmul.u32.u64.compose %v1065, 3817748708
      %v1067 = vextract.low.u32 %v1066
      %v1068 = vextract.high.u32 %v1066
      %v1069 = vshrl.u32 %v1068, 3
      %v1070 = vmul.u32 %v1069, 9
      %v1071 = vsub.s32 %v1065, %v1070
      %v1072 = vsub.s32 0, %v1071
      %v1073 = vsel %vm1063, %v1072, %v1071
      %vm1074 = vcmp.lt.s32.totalorder %v1054, 0
      %v1075 = vsub.s32 0, %v1054
      %v1076 = vsel %vm1074, %v1075, %v1054
      %v1077 = vmul.u32.u64.compose %v1076, 3817748708
      %v1078 = vextract.low.u32 %v1077
      %v1079 = vextract.high.u32 %v1077
      %v1080 = vshrl.u32 %v1079, 3
      %v1081 = vmul.u32 %v1080, 9
      %v1082 = vsub.s32 %v1076, %v1081
      %v1083 = vsub.s32 0, %v1082
      %v1084 = vsel %vm1074, %v1083, %v1082
      %vm1085 = vcmp.lt.s32.totalorder %v1055, 0
      %v1086 = vsub.s32 0, %v1055
      %v1087 = vsel %vm1085, %v1086, %v1055
      %v1088 = vmul.u32.u64.compose %v1087, 3817748708
      %v1089 = vextract.low.u32 %v1088
      %v1090 = vextract.high.u32 %v1088
      %v1091 = vshrl.u32 %v1090, 3
      %v1092 = vmul.u32 %v1091, 9
      %v1093 = vsub.s32 %v1087, %v1092
      %v1094 = vsub.s32 0, %v1093
      %v1095 = vsel %vm1085, %v1094, %v1093
      %vm1096 = vcmp.lt.s32.totalorder %v1056, 0
      %v1097 = vsub.s32 0, %v1056
      %v1098 = vsel %vm1096, %v1097, %v1056
      %v1099 = vmul.u32.u64.compose %v1098, 3817748708
      %v1100 = vextract.low.u32 %v1099
      %v1101 = vextract.high.u32 %v1099
      %v1102 = vshrl.u32 %v1101, 3
      %v1103 = vmul.u32 %v1102, 9
      %v1104 = vsub.s32 %v1098, %v1103
      %v1105 = vsub.s32 0, %v1104
      %v1106 = vsel %vm1096, %v1105, %v1104
      %vm1107 = vcmp.lt.s32.totalorder %v1057, 0
      %v1108 = vsub.s32 0, %v1057
      %v1109 = vsel %vm1107, %v1108, %v1057
      %v1110 = vmul.u32.u64.compose %v1109, 3817748708
      %v1111 = vextract.low.u32 %v1110
      %v1112 = vextract.high.u32 %v1110
      %v1113 = vshrl.u32 %v1112, 3
      %v1114 = vmul.u32 %v1113, 9
      %v1115 = vsub.s32 %v1109, %v1114
      %v1116 = vsub.s32 0, %v1115
      %v1117 = vsel %vm1107, %v1116, %v1115
      %vm1118 = vcmp.lt.s32.totalorder %v1058, 0
      %v1119 = vsub.s32 0, %v1058
      %v1120 = vsel %vm1118, %v1119, %v1058
      %v1121 = vmul.u32.u64.compose %v1120, 3817748708
      %v1122 = vextract.low.u32 %v1121
      %v1123 = vextract.high.u32 %v1121
      %v1124 = vshrl.u32 %v1123, 3
      %v1125 = vmul.u32 %v1124, 9
      %v1126 = vsub.s32 %v1120, %v1125
      %v1127 = vsub.s32 0, %v1126
      %v1128 = vsel %vm1118, %v1127, %v1126
      %vm1129 = vcmp.lt.s32.totalorder %v1059, 0
      %v1130 = vsub.s32 0, %v1059
      %v1131 = vsel %vm1129, %v1130, %v1059
      %v1132 = vmul.u32.u64.compose %v1131, 3817748708
      %v1133 = vextract.low.u32 %v1132
      %v1134 = vextract.high.u32 %v1132
      %v1135 = vshrl.u32 %v1134, 3
      %v1136 = vmul.u32 %v1135, 9
      %v1137 = vsub.s32 %v1131, %v1136
      %v1138 = vsub.s32 0, %v1137
      %v1139 = vsel %vm1129, %v1138, %v1137
      %vm1140 = vcmp.lt.s32.totalorder %v1060, 0
      %v1141 = vsub.s32 0, %v1060
      %v1142 = vsel %vm1140, %v1141, %v1060
      %v1143 = vmul.u32.u64.compose %v1142, 3817748708
      %v1144 = vextract.low.u32 %v1143
      %v1145 = vextract.high.u32 %v1143
      %v1146 = vshrl.u32 %v1145, 3
      %v1147 = vmul.u32 %v1146, 9
      %v1148 = vsub.s32 %v1142, %v1147
      %v1149 = vsub.s32 0, %v1148
      %v1150 = vsel %vm1140, %v1149, %v1148
      %vm1151 = vcmp.lt.s32.totalorder %v1061, 0
      %v1152 = vsub.s32 0, %v1061
      %v1153 = vsel %vm1151, %v1152, %v1061
      %v1154 = vmul.u32.u64.compose %v1153, 3817748708
      %v1155 = vextract.low.u32 %v1154
      %v1156 = vextract.high.u32 %v1154
      %v1157 = vshrl.u32 %v1156, 3
      %v1158 = vmul.u32 %v1157, 9
      %v1159 = vsub.s32 %v1153, %v1158
      %v1160 = vsub.s32 0, %v1159
      %v1161 = vsel %vm1151, %v1160, %v1159
      %vm1162 = vcmp.lt.s32.totalorder %v1062, 0
      %v1163 = vsub.s32 0, %v1062
      %v1164 = vsel %vm1162, %v1163, %v1062
      %v1165 = vmul.u32.u64.compose %v1164, 3817748708
      %v1166 = vextract.low.u32 %v1165
      %v1167 = vextract.high.u32 %v1165
      %v1168 = vshrl.u32 %v1167, 3
      %v1169 = vmul.u32 %v1168, 9
      %v1170 = vsub.s32 %v1164, %v1169
      %v1171 = vsub.s32 0, %v1170
      %v1172 = vsel %vm1162, %v1171, %v1170
      %vm1173 = vcmp.ne.s32.totalorder %v1073, 0
      %vm1174 = vcmp.ne.s32.totalorder %v1084, 0
      %vm1175 = vcmp.ne.s32.totalorder %v1095, 0
      %vm1176 = vcmp.ne.s32.totalorder %v1106, 0
      %vm1177 = vcmp.ne.s32.totalorder %v1117, 0
      %vm1178 = vcmp.ne.s32.totalorder %v1128, 0
      %vm1179 = vcmp.ne.s32.totalorder %v1139, 0
      %vm1180 = vcmp.ne.s32.totalorder %v1150, 0
      %vm1181 = vcmp.ne.s32.totalorder %v1161, 0
      %vm1182 = vcmp.ne.s32.totalorder %v1172, 0
      %vm1183 = vcmp.lt.s32.totalorder %v1073, 0
      %vm1184 = vcmp.lt.s32.totalorder %v1084, 0
      %vm1185 = vcmp.lt.s32.totalorder %v1095, 0
      %vm1186 = vcmp.lt.s32.totalorder %v1106, 0
      %vm1187 = vcmp.lt.s32.totalorder %v1117, 0
      %vm1188 = vcmp.lt.s32.totalorder %v1128, 0
      %vm1189 = vcmp.lt.s32.totalorder %v1139, 0
      %vm1190 = vcmp.lt.s32.totalorder %v1150, 0
      %vm1191 = vcmp.lt.s32.totalorder %v1161, 0
      %vm1192 = vcmp.lt.s32.totalorder %v1172, 0
      %vm1193 = vmand %vm1183, %vm1173
      %vm1194 = vmand %vm1184, %vm1174
      %vm1195 = vmand %vm1185, %vm1175
      %vm1196 = vmand %vm1186, %vm1176
      %vm1197 = vmand %vm1187, %vm1177
      %vm1198 = vmand %vm1188, %vm1178
      %vm1199 = vmand %vm1189, %vm1179
      %vm1200 = vmand %vm1190, %vm1180
      %vm1201 = vmand %vm1191, %vm1181
      %vm1202 = vmand %vm1192, %vm1182
      %v1203 = vadd.s32 %v1073, 9
      %v1204 = vadd.s32 %v1084, 9
      %v1205 = vadd.s32 %v1095, 9
      %v1206 = vadd.s32 %v1106, 9
      %v1207 = vadd.s32 %v1117, 9
      %v1208 = vadd.s32 %v1128, 9
      %v1209 = vadd.s32 %v1139, 9
      %v1210 = vadd.s32 %v1150, 9
      %v1211 = vadd.s32 %v1161, 9
      %v1212 = vadd.s32 %v1172, 9
      %v1213 = vsel %vm1193, %v1203, %v1073
      %v1214 = vsel %vm1194, %v1204, %v1084
      %v1215 = vsel %vm1195, %v1205, %v1095
      %v1216 = vsel %vm1196, %v1206, %v1106
      %v1217 = vsel %vm1197, %v1207, %v1117
      %v1218 = vsel %vm1198, %v1208, %v1128
      %v1219 = vsel %vm1199, %v1209, %v1139
      %v1220 = vsel %vm1200, %v1210, %v1150
      %v1221 = vsel %vm1201, %v1211, %v1161
      %v1222 = vsel %vm1202, %v1212, %v1172
      %vm1223 = vcmp.ne.s32.totalorder %v1213, 8
      %vm1224 = vcmp.ne.s32.totalorder %v1214, 8
      %vm1225 = vcmp.ne.s32.totalorder %v1215, 8
      %vm1226 = vcmp.ne.s32.totalorder %v1216, 8
      %vm1227 = vcmp.ne.s32.totalorder %v1217, 8
      %vm1228 = vcmp.ne.s32.totalorder %v1218, 8
      %vm1229 = vcmp.ne.s32.totalorder %v1219, 8
      %vm1230 = vcmp.ne.s32.totalorder %v1220, 8
      %vm1231 = vcmp.ne.s32.totalorder %v1221, 8
      %vm1232 = vcmp.ne.s32.totalorder %v1222, 8
      %vm1233 = vcmp.lt.s32.totalorder %v1053, 72
      %vm1234 = vcmp.lt.s32.totalorder %v1054, 72
      %vm1235 = vcmp.lt.s32.totalorder %v1055, 72
      %vm1236 = vcmp.lt.s32.totalorder %v1056, 72
      %vm1237 = vcmp.lt.s32.totalorder %v1057, 72
      %vm1238 = vcmp.lt.s32.totalorder %v1058, 72
      %vm1239 = vcmp.lt.s32.totalorder %v1059, 72
      %vm1240 = vcmp.lt.s32.totalorder %v1060, 72
      %vm1241 = vcmp.lt.s32.totalorder %v1061, 72
      %vm1242 = vcmp.lt.s32.totalorder %v1062, 72
      %vm1243 = vmand %vm1223, %vm1233
      %vm1244 = vmand %vm1224, %vm1234
      %vm1245 = vmand %vm1225, %vm1235
      %vm1246 = vmand %vm1226, %vm1236
      %vm1247 = vmand %vm1227, %vm1237
      %vm1248 = vmand %vm1228, %vm1238
      %vm1249 = vmand %vm1229, %vm1239
      %vm1250 = vmand %vm1230, %vm1240
      %vm1251 = vmand %vm1231, %vm1241
      %vm1252 = vmand %vm1232, %vm1242
      %v1253 = vsel %vm1243, 1, 0
      %v1254 = vsel %vm1244, 1, 0
      %v1255 = vsel %vm1245, 1, 0
      %v1256 = vsel %vm1246, 1, 0
      %v1257 = vsel %vm1247, 1, 0
      %v1258 = vsel %vm1248, 1, 0
      %v1259 = vsel %vm1249, 1, 0
      %v1260 = vsel %vm1250, 1, 0
      %v1261 = vsel %vm1251, 1, 0
      %v1262 = vsel %vm1252, 1, 0
      %vm1263 = vcmp.eq.s32.totalorder %v1253, 1
      %vm1264 = vcmp.eq.s32.totalorder %v1254, 1
      %vm1265 = vcmp.eq.s32.totalorder %v1255, 1
      %vm1266 = vcmp.eq.s32.totalorder %v1256, 1
      %vm1267 = vcmp.eq.s32.totalorder %v1257, 1
      %vm1268 = vcmp.eq.s32.totalorder %v1258, 1
      %vm1269 = vcmp.eq.s32.totalorder %v1259, 1
      %vm1270 = vcmp.eq.s32.totalorder %v1260, 1
      %vm1271 = vcmp.eq.s32.totalorder %v1261, 1
      %vm1272 = vcmp.eq.s32.totalorder %v1262, 1
      %v1273 = vsel %vm1263, %v991, 0.0
      %v1274 = vsel %vm1264, %v992, 0.0
      %v1275 = vsel %vm1265, %v993, 0.0
      %v1276 = vsel %vm1266, %v994, 0.0
      %v1277 = vsel %vm1267, %v995, 0.0
      %v1278 = vsel %vm1268, %v996, 0.0
      %v1279 = vsel %vm1269, %v997, 0.0
      %v1280 = vsel %vm1270, %v998, 0.0
      %v1281 = vsel %vm1271, %v999, 0.0
      %v1282 = vsel %vm1272, %v1000, 0.0
      %vm1283 = vcmask 261120
      %v1284 = vsel %vm1283, %v1273, 0.0
      %v1285 = vsel %vm1283, %v1274, 0.0
      %v1286 = vadd.f32 %v1284, %v1285
      %v1287 = vsel %vm1283, %v1275, 0.0
      %v1288 = vadd.f32 %v1286, %v1287
      %v1289 = vsel %vm1283, %v1276, 0.0
      %v1290 = vadd.f32 %v1288, %v1289
      %v1291 = vsel %vm1283, %v1277, 0.0
      %v1292 = vadd.f32 %v1290, %v1291
      %v1293 = vsel %vm1283, %v1278, 0.0
      %v1294 = vadd.f32 %v1292, %v1293
      %v1295 = vsel %vm1283, %v1279, 0.0
      %v1296 = vadd.f32 %v1294, %v1295
      %v1297 = vsel %vm1283, %v1280, 0.0
      %v1298 = vadd.f32 %v1296, %v1297
      %v1299 = vsel %vm1283, %v1281, 0.0
      %v1300 = vadd.f32 %v1298, %v1299
      %v1301 = vsel %vm1283, %v1282, 0.0
      %v1302 = vadd.f32 %v1300, %v1301
      %v1303 = vrot.slane %v1302, 4
      %v1304 = vadd.f32 %v1302, %v1303
      %v1305 = vrot.slane %v1304, 2
      %v1306 = vadd.f32 %v1304, %v1305
      %v1307 = vrot.slane %v1306, 1
      %v1308 = vadd.f32 %v1306, %v1307
      %vm1309 = vcmask 253952
      %1310 = vst.msk [vmem:[%s208] sm:$0x1] %vm1309, %v1308
      %v1311 = vmul.f32 %v1273, %v1273
      %v1312 = vmul.f32 %v1274, %v1274
      %v1313 = vmul.f32 %v1275, %v1275
      %v1314 = vmul.f32 %v1276, %v1276
      %v1315 = vmul.f32 %v1277, %v1277
      %v1316 = vmul.f32 %v1278, %v1278
      %v1317 = vmul.f32 %v1279, %v1279
      %v1318 = vmul.f32 %v1280, %v1280
      %v1319 = vmul.f32 %v1281, %v1281
      %v1320 = vmul.f32 %v1282, %v1282
      %v1321 = vsel %vm1283, %v1311, 0.0
      %v1322 = vsel %vm1283, %v1312, 0.0
      %v1323 = vadd.f32 %v1321, %v1322
      %v1324 = vsel %vm1283, %v1313, 0.0
      %v1325 = vadd.f32 %v1323, %v1324
      %v1326 = vsel %vm1283, %v1314, 0.0
      %v1327 = vadd.f32 %v1325, %v1326
      %v1328 = vsel %vm1283, %v1315, 0.0
      %v1329 = vadd.f32 %v1327, %v1328
      %v1330 = vsel %vm1283, %v1316, 0.0
      %v1331 = vadd.f32 %v1329, %v1330
      %v1332 = vsel %vm1283, %v1317, 0.0
      %v1333 = vadd.f32 %v1331, %v1332
      %v1334 = vsel %vm1283, %v1318, 0.0
      %v1335 = vadd.f32 %v1333, %v1334
      %v1336 = vsel %vm1283, %v1319, 0.0
      %v1337 = vadd.f32 %v1335, %v1336
      %v1338 = vsel %vm1283, %v1320, 0.0
      %v1339 = vadd.f32 %v1337, %v1338
      %v1340 = vrot.slane %v1339, 4
      %v1341 = vadd.f32 %v1339, %v1340
      %v1342 = vrot.slane %v1341, 2
      %v1343 = vadd.f32 %v1341, %v1342
      %v1344 = vrot.slane %v1343, 1
      %v1345 = vadd.f32 %v1343, %v1344
      %1346 = vst.msk [vmem:[%s208 + $0x1] sm:$0x1] %vm1309, %v1345
      %s1347 = smul.u32 10, %s20
      %p1348 = scmp.lt.s32.totalorder %s19, 1
      %s1349 = scalar_select %p1348, %s19, 1
      %p1350 = scmp.lt.s32.totalorder %s1347, 9
      %s1351 = scalar_select %p1350, %s1347, 9
      %s1352 = smul.addr %s1349, 10
      %s1353 = sadd.s32 %s1351, %s1352
      %s1354 = smul.addr %s1353, 4
      %s1355 = scalar_lea.vmem %s2, %s1354
      %s1356 = sadd.s32 %s19, %s20
      %p1357 = scmp.lt.s32.totalorder %s1356, 1
      %s1358 = scalar_select %p1357, %s1356, 1
      %s1359 = smul.addr %s1358, 2
      %s1360 = scalar_lea.vmem %s3, %s1359
      // Predicated region
      $region29: #{dnet_forward.4} parent=27 // pred_check
        %p1361 = pneg %p94
      $region30: #{dnet_forward.4} parent=27 // pred_check_branch
        %1363 = sbr.rel (%p1361) target = $region32
      $region31: #{dnet_forward.4} parent=27 // pred_region
        %s1364 = smul.u32 10, %s20
      $region32: #{dnet_forward.4} parent=27 // pred_fallthru
        _
      // Predicated region
      $region33: #{dnet_forward.4} parent=27 // pred_check
        %p1365 = pneg %p122
      $region34: #{dnet_forward.4} parent=27 // pred_check_branch
        %1367 = sbr.rel (%p1365) target = $region36
      $region35: #{dnet_forward.4} parent=27 // pred_region
        %s1368 = sadd.s32 %s19, %s20
      $region36: #{dnet_forward.4} parent=27 // pred_fallthru
        _
    $region28: #{dnet_forward.4} parent=5 // pred_fallthru
      _
    %p1369 = scmp.le.s32.totalorder 2, %s10
    // Predicated region
    $region37: #{dnet_forward.4} parent=5 // pred_check
      %p1370 = pneg %p1369
    $region38: #{dnet_forward.4} parent=5 // pred_check_branch
      %1372 = sbr.rel (%p1370) target = $region40
    $region39: #{dnet_forward.4} parent=5 // pred_region
      %s1373 = ssub.s32 %s10, 2
      // Predicated region
      $region41: #{dnet_forward.4} parent=39 // pred_check
        %p1374 = pneg %p100
      $region42: #{dnet_forward.4} parent=39 // pred_check_branch
        %1376 = sbr.rel (%p1374) target = $region44
      $region43: #{dnet_forward.4} parent=39 // pred_region
        %s1377 = smul.u32 10, %s22
        %p1378 = scmp.lt.s32.totalorder %s21, 1
        %s1379 = scalar_select %p1378, %s21, 1
        %p1380 = scmp.lt.s32.totalorder %s1377, 9
        %s1381 = scalar_select %p1380, %s1377, 9
        %s1382 = smul.addr %s1379, 10
        %s1383 = sadd.s32 %s1381, %s1382
        %s1384 = smul.addr %s1383, 4
        %s1385 = scalar_lea.vmem %s2, %s1384
      $region44: #{dnet_forward.4} parent=39 // pred_fallthru
        _
      // Predicated region
      $region45: #{dnet_forward.4} parent=39 // pred_check
        %p1386 = pneg %p128
      $region46: #{dnet_forward.4} parent=39 // pred_check_branch
        %1388 = sbr.rel (%p1386) target = $region48
      $region47: #{dnet_forward.4} parent=39 // pred_region
        %s1389 = sadd.s32 %s21, %s22
        %p1390 = scmp.lt.s32.totalorder %s1389, 1
        %s1391 = scalar_select %p1390, %s1389, 1
        %s1392 = smul.addr %s1391, 2
        %s1393 = scalar_lea.vmem %s3, %s1392
      $region48: #{dnet_forward.4} parent=39 // pred_fallthru
        _
    $region40: #{dnet_forward.4} parent=5 // pred_fallthru
      _
  $region6: #{dnet_forward.4} parent=0 // loop_footer
    %s14 = sadd.s32 1, %s10
  $region7: #{dnet_forward.4} parent=0 // loop_footer_branch
    %9 = sbr.rel target = $region3
  $region8: #{dnet_forward.4} parent=0 // loop_exit
    _

// kernel: dnet_forward.5
$region0: #{dnet_forward.5}
  #allocation0 [shape = 'u32[]', space=smem, size = 0x4, offset = 0x4, fixed_abs, tag = 'smem constant byte address 0x4 - core index']
  #allocation1 [shape = 'u32[144,128]{1,0:T(1,128)}', space=vmem, size = 0x12000, scoped, tag = 'internal scratch']
  #allocation2 [shape = 'f32[136,32]{1,0:T(8,128)}', space=vmem, size = 0x11000, scoped, tag = 'scratch operand']
  %s0 = inlined_call_operand.vmem [shape: bf16[2,136,32], index: 0, kind: input, shape index: {}]
  %s1 = inlined_call_operand.vmem [shape: bf16[288,64], index: 1, kind: input, shape index: {}]
  %s2 = inlined_call_operand.vmem [shape: f32[1,32], index: 2, kind: input, shape index: {}]
  %s3 = inlined_call_operand.vmem [shape: f32[1,32], index: 3, kind: input, shape index: {}]
  %s4 = inlined_call_operand.vmem [shape: f32[136,1], index: 4, kind: input, shape index: {}]
  %s5 = inlined_call_operand.vmem [shape: bf16[2,32,64], index: 5, kind: output, shape index: {0}]
  %s6 = inlined_call_operand.vmem [shape: f32[2,2,64], index: 6, kind: output, shape index: {1}]
  %7 = xla_tuple %s5, %s6
  %s8 = sld [smem:[#allocation0]]
  $region65: #{dnet_forward.5} parent=0
    _
  %s10 = ssub.s32 1, %s8
  %s11 = scalar_select 0, %s10, %s8
  loop: start=0, step=1, limit=4
  $region2: #{dnet_forward.5} parent=0 // loop_pre_header
    _
  $region3: #{dnet_forward.5} parent=0 // loop_header
    %s13 = sphi 0, %s17
    %p14 = scmp.ge.s32.totalorder %s13, 4
    %s20 = sphi 0, %s32
    %s21 = sphi 0, %s28
    %s22 = sphi 0, %s20
    %s23 = sphi 0, %s21
    %s24 = sphi 0, %s22
    %s25 = sphi 0, %s23
    %s35 = sphi 0, %s37
    %s38 = sphi 0, %s35
    %s39 = sphi 0, %s38
    %s55 = sphi 0, %s39
    %s59 = sphi 0, %s59
    %s61 = sphi 0, %s59
    %s62 = sphi 0, %s61
    %s76 = sphi 0, %s62
    %s80 = sphi 0, %s80
    %s82 = sphi 0, %s80
    %s83 = sphi 0, %s82
    %s97 = sphi 0, %s83
    %s101 = sphi 0, %s101
    %s103 = sphi 0, %s101
    %s104 = sphi 0, %s103
    %s118 = sphi 0, %s104
    %s122 = sphi 0, %s122
    %s124 = sphi 0, %s122
    %s125 = sphi 0, %s124
    %s139 = sphi 0, %s125
    %s147 = sphi 0, %s149
    %s150 = sphi 0, %s147
    %s151 = sphi 0, %s150
    %s167 = sphi 0, %s151
    %s175 = sphi 0, %s177
    %s178 = sphi 0, %s175
    %s179 = sphi 0, %s178
    %s195 = sphi 0, %s179
  $region4: #{dnet_forward.5} parent=0 // loop_header_branch
    %16 = sbr.rel (%p14) target = $region8
  $region5: #{dnet_forward.5} parent=0 // loop_body
    %s18 = ssub.s32 %s13, 1
    %s19 = ssub.s32 %s13, 2
    %s26 = sadd.s32 1, %s21
    %p27 = scmp.ge.s32.totalorder %s26, 1
    %s28 = scalar_select %p27, 0, %s26
    %s29 = sadd.s32 1, %s20
    %s30 = scalar_select %p27, %s29, %s20
    %p31 = scmp.ge.s32.totalorder %s30, 2
    %s32 = scalar_select %p31, 0, %s30
    %s33 = ssub.s32 %s20, %s32
    %p34 = scmp.eq.s32.totalorder %s33, 0
    %s36 = sadd.s32 %s35, 1
    %s37 = scalar_select %p34, %s35, %s36
    %p40 = pneg %p34
    %p41 = scmp.eq.s32.totalorder %s13, 1
    %p42 = por %p40, %p41
    %p43 = scmp.ne.s32.totalorder %s35, %s38
    %p44 = scmp.eq.s32.totalorder %s13, 0
    %p45 = por %p43, %p44
    %p46 = scmp.ne.s32.totalorder %s35, %s38
    %p47 = scmp.eq.s32.totalorder %s18, 1
    %p48 = por %p46, %p47
    %p49 = scmp.ne.s32.totalorder %s38, %s39
    %p50 = scmp.eq.s32.totalorder %s18, 0
    %p51 = por %p49, %p50
    %p52 = scmp.ne.s32.totalorder %s38, %s39
    %p53 = scmp.eq.s32.totalorder %s19, 1
    %p54 = por %p52, %p53
    %p56 = scmp.ne.s32.totalorder %s39, %s55
    %p57 = scmp.eq.s32.totalorder %s19, 0
    %p58 = por %p56, %p57
    %s60 = sadd.s32 %s59, 1
    %p63 = scmp.eq.s32.totalorder %s13, 1
    %p64 = scmp.ne.s32.totalorder %s59, %s61
    %p65 = scmp.eq.s32.totalorder %s13, 0
    %p66 = por %p64, %p65
    %p67 = scmp.ne.s32.totalorder %s59, %s61
    %p68 = scmp.eq.s32.totalorder %s18, 1
    %p69 = por %p67, %p68
    %p70 = scmp.ne.s32.totalorder %s61, %s62
    %p71 = scmp.eq.s32.totalorder %s18, 0
    %p72 = por %p70, %p71
    %p73 = scmp.ne.s32.totalorder %s61, %s62
    %p74 = scmp.eq.s32.totalorder %s19, 1
    %p75 = por %p73, %p74
    %p77 = scmp.ne.s32.totalorder %s62, %s76
    %p78 = scmp.eq.s32.totalorder %s19, 0
    %p79 = por %p77, %p78
    %s81 = sadd.s32 %s80, 1
    %p84 = scmp.eq.s32.totalorder %s13, 1
    %p85 = scmp.ne.s32.totalorder %s80, %s82
    %p86 = scmp.eq.s32.totalorder %s13, 0
    %p87 = por %p85, %p86
    %p88 = scmp.ne.s32.totalorder %s80, %s82
    %p89 = scmp.eq.s32.totalorder %s18, 1
    %p90 = por %p88, %p89
    %p91 = scmp.ne.s32.totalorder %s82, %s83
    %p92 = scmp.eq.s32.totalorder %s18, 0
    %p93 = por %p91, %p92
    %p94 = scmp.ne.s32.totalorder %s82, %s83
    %p95 = scmp.eq.s32.totalorder %s19, 1
    %p96 = por %p94, %p95
    %p98 = scmp.ne.s32.totalorder %s83, %s97
    %p99 = scmp.eq.s32.totalorder %s19, 0
    %p100 = por %p98, %p99
    %s102 = sadd.s32 %s101, 1
    %p105 = scmp.eq.s32.totalorder %s13, 1
    %p106 = scmp.ne.s32.totalorder %s101, %s103
    %p107 = scmp.eq.s32.totalorder %s13, 0
    %p108 = por %p106, %p107
    %p109 = scmp.ne.s32.totalorder %s101, %s103
    %p110 = scmp.eq.s32.totalorder %s18, 1
    %p111 = por %p109, %p110
    %p112 = scmp.ne.s32.totalorder %s103, %s104
    %p113 = scmp.eq.s32.totalorder %s18, 0
    %p114 = por %p112, %p113
    %p115 = scmp.ne.s32.totalorder %s103, %s104
    %p116 = scmp.eq.s32.totalorder %s19, 1
    %p117 = por %p115, %p116
    %p119 = scmp.ne.s32.totalorder %s104, %s118
    %p120 = scmp.eq.s32.totalorder %s19, 0
    %p121 = por %p119, %p120
    %s123 = sadd.s32 %s122, 1
    %p126 = scmp.eq.s32.totalorder %s13, 1
    %p127 = scmp.ne.s32.totalorder %s122, %s124
    %p128 = scmp.eq.s32.totalorder %s13, 0
    %p129 = por %p127, %p128
    %p130 = scmp.ne.s32.totalorder %s122, %s124
    %p131 = scmp.eq.s32.totalorder %s18, 1
    %p132 = por %p130, %p131
    %p133 = scmp.ne.s32.totalorder %s124, %s125
    %p134 = scmp.eq.s32.totalorder %s18, 0
    %p135 = por %p133, %p134
    %p136 = scmp.ne.s32.totalorder %s124, %s125
    %p137 = scmp.eq.s32.totalorder %s19, 1
    %p138 = por %p136, %p137
    %p140 = scmp.ne.s32.totalorder %s125, %s139
    %p141 = scmp.eq.s32.totalorder %s19, 0
    %p142 = por %p140, %p141
    %s143 = ssub.s32 %s20, %s32
    %s144 = ssub.s32 %s21, %s28
    %s145 = sor.u32 %s143, %s144
    %p146 = scmp.eq.s32.totalorder %s145, 0
    %s148 = sadd.s32 %s147, 1
    %s149 = scalar_select %p146, %s147, %s148
    %p152 = pneg %p146
    %p153 = scmp.eq.s32.totalorder %s13, 1
    %p154 = por %p152, %p153
    %p155 = scmp.ne.s32.totalorder %s147, %s150
    %p156 = scmp.eq.s32.totalorder %s13, 0
    %p157 = por %p155, %p156
    %p158 = scmp.ne.s32.totalorder %s147, %s150
    %p159 = scmp.eq.s32.totalorder %s18, 1
    %p160 = por %p158, %p159
    %p161 = scmp.ne.s32.totalorder %s150, %s151
    %p162 = scmp.eq.s32.totalorder %s18, 0
    %p163 = por %p161, %p162
    %p164 = scmp.ne.s32.totalorder %s150, %s151
    %p165 = scmp.eq.s32.totalorder %s19, 1
    %p166 = por %p164, %p165
    %p168 = scmp.ne.s32.totalorder %s151, %s167
    %p169 = scmp.eq.s32.totalorder %s19, 0
    %p170 = por %p168, %p169
    %s171 = sadd.s32 %s20, %s21
    %s172 = sadd.s32 %s32, %s28
    %s173 = ssub.s32 %s171, %s172
    %p174 = scmp.eq.s32.totalorder %s173, 0
    %s176 = sadd.s32 %s175, 1
    %s177 = scalar_select %p174, %s175, %s176
    %p180 = pneg %p174
    %p181 = scmp.eq.s32.totalorder %s13, 1
    %p182 = por %p180, %p181
    %p183 = scmp.ne.s32.totalorder %s175, %s178
    %p184 = scmp.eq.s32.totalorder %s13, 0
    %p185 = por %p183, %p184
    %p186 = scmp.ne.s32.totalorder %s175, %s178
    %p187 = scmp.eq.s32.totalorder %s18, 1
    %p188 = por %p186, %p187
    %p189 = scmp.ne.s32.totalorder %s178, %s179
    %p190 = scmp.eq.s32.totalorder %s18, 0
    %p191 = por %p189, %p190
    %p192 = scmp.ne.s32.totalorder %s178, %s179
    %p193 = scmp.eq.s32.totalorder %s19, 1
    %p194 = por %p192, %p193
    %p196 = scmp.ne.s32.totalorder %s179, %s195
    %p197 = scmp.eq.s32.totalorder %s19, 0
    %p198 = por %p196, %p197
    %p199 = scmp.le.s32.totalorder 1, %s13
    %p200 = scmp.lt.s32.totalorder %s13, 3
    %p201 = pnand %p199, %p200
    %p202 = pneg %p201
    // Predicated region
    $region9: #{dnet_forward.5} parent=5 // pred_check
      _
    $region10: #{dnet_forward.5} parent=5 // pred_check_branch
      %204 = sbr.rel (%p201) target = $region12
    $region11: #{dnet_forward.5} parent=5 // pred_region
      %s205 = ssub.s32 %s13, 1
      // Predicated region
      $region13: #{dnet_forward.5} parent=11 // pred_check
        %p206 = pneg %p72
      $region14: #{dnet_forward.5} parent=11 // pred_check_branch
        %208 = sbr.rel (%p206) target = $region16
      $region15: #{dnet_forward.5} parent=11 // pred_region
        _
      $region16: #{dnet_forward.5} parent=11 // pred_fallthru
        _
      // Predicated region
      $region17: #{dnet_forward.5} parent=11 // pred_check
        %p209 = pneg %p93
      $region18: #{dnet_forward.5} parent=11 // pred_check_branch
        %211 = sbr.rel (%p209) target = $region20
      $region19: #{dnet_forward.5} parent=11 // pred_region
        _
      $region20: #{dnet_forward.5} parent=11 // pred_fallthru
        _
      // Predicated region
      $region21: #{dnet_forward.5} parent=11 // pred_check
        %p212 = pneg %p114
      $region22: #{dnet_forward.5} parent=11 // pred_check_branch
        %214 = sbr.rel (%p212) target = $region24
      $region23: #{dnet_forward.5} parent=11 // pred_region
        _
      $region24: #{dnet_forward.5} parent=11 // pred_fallthru
        _
      // Predicated region
      $region25: #{dnet_forward.5} parent=11 // pred_check
        %p215 = pneg %p135
      $region26: #{dnet_forward.5} parent=11 // pred_check_branch
        %217 = sbr.rel (%p215) target = $region28
      $region27: #{dnet_forward.5} parent=11 // pred_region
        _
      $region28: #{dnet_forward.5} parent=11 // pred_fallthru
        _
    $region12: #{dnet_forward.5} parent=5 // pred_fallthru
      _
    %p218 = scmp.lt.s32.totalorder %s13, 2
    // Predicated region
    $region29: #{dnet_forward.5} parent=5 // pred_check
      %p219 = pneg %p218
    $region30: #{dnet_forward.5} parent=5 // pred_check_branch
      %221 = sbr.rel (%p219) target = $region32
    $region31: #{dnet_forward.5} parent=5 // pred_region
      // Predicated region
      $region33: #{dnet_forward.5} parent=31 // pred_check
        %p222 = pneg %p45
      $region34: #{dnet_forward.5} parent=31 // pred_check_branch
        %224 = sbr.rel (%p222) target = $region36
      $region35: #{dnet_forward.5} parent=31 // pred_region
        %p225 = scmp.lt.s32.totalorder %s20, 1
        %s226 = scalar_select %p225, %s20, 1
        %s227 = smul.addr %s226, 17
        %s228 = smul.addr %s227, 4
        %s229 = scalar_lea.vmem %s0, %s228
      $region36: #{dnet_forward.5} parent=31 // pred_fallthru
        _
    $region32: #{dnet_forward.5} parent=5 // pred_fallthru
      _
    %p230 = scmp.le.s32.totalorder 1, %s13
    %p231 = scmp.lt.s32.totalorder %s13, 3
    %p232 = pnand %p230, %p231
    %p233 = pneg %p232
    // Predicated region
    $region37: #{dnet_forward.5} parent=5 // pred_check
      _
    $region38: #{dnet_forward.5} parent=5 // pred_check_branch
      %235 = sbr.rel (%p232) target = $region40
    $region39: #{dnet_forward.5} parent=5 // pred_region
      %s236 = ssub.s32 %s13, 1
      %p237 = scmp.lt.s32.totalorder %s22, 1
      %s238 = scalar_select %p237, %s22, 1
      %s239 = smul.addr %s238, 17
      %s240 = smul.addr %s239, 4
      %s241 = scalar_lea.vmem %s0, %s240
      %p242 = pneg %p51
      %p243 = pneg %p48
      %p244 = pneg %p72
      %p245 = pneg %p69
      %p246 = pneg %p93
      %p247 = pneg %p90
      %p248 = pneg %p114
      %p249 = pneg %p111
      %p250 = pneg %p135
      %p251 = pneg %p132
      %p252 = pneg %p163
      %p253 = pneg %p160
      %s254 = smul.u32 4, %s23
      %p255 = scmp.lt.s32.totalorder %s22, 1
      %s256 = scalar_select %p255, %s22, 1
      %p257 = scmp.lt.s32.totalorder %s254, 3
      %s258 = scalar_select %p257, %s254, 3
      %s259 = smul.addr %s256, 4
      %s260 = sadd.s32 %s258, %s259
      %s261 = smul.addr %s260, 4
      %s262 = scalar_lea.vmem %s5, %s261
      %p263 = pneg %p191
      %p264 = pneg %p188
      %s265 = sadd.s32 %s22, %s23
      %p266 = scmp.lt.s32.totalorder %s265, 1
      %s267 = scalar_select %p266, %s265, 1
      %s268 = smul.addr %s267, 2
      %s269 = scalar_lea.vmem %s6, %s268
      %p270 = scmp.lt.s32.totalorder %s22, 1
      %s271 = scalar_select %p270, %s22, 1
      %s272 = smul.addr %s271, 17
      %s273 = smul.addr %s272, 4
      %s274 = scalar_lea.vmem %s0, %s273
      %s275 = smul.u32 4, %s23
      %p276 = scmp.lt.s32.totalorder %s22, 1
      %s277 = scalar_select %p276, %s22, 1
      %p278 = scmp.lt.s32.totalorder %s275, 3
      %s279 = scalar_select %p278, %s275, 3
      %s280 = smul.addr %s277, 4
      %s281 = sadd.s32 %s279, %s280
      %s282 = smul.addr %s281, 4
      %s283 = scalar_lea.vmem %s5, %s282
      %s284 = smul.u32 4, %s23
      %s285 = sadd.s32 %s22, %s23
      %p286 = scmp.lt.s32.totalorder %s285, 1
      %s287 = scalar_select %p286, %s285, 1
      %s288 = smul.addr %s287, 2
      %s289 = scalar_lea.vmem %s6, %s288
      %s290 = sadd.s32 %s22, %s23
      %p292 = scmp.eq.s32.totalorder %s23, 0
      // Predicated region
      $region41: #{dnet_forward.5} parent=39 // pred_check
        %p293 = pneg %p292
      $region42: #{dnet_forward.5} parent=39 // pred_check_branch
        %295 = sbr.rel (%p293) target = $region44
      $region43: #{dnet_forward.5} parent=39 // pred_region
        %v296 = vld [vmem:[%s274] sm:$0xf]
        %v297 = vld [vmem:[%s274 + $0x4] sm:$0xf]
        %v298 = vld [vmem:[%s274 + $0x8] sm:$0xf]
        %v299 = vld [vmem:[%s274 + $0xc] sm:$0xf]
        %v300 = vld [vmem:[%s274 + $0x10] sm:$0xf]
        %v301 = vld [vmem:[%s274 + $0x14] sm:$0xf]
        %v302 = vld [vmem:[%s274 + $0x18] sm:$0xf]
        %v303 = vld [vmem:[%s274 + $0x1c] sm:$0xf]
        %v304 = vld [vmem:[%s274 + $0x20] sm:$0xf]
        %v305 = vld [vmem:[%s274 + $0x24] sm:$0xf]
        %v306 = vld [vmem:[%s274 + $0x28] sm:$0xf]
        %v307 = vld [vmem:[%s274 + $0x2c] sm:$0xf]
        %v308 = vld [vmem:[%s274 + $0x30] sm:$0xf]
        %v309 = vld [vmem:[%s274 + $0x34] sm:$0xf]
        %v310 = vld [vmem:[%s274 + $0x38] sm:$0xf]
        %v311 = vld [vmem:[%s274 + $0x3c] sm:$0xf]
        %v312 = vld [vmem:[%s274 + $0x40] sm:$0xf]
        %v313 = vunpack.c.l.bf16 %v296
        %v314 = vunpack.c.l.bf16 %v297
        %v315 = vunpack.c.l.bf16 %v298
        %v316 = vunpack.c.l.bf16 %v299
        %v317 = vunpack.c.l.bf16 %v300
        %v318 = vunpack.c.l.bf16 %v301
        %v319 = vunpack.c.l.bf16 %v302
        %v320 = vunpack.c.l.bf16 %v303
        %v321 = vunpack.c.l.bf16 %v304
        %v322 = vunpack.c.l.bf16 %v305
        %v323 = vunpack.c.l.bf16 %v306
        %v324 = vunpack.c.l.bf16 %v307
        %v325 = vunpack.c.l.bf16 %v308
        %v326 = vunpack.c.l.bf16 %v309
        %v327 = vunpack.c.l.bf16 %v310
        %v328 = vunpack.c.l.bf16 %v311
        %v329 = vunpack.c.l.bf16 %v312
        %v330 = vld [vmem:[%s2] sm:$0x1]
        %v332 = vlaneseq
        %v333 = vshrl.u32 %v332, 7
        %v334 = vsub.s32 0, %v333
        %v335 = vrot.slane %v330, %v334
        %v337 = vmul.f32 %v313, %v335
        %v338 = vmul.f32 %v314, %v335
        %v339 = vmul.f32 %v315, %v335
        %v340 = vmul.f32 %v316, %v335
        %v341 = vmul.f32 %v317, %v335
        %v342 = vmul.f32 %v318, %v335
        %v343 = vmul.f32 %v319, %v335
        %v344 = vmul.f32 %v320, %v335
        %v345 = vmul.f32 %v321, %v335
        %v346 = vmul.f32 %v322, %v335
        %v347 = vmul.f32 %v323, %v335
        %v348 = vmul.f32 %v324, %v335
        %v349 = vmul.f32 %v325, %v335
        %v350 = vmul.f32 %v326, %v335
        %v351 = vmul.f32 %v327, %v335
        %v352 = vmul.f32 %v328, %v335
        %v353 = vmul.f32 %v329, %v335
        %v354 = vld [vmem:[%s3] sm:$0x1]
        %v356 = vlaneseq
        %v357 = vshrl.u32 %v356, 7
        %v358 = vsub.s32 0, %v357
        %v359 = vrot.slane %v354, %v358
        %v361 = vadd.f32 %v337, %v359
        %v362 = vadd.f32 %v338, %v359
        %v363 = vadd.f32 %v339, %v359
        %v364 = vadd.f32 %v340, %v359
        %v365 = vadd.f32 %v341, %v359
        %v366 = vadd.f32 %v342, %v359
        %v367 = vadd.f32 %v343, %v359
        %v368 = vadd.f32 %v344, %v359
        %v369 = vadd.f32 %v345, %v359
        %v370 = vadd.f32 %v346, %v359
        %v371 = vadd.f32 %v347, %v359
        %v372 = vadd.f32 %v348, %v359
        %v373 = vadd.f32 %v349, %v359
        %v374 = vadd.f32 %v350, %v359
        %v375 = vadd.f32 %v351, %v359
        %v376 = vadd.f32 %v352, %v359
        %v377 = vadd.f32 %v353, %v359
        %vm378 = vcmp.gt.f32.partialorder %v361, 0.0
        %vm379 = vcmp.gt.f32.partialorder %v362, 0.0
        %vm380 = vcmp.gt.f32.partialorder %v363, 0.0
        %vm381 = vcmp.gt.f32.partialorder %v364, 0.0
        %vm382 = vcmp.gt.f32.partialorder %v365, 0.0
        %vm383 = vcmp.gt.f32.partialorder %v366, 0.0
        %vm384 = vcmp.gt.f32.partialorder %v367, 0.0
        %vm385 = vcmp.gt.f32.partialorder %v368, 0.0
        %vm386 = vcmp.gt.f32.partialorder %v369, 0.0
        %vm387 = vcmp.gt.f32.partialorder %v370, 0.0
        %vm388 = vcmp.gt.f32.partialorder %v371, 0.0
        %vm389 = vcmp.gt.f32.partialorder %v372, 0.0
        %vm390 = vcmp.gt.f32.partialorder %v373, 0.0
        %vm391 = vcmp.gt.f32.partialorder %v374, 0.0
        %vm392 = vcmp.gt.f32.partialorder %v375, 0.0
        %vm393 = vcmp.gt.f32.partialorder %v376, 0.0
        %vm394 = vcmp.gt.f32.partialorder %v377, 0.0
        %v395 = vmul.f32 %v361, 0.01
        %v396 = vmul.f32 %v362, 0.01
        %v397 = vmul.f32 %v363, 0.01
        %v398 = vmul.f32 %v364, 0.01
        %v399 = vmul.f32 %v365, 0.01
        %v400 = vmul.f32 %v366, 0.01
        %v401 = vmul.f32 %v367, 0.01
        %v402 = vmul.f32 %v368, 0.01
        %v403 = vmul.f32 %v369, 0.01
        %v404 = vmul.f32 %v370, 0.01
        %v405 = vmul.f32 %v371, 0.01
        %v406 = vmul.f32 %v372, 0.01
        %v407 = vmul.f32 %v373, 0.01
        %v408 = vmul.f32 %v374, 0.01
        %v409 = vmul.f32 %v375, 0.01
        %v410 = vmul.f32 %v376, 0.01
        %v411 = vmul.f32 %v377, 0.01
        %v412 = vsel %vm378, %v361, %v395
        %v413 = vsel %vm379, %v362, %v396
        %v414 = vsel %vm380, %v363, %v397
        %v415 = vsel %vm381, %v364, %v398
        %v416 = vsel %vm382, %v365, %v399
        %v417 = vsel %vm383, %v366, %v400
        %v418 = vsel %vm384, %v367, %v401
        %v419 = vsel %vm385, %v368, %v402
        %v420 = vsel %vm386, %v369, %v403
        %v421 = vsel %vm387, %v370, %v404
        %v422 = vsel %vm388, %v371, %v405
        %v423 = vsel %vm389, %v372, %v406
        %v424 = vsel %vm390, %v373, %v407
        %v425 = vsel %vm391, %v374, %v408
        %v426 = vsel %vm392, %v375, %v409
        %v427 = vsel %vm393, %v376, %v410
        %v428 = vsel %vm394, %v377, %v411
        %v429 = vld [vmem:[%s4] sm:$0xff]
        %v430 = vld [vmem:[%s4 + $0x8] sm:$0xff]
        %v431 = vld [vmem:[%s4 + $0x10] sm:$0xff]
        %v432 = vld [vmem:[%s4 + $0x18] sm:$0xff]
        %v433 = vld [vmem:[%s4 + $0x20] sm:$0xff]
        %v434 = vld [vmem:[%s4 + $0x28] sm:$0xff]
        %v435 = vld [vmem:[%s4 + $0x30] sm:$0xff]
        %v436 = vld [vmem:[%s4 + $0x38] sm:$0xff]
        %v437 = vld [vmem:[%s4 + $0x40] sm:$0xff]
        %v438 = vld [vmem:[%s4 + $0x48] sm:$0xff]
        %v439 = vld [vmem:[%s4 + $0x50] sm:$0xff]
        %v440 = vld [vmem:[%s4 + $0x58] sm:$0xff]
        %v441 = vld [vmem:[%s4 + $0x60] sm:$0xff]
        %v442 = vld [vmem:[%s4 + $0x68] sm:$0xff]
        %v443 = vld [vmem:[%s4 + $0x70] sm:$0xff]
        %v444 = vld [vmem:[%s4 + $0x78] sm:$0xff]
        %v445 = vld [vmem:[%s4 + $0x80] sm:$0xff]
        %447 = vset.pattern.permute.xlu0 0
        %448 = vperm.xlu0 %447, %v429
        %v449 = vpop.permute.xlu0 %448
        %452 = vset.pattern.permute.xlu0 0
        %453 = vperm.xlu0 %452, %v430
        %v454 = vpop.permute.xlu0 %453
        %457 = vset.pattern.permute.xlu0 0
        %458 = vperm.xlu0 %457, %v431
        %v459 = vpop.permute.xlu0 %458
        %462 = vset.pattern.permute.xlu0 0
        %463 = vperm.xlu0 %462, %v432
        %v464 = vpop.permute.xlu0 %463
        %467 = vset.pattern.permute.xlu0 0
        %468 = vperm.xlu0 %467, %v433
        %v469 = vpop.permute.xlu0 %468
        %472 = vset.pattern.permute.xlu0 0
        %473 = vperm.xlu0 %472, %v434
        %v474 = vpop.permute.xlu0 %473
        %477 = vset.pattern.permute.xlu0 0
        %478 = vperm.xlu0 %477, %v435
        %v479 = vpop.permute.xlu0 %478
        %482 = vset.pattern.permute.xlu0 0
        %483 = vperm.xlu0 %482, %v436
        %v484 = vpop.permute.xlu0 %483
        %487 = vset.pattern.permute.xlu0 0
        %488 = vperm.xlu0 %487, %v437
        %v489 = vpop.permute.xlu0 %488
        %492 = vset.pattern.permute.xlu0 0
        %493 = vperm.xlu0 %492, %v438
        %v494 = vpop.permute.xlu0 %493
        %497 = vset.pattern.permute.xlu0 0
        %498 = vperm.xlu0 %497, %v439
        %v499 = vpop.permute.xlu0 %498
        %502 = vset.pattern.permute.xlu0 0
        %503 = vperm.xlu0 %502, %v440
        %v504 = vpop.permute.xlu0 %503
        %507 = vset.pattern.permute.xlu0 0
        %508 = vperm.xlu0 %507, %v441
        %v509 = vpop.permute.xlu0 %508
        %512 = vset.pattern.permute.xlu0 0
        %513 = vperm.xlu0 %512, %v442
        %v514 = vpop.permute.xlu0 %513
        %517 = vset.pattern.permute.xlu0 0
        %518 = vperm.xlu0 %517, %v443
        %v519 = vpop.permute.xlu0 %518
        %522 = vset.pattern.permute.xlu0 0
        %523 = vperm.xlu0 %522, %v444
        %v524 = vpop.permute.xlu0 %523
        %527 = vset.pattern.permute.xlu0 0
        %528 = vperm.xlu0 %527, %v445
        %v529 = vpop.permute.xlu0 %528
        %v531 = vmul.f32 %v412, %v449
        %v532 = vmul.f32 %v413, %v454
        %v533 = vmul.f32 %v414, %v459
        %v534 = vmul.f32 %v415, %v464
        %v535 = vmul.f32 %v416, %v469
        %v536 = vmul.f32 %v417, %v474
        %v537 = vmul.f32 %v418, %v479
        %v538 = vmul.f32 %v419, %v484
        %v539 = vmul.f32 %v420, %v489
        %v540 = vmul.f32 %v421, %v494
        %v541 = vmul.f32 %v422, %v499
        %v542 = vmul.f32 %v423, %v504
        %v543 = vmul.f32 %v424, %v509
        %v544 = vmul.f32 %v425, %v514
        %v545 = vmul.f32 %v426, %v519
        %v546 = vmul.f32 %v427, %v524
        %v547 = vmul.f32 %v428, %v529
        %vm548 = vcmask 261120
        %549 = vst.msk [vmem:[#allocation2] sm:$0xff] %vm548, %v531
        %550 = vst.msk [vmem:[#allocation2 + $0x8] sm:$0xff] %vm548, %v532
        %551 = vst.msk [vmem:[#allocation2 + $0x10] sm:$0xff] %vm548, %v533
        %552 = vst.msk [vmem:[#allocation2 + $0x18] sm:$0xff] %vm548, %v534
        %553 = vst.msk [vmem:[#allocation2 + $0x20] sm:$0xff] %vm548, %v535
        %554 = vst.msk [vmem:[#allocation2 + $0x28] sm:$0xff] %vm548, %v536
        %555 = vst.msk [vmem:[#allocation2 + $0x30] sm:$0xff] %vm548, %v537
        %556 = vst.msk [vmem:[#allocation2 + $0x38] sm:$0xff] %vm548, %v538
        %557 = vst.msk [vmem:[#allocation2 + $0x40] sm:$0xff] %vm548, %v539
        %558 = vst.msk [vmem:[#allocation2 + $0x48] sm:$0xff] %vm548, %v540
        %559 = vst.msk [vmem:[#allocation2 + $0x50] sm:$0xff] %vm548, %v541
        %560 = vst.msk [vmem:[#allocation2 + $0x58] sm:$0xff] %vm548, %v542
        %561 = vst.msk [vmem:[#allocation2 + $0x60] sm:$0xff] %vm548, %v543
        %562 = vst.msk [vmem:[#allocation2 + $0x68] sm:$0xff] %vm548, %v544
        %563 = vst.msk [vmem:[#allocation2 + $0x70] sm:$0xff] %vm548, %v545
        %564 = vst.msk [vmem:[#allocation2 + $0x78] sm:$0xff] %vm548, %v546
        %565 = vst.msk [vmem:[#allocation2 + $0x80] sm:$0xff] %vm548, %v547
      $region44: #{dnet_forward.5} parent=39 // pred_fallthru
        _
      %v566 = vld [vmem:[#allocation2] sm:$0xff]
      %v567 = vld [vmem:[#allocation2 + $0x8] sm:$0xff]
      %v568 = vld [vmem:[#allocation2 + $0x10] sm:$0xff]
      %v569 = vld [vmem:[#allocation2 + $0x18] sm:$0xff]
      %v570 = vld [vmem:[#allocation2 + $0x20] sm:$0xff]
      %v571 = vld [vmem:[#allocation2 + $0x28] sm:$0xff]
      %v572 = vld [vmem:[#allocation2 + $0x30] sm:$0xff]
      %v573 = vld [vmem:[#allocation2 + $0x38] sm:$0xff]
      %v574 = vld [vmem:[#allocation2 + $0x1] sm:$0xff]
      %v575 = vld [vmem:[#allocation2 + $0x9] sm:$0xff]
      %v576 = vld [vmem:[#allocation2 + $0x11] sm:$0xff]
      %v577 = vld [vmem:[#allocation2 + $0x19] sm:$0xff]
      %v578 = vld [vmem:[#allocation2 + $0x40] sm:$0xff]
      %v579 = vld [vmem:[#allocation2 + $0x48] sm:$0xff]
      %v580 = vld [vmem:[#allocation2 + $0x50] sm:$0xff]
      %v581 = vld [vmem:[#allocation2 + $0x58] sm:$0xff]
      %v582 = vld [vmem:[#allocation2 + $0x60] sm:$0xff]
      %v583 = vld [vmem:[#allocation2 + $0x68] sm:$0xff]
      %v584 = vld [vmem:[#allocation2 + $0x70] sm:$0xff]
      %v585 = vld [vmem:[#allocation2 + $0x78] sm:$0xff]
      %v586 = vld [vmem:[#allocation2 + $0x41] sm:$0xff]
      %v587 = vld [vmem:[#allocation2 + $0x49] sm:$0xff]
      %v588 = vld [vmem:[#allocation2 + $0x51] sm:$0xff]
      %v589 = vld [vmem:[#allocation2 + $0x59] sm:$0xff]
      %v590 = vld [vmem:[#allocation2 + $0x5] sm:$0xff]
      %v591 = vld [vmem:[#allocation2 + $0xd] sm:$0xff]
      %v592 = vld [vmem:[#allocation2 + $0x15] sm:$0xff]
      %v593 = vld [vmem:[#allocation2 + $0x1d] sm:$0xff]
      %v594 = vld [vmem:[#allocation2 + $0x25] sm:$0xff]
      %v595 = vld [vmem:[#allocation2 + $0x2d] sm:$0xff]
      %v596 = vld [vmem:[#allocation2 + $0x35] sm:$0xff]
      %v597 = vld [vmem:[#allocation2 + $0x3d] sm:$0xff]
      %v598 = vld [vmem:[#allocation2 + $0x6] sm:$0xff]
      %v599 = vld [vmem:[#allocation2 + $0xe] sm:$0xff]
      %v600 = vld [vmem:[#allocation2 + $0x16] sm:$0xff]
      %v601 = vld [vmem:[#allocation2 + $0x1e] sm:$0xff]
      %606 = vrot.lane.b32.xlu0 %v570, 32
      %v607 = vpop.permute.xlu0 %606
      %608 = vrot.lane.b32.xlu0 %v571, 32
      %v609 = vpop.permute.xlu0 %608
      %610 = vrot.lane.b32.xlu0 %v572, 32
      %v611 = vpop.permute.xlu0 %610
      %612 = vrot.lane.b32.xlu0 %v573, 32
      %v613 = vpop.permute.xlu0 %612
      %622 = vrot.lane.b32.xlu0 %v574, 64
      %v623 = vpop.permute.xlu0 %622
      %624 = vrot.lane.b32.xlu0 %v575, 64
      %v625 = vpop.permute.xlu0 %624
      %626 = vrot.lane.b32.xlu0 %v576, 64
      %v627 = vpop.permute.xlu0 %626
      %628 = vrot.lane.b32.xlu0 %v577, 64
      %v629 = vpop.permute.xlu0 %628
      %638 = vrot.lane.b32.xlu0 %v578, 96
      %v639 = vpop.permute.xlu0 %638
      %640 = vrot.lane.b32.xlu0 %v579, 96
      %v641 = vpop.permute.xlu0 %640
      %642 = vrot.lane.b32.xlu0 %v580, 96
      %v643 = vpop.permute.xlu0 %642
      %644 = vrot.lane.b32.xlu0 %v581, 96
      %v645 = vpop.permute.xlu0 %644
      %654 = vrot.lane.b32.xlu0 %v586, 32
      %v655 = vpop.permute.xlu0 %654
      %656 = vrot.lane.b32.xlu0 %v587, 32
      %v657 = vpop.permute.xlu0 %656
      %658 = vrot.lane.b32.xlu0 %v588, 32
      %v659 = vpop.permute.xlu0 %658
      %660 = vrot.lane.b32.xlu0 %v589, 32
      %v661 = vpop.permute.xlu0 %660
      %670 = vrot.lane.b32.xlu0 %v590, 64
      %v671 = vpop.permute.xlu0 %670
      %672 = vrot.lane.b32.xlu0 %v591, 64
      %v673 = vpop.permute.xlu0 %672
      %674 = vrot.lane.b32.xlu0 %v592, 64
      %v675 = vpop.permute.xlu0 %674
      %676 = vrot.lane.b32.xlu0 %v593, 64
      %v677 = vpop.permute.xlu0 %676
      %686 = vrot.lane.b32.xlu0 %v594, 96
      %v687 = vpop.permute.xlu0 %686
      %688 = vrot.lane.b32.xlu0 %v595, 96
      %v689 = vpop.permute.xlu0 %688
      %690 = vrot.lane.b32.xlu0 %v596, 96
      %v691 = vpop.permute.xlu0 %690
      %692 = vrot.lane.b32.xlu0 %v597, 96
      %v693 = vpop.permute.xlu0 %692
      %vm698 = vcmask 261120
      %v699 = vsel %vm698, %v566, %v607
      %v700 = vsel %vm698, %v567, %v609
      %v701 = vsel %vm698, %v568, %v611
      %v702 = vsel %vm698, %v569, %v613
      %vm703 = vcmask 523264
      %v704 = vsel %vm703, %v699, %v623
      %v705 = vsel %vm703, %v700, %v625
      %v706 = vsel %vm703, %v701, %v627
      %v707 = vsel %vm703, %v702, %v629
      %vm708 = vcmask 785408
      %v709 = vsel %vm708, %v704, %v639
      %v710 = vsel %vm708, %v705, %v641
      %v711 = vsel %vm708, %v706, %v643
      %v712 = vsel %vm708, %v707, %v645
      %v713 = vsel %vm698, %v582, %v655
      %v714 = vsel %vm698, %v583, %v657
      %v715 = vsel %vm698, %v584, %v659
      %v716 = vsel %vm698, %v585, %v661
      %v717 = vsel %vm703, %v713, %v671
      %v718 = vsel %vm703, %v714, %v673
      %v719 = vsel %vm703, %v715, %v675
      %v720 = vsel %vm703, %v716, %v677
      %v721 = vsel %vm708, %v717, %v687
      %v722 = vsel %vm708, %v718, %v689
      %v723 = vsel %vm708, %v719, %v691
      %v724 = vsel %vm708, %v720, %v693
      %v725 = vpack.c.bf16 %v710, %v709
      %v726 = vpack.c.bf16 %v722, %v721
      %v727 = vpack.c.bf16 %v599, %v598
      %v728 = vpack.c.bf16 %v712, %v711
      %v729 = vpack.c.bf16 %v724, %v723
      %v730 = vpack.c.bf16 %v601, %v600
      %v731 = vld [vmem:[%s1] sm:$0xf]
      %v732 = vld [vmem:[%s1 + $0x4] sm:$0xf]
      %v733 = vld [vmem:[%s1 + $0x8] sm:$0xf]
      %v734 = vld [vmem:[%s1 + $0xc] sm:$0xf]
      %v735 = vld [vmem:[%s1 + $0x10] sm:$0xf]
      %v736 = vld [vmem:[%s1 + $0x14] sm:$0xf]
      %v737 = vld [vmem:[%s1 + $0x18] sm:$0xf]
      %v738 = vld [vmem:[%s1 + $0x1c] sm:$0xf]
      %v739 = vld [vmem:[%s1 + $0x20] sm:$0xf]
      %v740 = vld [vmem:[%s1 + $0x24] sm:$0xf]
      %v741 = vld [vmem:[%s1 + $0x28] sm:$0xf]
      %v742 = vld [vmem:[%s1 + $0x2c] sm:$0xf]
      %v743 = vld [vmem:[%s1 + $0x30] sm:$0xf]
      %v744 = vld [vmem:[%s1 + $0x34] sm:$0xf]
      %v745 = vld [vmem:[%s1 + $0x38] sm:$0xf]
      %v746 = vld [vmem:[%s1 + $0x3c] sm:$0xf]
      %v747 = vld [vmem:[%s1 + $0x40] sm:$0xf]
      %v748 = vld [vmem:[%s1 + $0x44] sm:$0xf]
      %v749 = vld [vmem:[%s1 + $0x48] sm:$0xf]
      %v750 = vld [vmem:[%s1 + $0x4c] sm:$0xf]
      %v751 = vld [vmem:[%s1 + $0x50] sm:$0xf]
      %v752 = vld [vmem:[%s1 + $0x54] sm:$0xf]
      %v753 = vld [vmem:[%s1 + $0x58] sm:$0xf]
      %v754 = vld [vmem:[%s1 + $0x5c] sm:$0xf]
      %v755 = vld [vmem:[%s1 + $0x60] sm:$0xf]
      %v756 = vld [vmem:[%s1 + $0x64] sm:$0xf]
      %v757 = vld [vmem:[%s1 + $0x68] sm:$0xf]
      %v758 = vld [vmem:[%s1 + $0x6c] sm:$0xf]
      %v759 = vld [vmem:[%s1 + $0x70] sm:$0xf]
      %v760 = vld [vmem:[%s1 + $0x74] sm:$0xf]
      %v761 = vld [vmem:[%s1 + $0x78] sm:$0xf]
      %v762 = vld [vmem:[%s1 + $0x7c] sm:$0xf]
      %v763 = vld [vmem:[%s1 + $0x80] sm:$0xf]
      %v764 = vld [vmem:[%s1 + $0x84] sm:$0xf]
      %v765 = vld [vmem:[%s1 + $0x88] sm:$0xf]
      %v766 = vld [vmem:[%s1 + $0x8c] sm:$0xf]
      %v803 = vunpack.c.l.b16 %v731
      %v804 = vunpack.c.l.b16 %v732
      %v805 = vunpack.c.l.b16 %v733
      %v806 = vunpack.c.l.b16 %v734
      %v807 = vunpack.c.l.b16 %v735
      %v808 = vunpack.c.l.b16 %v736
      %v809 = vunpack.c.l.b16 %v737
      %v810 = vunpack.c.l.b16 %v738
      %v811 = vunpack.c.l.b16 %v739
      %v812 = vunpack.c.l.b16 %v740
      %v813 = vunpack.c.l.b16 %v741
      %v814 = vunpack.c.l.b16 %v742
      %v815 = vunpack.c.l.b16 %v743
      %v816 = vunpack.c.l.b16 %v744
      %v817 = vunpack.c.l.b16 %v745
      %v818 = vunpack.c.l.b16 %v746
      %v819 = vunpack.c.l.b16 %v747
      %v820 = vunpack.c.l.b16 %v748
      %v821 = vunpack.c.l.b16 %v749
      %v822 = vunpack.c.l.b16 %v750
      %v823 = vunpack.c.l.b16 %v751
      %v824 = vunpack.c.l.b16 %v752
      %v825 = vunpack.c.l.b16 %v753
      %v826 = vunpack.c.l.b16 %v754
      %v827 = vunpack.c.l.b16 %v755
      %v828 = vunpack.c.l.b16 %v756
      %v829 = vunpack.c.l.b16 %v757
      %v830 = vunpack.c.l.b16 %v758
      %v831 = vunpack.c.l.b16 %v759
      %v832 = vunpack.c.l.b16 %v760
      %v833 = vunpack.c.l.b16 %v761
      %v834 = vunpack.c.l.b16 %v762
      %v835 = vunpack.c.l.b16 %v763
      %v836 = vunpack.c.l.b16 %v764
      %v837 = vunpack.c.l.b16 %v765
      %v838 = vunpack.c.l.b16 %v766
      %v839 = vpack.c.b16 %v804, %v803
      %v840 = vpack.c.b16 %v806, %v805
      %v841 = vpack.c.b16 %v808, %v807
      %v842 = vpack.c.b16 %v810, %v809
      %v843 = vpack.c.b16 %v812, %v811
      %v844 = vpack.c.b16 %v814, %v813
      %v845 = vpack.c.b16 %v816, %v815
      %v846 = vpack.c.b16 %v818, %v817
      %v847 = vpack.c.b16 %v820, %v819
      %v848 = vpack.c.b16 %v822, %v821
      %v849 = vpack.c.b16 %v824, %v823
      %v850 = vpack.c.b16 %v826, %v825
      %v851 = vpack.c.b16 %v828, %v827
      %v852 = vpack.c.b16 %v830, %v829
      %v853 = vpack.c.b16 %v832, %v831
      %v854 = vpack.c.b16 %v834, %v833
      %v855 = vpack.c.b16 %v836, %v835
      %v856 = vpack.c.b16 %v838, %v837
      %v876 = vsel %vm698, %v727, 0
      %v879 = vsel %vm698, %v730, 0
      %881 = vmatprep.subr.bf16.mxu0 0
      %882 = vmatpush1.bf16.msra.mxu0 %v839
      %883 = vmatprep.subr.bf16.mxu0 0
      %884 = vmatpush1.bf16.msra.mxu0 %v840
      %885 = vmatprep.subr.bf16.mxu0 0
      %886 = vmatpush1.bf16.msra.mxu0 %v841
      %887 = vmatprep.subr.bf16.mxu0 0
      %888 = vmatpush1.bf16.msra.mxu0 %v842
      %889 = vmatprep.subr.bf16.mxu0 0
      %890 = vmatpush1.bf16.msra.mxu0 %v843
      %891 = vmatprep.subr.bf16.mxu0 0
      %892 = vmatpush1.bf16.msra.mxu0 %v844
      %893 = vmatprep.subr.bf16.mxu0 0
      %894 = vmatpush1.bf16.msra.mxu0 %v845
      %895 = vmatprep.subr.bf16.mxu0 0
      %896 = vmatpush1.bf16.msra.mxu0 %v846
      %897 = vmatprep.subr.bf16.mxu0 0
      %898 = vmatpush1.bf16.msra.mxu0 %v847
      %899 = vmatprep.subr.bf16.mxu0 0
      %900 = vmatpush1.bf16.msra.mxu0 %v848
      %901 = vmatprep.subr.bf16.mxu0 0
      %902 = vmatpush1.bf16.msra.mxu0 %v849
      %903 = vmatprep.subr.bf16.mxu0 0
      %904 = vmatpush1.bf16.msra.mxu0 %v850
      %905 = vmatprep.subr.bf16.mxu0 0
      %906 = vmatpush1.bf16.msra.mxu0 %v851
      %907 = vmatprep.subr.bf16.mxu0 0
      %908 = vmatpush1.bf16.msra.mxu0 %v852
      %909 = vmatprep.subr.bf16.mxu0 0
      %910 = vmatpush1.bf16.msra.mxu0 %v853
      %911 = vmatprep.subr.bf16.mxu0 0
      %912 = vmatpush1.bf16.msra.mxu0 %v854
      %913 = vmatprep.mubr.bf16.mxu0 %v726
      %914 = vmatmul.mubr.bf16.gmra.mrb[0].mxu0 %v725
      %v915 = vpop.f32.mrb[0].mxu0
      %v916 = vadd.f32 0.0, %v915
      %v917 = vpop.f32.mrb[0].mxu0
      %v918 = vpop.f32.mrb[0].mxu0
      %v919 = vadd.f32 0.0, %v918
      %v920 = vpop.f32.mrb[0].mxu0
      %921 = vmatprep.mubr.bf16.mxu0 %v729
      %922 = vmatmul.mubr.bf16.gmra.mrb[0].mxu0 %v728
      %v923 = vpop.f32.mrb[0].mxu0
      %v924 = vadd.f32 0.0, %v923
      %v925 = vpop.f32.mrb[0].mxu0
      %v926 = vpop.f32.mrb[0].mxu0
      %v927 = vadd.f32 0.0, %v926
      %v928 = vpop.f32.mrb[0].mxu0
      %929 = vdwg.mxu0
      %930 = vmatprep.subr.bf16.mxu0 0
      %931 = vmatpush1.bf16.msra.mxu0 %v855
      %932 = vmatprep.subr.bf16.mxu0 0
      %933 = vmatpush1.bf16.msra.mxu0 %v856
      %934 = vmatprep.subr.bf16.mxu0 0
      %935 = vmatpush1.bf16.msra.mxu0 0
      %936 = vmatprep.subr.bf16.mxu0 0
      %937 = vmatpush1.bf16.msra.mxu0 0
      %938 = vmatprep.subr.bf16.mxu0 0
      %939 = vmatpush1.bf16.msra.mxu0 0
      %940 = vmatprep.subr.bf16.mxu0 0
      %941 = vmatpush1.bf16.msra.mxu0 0
      %942 = vmatprep.subr.bf16.mxu0 0
      %943 = vmatpush1.bf16.msra.mxu0 0
      %944 = vmatprep.subr.bf16.mxu0 0
      %945 = vmatpush1.bf16.msra.mxu0 0
      %946 = vmatprep.subr.bf16.mxu0 0
      %947 = vmatpush1.bf16.msra.mxu0 0
      %948 = vmatprep.subr.bf16.mxu0 0
      %949 = vmatpush1.bf16.msra.mxu0 0
      %950 = vmatprep.subr.bf16.mxu0 0
      %951 = vmatpush1.bf16.msra.mxu0 0
      %952 = vmatprep.subr.bf16.mxu0 0
      %953 = vmatpush1.bf16.msra.mxu0 0
      %954 = vmatprep.subr.bf16.mxu0 0
      %955 = vmatpush1.bf16.msra.mxu0 0
      %956 = vmatprep.subr.bf16.mxu0 0
      %957 = vmatpush1.bf16.msra.mxu0 0
      %958 = vmatprep.subr.bf16.mxu0 0
      %959 = vmatpush1.bf16.msra.mxu0 0
      %960 = vmatprep.subr.bf16.mxu0 0
      %961 = vmatpush1.bf16.msra.mxu0 0
      %962 = vmatprep.mubr.bf16.mxu0 0
      %963 = vmatmul.mubr.bf16.gmra.mrb[0].mxu0 %v876
      %v964 = vpop.f32.mrb[0].mxu0
      %v965 = vadd.f32 %v916, %v964
      %v966 = vpop.f32.mrb[0].mxu0
      %v967 = vpop.f32.mrb[0].mxu0
      %v968 = vadd.f32 %v919, %v967
      %v969 = vpop.f32.mrb[0].mxu0
      %970 = vmatprep.mubr.bf16.mxu0 0
      %971 = vmatmul.mubr.bf16.gmra.mrb[0].mxu0 %v879
      %v972 = vpop.f32.mrb[0].mxu0
      %v973 = vadd.f32 %v924, %v972
      %v974 = vpop.f32.mrb[0].mxu0
      %v975 = vpop.f32.mrb[0].mxu0
      %v976 = vadd.f32 %v927, %v975
      %v977 = vpop.f32.mrb[0].mxu0
      %978 = vdwg.mxu0
      %v979 = vpack.c.bf16 %v968, %v965
      %v980 = vpack.c.bf16 %v976, %v973
      %v983 = vunpack.c.l.b16 %v979
      %v984 = vunpack.c.h.b16 %v979
      %v985 = vunpack.c.l.b16 %v980
      %v986 = vunpack.c.h.b16 %v980
      %v987 = vpack.c.b16 %v983, %v983
      %v988 = vpack.c.b16 %v984, %v984
      %v989 = vpack.c.b16 %v985, %v985
      %v990 = vpack.c.b16 %v986, %v986
      %vm995 = vcmask 519168
      %996 = vst.msk [vmem:[%s283] sm:$0xf] %vm995, %v987
      %997 = vst.msk [vmem:[%s283 + $0x4] sm:$0xf] %vm995, %v988
      %998 = vst.msk [vmem:[%s283 + $0x8] sm:$0xf] %vm995, %v989
      %999 = vst.msk [vmem:[%s283 + $0xc] sm:$0xf] %vm995, %v990
      %v1000 = vlaneseq
      %v1001 = vshrl.u32 %v1000, 7
      %v1002 = vadd.s32 %v1001, 8
      %v1003 = vadd.s32 %v1001, 16
      %v1004 = vadd.s32 %v1001, 24
      %vm1005 = vcmp.lt.s32.totalorder %v1001, 0
      %v1006 = vsub.s32 0, %v1001
      %v1007 = vsel %vm1005, %v1006, %v1001
      %v1008 = vmul.u32.u64.compose %v1007, 3435973837
      %v1009 = vextract.low.u32 %v1008
      %v1010 = vextract.high.u32 %v1008
      %v1011 = vshrl.u32 %v1010, 2
      %v1012 = vmul.u32 %v1011, 5
      %v1013 = vsub.s32 %v1007, %v1012
      %v1014 = vsub.s32 0, %v1013
      %v1015 = vsel %vm1005, %v1014, %v1013
      %vm1016 = vcmp.lt.s32.totalorder %v1002, 0
      %v1017 = vsub.s32 0, %v1002
      %v1018 = vsel %vm1016, %v1017, %v1002
      %v1019 = vmul.u32.u64.compose %v1018, 3435973837
      %v1020 = vextract.low.u32 %v1019
      %v1021 = vextract.high.u32 %v1019
      %v1022 = vshrl.u32 %v1021, 2
      %v1023 = vmul.u32 %v1022, 5
      %v1024 = vsub.s32 %v1018, %v1023
      %v1025 = vsub.s32 0, %v1024
      %v1026 = vsel %vm1016, %v1025, %v1024
      %vm1027 = vcmp.lt.s32.totalorder %v1003, 0
      %v1028 = vsub.s32 0, %v1003
      %v1029 = vsel %vm1027, %v1028, %v1003
      %v1030 = vmul.u32.u64.compose %v1029, 3435973837
      %v1031 = vextract.low.u32 %v1030
      %v1032 = vextract.high.u32 %v1030
      %v1033 = vshrl.u32 %v1032, 2
      %v1034 = vmul.u32 %v1033, 5
      %v1035 = vsub.s32 %v1029, %v1034
      %v1036 = vsub.s32 0, %v1035
      %v1037 = vsel %vm1027, %v1036, %v1035
      %vm1038 = vcmp.lt.s32.totalorder %v1004, 0
      %v1039 = vsub.s32 0, %v1004
      %v1040 = vsel %vm1038, %v1039, %v1004
      %v1041 = vmul.u32.u64.compose %v1040, 3435973837
      %v1042 = vextract.low.u32 %v1041
      %v1043 = vextract.high.u32 %v1041
      %v1044 = vshrl.u32 %v1043, 2
      %v1045 = vmul.u32 %v1044, 5
      %v1046 = vsub.s32 %v1040, %v1045
      %v1047 = vsub.s32 0, %v1046
      %v1048 = vsel %vm1038, %v1047, %v1046
      %vm1049 = vcmp.ne.s32.totalorder %v1015, 0
      %vm1050 = vcmp.ne.s32.totalorder %v1026, 0
      %vm1051 = vcmp.ne.s32.totalorder %v1037, 0
      %vm1052 = vcmp.ne.s32.totalorder %v1048, 0
      %vm1053 = vcmp.lt.s32.totalorder %v1015, 0
      %vm1054 = vcmp.lt.s32.totalorder %v1026, 0
      %vm1055 = vcmp.lt.s32.totalorder %v1037, 0
      %vm1056 = vcmp.lt.s32.totalorder %v1048, 0
      %vm1057 = vmand %vm1053, %vm1049
      %vm1058 = vmand %vm1054, %vm1050
      %vm1059 = vmand %vm1055, %vm1051
      %vm1060 = vmand %vm1056, %vm1052
      %v1061 = vadd.s32 %v1015, 5
      %v1062 = vadd.s32 %v1026, 5
      %v1063 = vadd.s32 %v1037, 5
      %v1064 = vadd.s32 %v1048, 5
      %v1065 = vsel %vm1057, %v1061, %v1015
      %v1066 = vsel %vm1058, %v1062, %v1026
      %v1067 = vsel %vm1059, %v1063, %v1037
      %v1068 = vsel %vm1060, %v1064, %v1048
      %vm1069 = vcmp.ne.s32.totalorder %v1065, 4
      %vm1070 = vcmp.ne.s32.totalorder %v1066, 4
      %vm1071 = vcmp.ne.s32.totalorder %v1067, 4
      %vm1072 = vcmp.ne.s32.totalorder %v1068, 4
      %vm1073 = vcmp.lt.s32.totalorder %v1001, 20
      %vm1074 = vcmp.lt.s32.totalorder %v1002, 20
      %vm1075 = vcmp.lt.s32.totalorder %v1003, 20
      %vm1076 = vcmp.lt.s32.totalorder %v1004, 20
      %vm1077 = vmand %vm1069, %vm1073
      %vm1078 = vmand %vm1070, %vm1074
      %vm1079 = vmand %vm1071, %vm1075
      %vm1080 = vmand %vm1072, %vm1076
      %v1081 = vsel %vm1077, 1, 0
      %v1082 = vsel %vm1078, 1, 0
      %v1083 = vsel %vm1079, 1, 0
      %v1084 = vsel %vm1080, 1, 0
      %vm1085 = vcmp.eq.s32.totalorder %v1081, 1
      %vm1086 = vcmp.eq.s32.totalorder %v1082, 1
      %vm1087 = vcmp.eq.s32.totalorder %v1083, 1
      %vm1088 = vcmp.eq.s32.totalorder %v1084, 1
      %v1089 = vsel %vm1085, %v965, 0.0
      %v1090 = vsel %vm1086, %v968, 0.0
      %v1091 = vsel %vm1087, %v973, 0.0
      %v1092 = vsel %vm1088, %v976, 0.0
      %v1093 = vsel %vm703, %v1089, 0.0
      %v1094 = vsel %vm703, %v1090, 0.0
      %v1095 = vadd.f32 %v1093, %v1094
      %v1096 = vsel %vm703, %v1091, 0.0
      %v1097 = vadd.f32 %v1095, %v1096
      %v1098 = vsel %vm703, %v1092, 0.0
      %v1099 = vadd.f32 %v1097, %v1098
      %v1100 = vrot.slane %v1099, 4
      %v1101 = vadd.f32 %v1099, %v1100
      %v1102 = vrot.slane %v1101, 2
      %v1103 = vadd.f32 %v1101, %v1102
      %v1104 = vrot.slane %v1103, 1
      %v1105 = vadd.f32 %v1103, %v1104
      %vm1106 = vcmask 516096
      %1107 = vst.msk [vmem:[%s289] sm:$0x1] %vm1106, %v1105
      %v1108 = vmul.f32 %v1089, %v1089
      %v1109 = vmul.f32 %v1090, %v1090
      %v1110 = vmul.f32 %v1091, %v1091
      %v1111 = vmul.f32 %v1092, %v1092
      %v1112 = vsel %vm703, %v1108, 0.0
      %v1113 = vsel %vm703, %v1109, 0.0
      %v1114 = vadd.f32 %v1112, %v1113
      %v1115 = vsel %vm703, %v1110, 0.0
      %v1116 = vadd.f32 %v1114, %v1115
      %v1117 = vsel %vm703, %v1111, 0.0
      %v1118 = vadd.f32 %v1116, %v1117
      %v1119 = vrot.slane %v1118, 4
      %v1120 = vadd.f32 %v1118, %v1119
      %v1121 = vrot.slane %v1120, 2
      %v1122 = vadd.f32 %v1120, %v1121
      %v1123 = vrot.slane %v1122, 1
      %v1124 = vadd.f32 %v1122, %v1123
      %1125 = vst.msk [vmem:[%s289 + $0x1] sm:$0x1] %vm1106, %v1124
      %s1126 = smul.u32 4, %s23
      %p1127 = scmp.lt.s32.totalorder %s22, 1
      %s1128 = scalar_select %p1127, %s22, 1
      %p1129 = scmp.lt.s32.totalorder %s1126, 3
      %s1130 = scalar_select %p1129, %s1126, 3
      %s1131 = smul.addr %s1128, 4
      %s1132 = sadd.s32 %s1130, %s1131
      %s1133 = smul.addr %s1132, 4
      %s1134 = scalar_lea.vmem %s5, %s1133
      %s1135 = sadd.s32 %s22, %s23
      %p1136 = scmp.lt.s32.totalorder %s1135, 1
      %s1137 = scalar_select %p1136, %s1135, 1
      %s1138 = smul.addr %s1137, 2
      %s1139 = scalar_lea.vmem %s6, %s1138
      // Predicated region
      $region45: #{dnet_forward.5} parent=39 // pred_check
        %p1140 = pneg %p160
      $region46: #{dnet_forward.5} parent=39 // pred_check_branch
        %1142 = sbr.rel (%p1140) target = $region48
      $region47: #{dnet_forward.5} parent=39 // pred_region
        %s1143 = smul.u32 4, %s23
      $region48: #{dnet_forward.5} parent=39 // pred_fallthru
        _
      // Predicated region
      $region49: #{dnet_forward.5} parent=39 // pred_check
        %p1144 = pneg %p188
      $region50: #{dnet_forward.5} parent=39 // pred_check_branch
        %1146 = sbr.rel (%p1144) target = $region52
      $region51: #{dnet_forward.5} parent=39 // pred_region
        %s1147 = sadd.s32 %s22, %s23
      $region52: #{dnet_forward.5} parent=39 // pred_fallthru
        _
    $region40: #{dnet_forward.5} parent=5 // pred_fallthru
      _
    %p1148 = scmp.le.s32.totalorder 2, %s13
    // Predicated region
    $region53: #{dnet_forward.5} parent=5 // pred_check
      %p1149 = pneg %p1148
    $region54: #{dnet_forward.5} parent=5 // pred_check_branch
      %1151 = sbr.rel (%p1149) target = $region56
    $region55: #{dnet_forward.5} parent=5 // pred_region
      %s1152 = ssub.s32 %s13, 2
      // Predicated region
      $region57: #{dnet_forward.5} parent=55 // pred_check
        %p1153 = pneg %p166
      $region58: #{dnet_forward.5} parent=55 // pred_check_branch
        %1155 = sbr.rel (%p1153) target = $region60
      $region59: #{dnet_forward.5} parent=55 // pred_region
        %s1156 = smul.u32 4, %s25
        %p1157 = scmp.lt.s32.totalorder %s24, 1
        %s1158 = scalar_select %p1157, %s24, 1
        %p1159 = scmp.lt.s32.totalorder %s1156, 3
        %s1160 = scalar_select %p1159, %s1156, 3
        %s1161 = smul.addr %s1158, 4
        %s1162 = sadd.s32 %s1160, %s1161
        %s1163 = smul.addr %s1162, 4
        %s1164 = scalar_lea.vmem %s5, %s1163
      $region60: #{dnet_forward.5} parent=55 // pred_fallthru
        _
      // Predicated region
      $region61: #{dnet_forward.5} parent=55 // pred_check
        %p1165 = pneg %p194
      $region62: #{dnet_forward.5} parent=55 // pred_check_branch
        %1167 = sbr.rel (%p1165) target = $region64
      $region63: #{dnet_forward.5} parent=55 // pred_region
        %s1168 = sadd.s32 %s24, %s25
        %p1169 = scmp.lt.s32.totalorder %s1168, 1
        %s1170 = scalar_select %p1169, %s1168, 1
        %s1171 = smul.addr %s1170, 2
        %s1172 = scalar_lea.vmem %s6, %s1171
      $region64: #{dnet_forward.5} parent=55 // pred_fallthru
        _
    $region56: #{dnet_forward.5} parent=5 // pred_fallthru
      _
  $region6: #{dnet_forward.5} parent=0 // loop_footer
    %s17 = sadd.s32 1, %s13
  $region7: #{dnet_forward.5} parent=0 // loop_footer_branch
    %12 = sbr.rel target = $region3
  $region8: #{dnet_forward.5} parent=0 // loop_exit
    _

// kernel: dnet_forward.6
$region0: #{dnet_forward.6}
  #allocation0 [shape = 'u32[]', space=smem, size = 0x4, offset = 0x4, fixed_abs, tag = 'smem constant byte address 0x4 - core index']
  #allocation1 [shape = 'u32[144,128]{1,0:T(1,128)}', space=vmem, size = 0x12000, scoped, tag = 'internal scratch']
  #allocation2 [shape = 'f32[72,64]{1,0:T(8,128)}', space=vmem, size = 0x9000, scoped, tag = 'scratch operand']
  %s0 = inlined_call_operand.vmem [shape: bf16[2,72,64], index: 0, kind: input, shape index: {}]
  %s1 = inlined_call_operand.vmem [shape: bf16[576,128], index: 1, kind: input, shape index: {}]
  %s2 = inlined_call_operand.vmem [shape: f32[1,64], index: 2, kind: input, shape index: {}]
  %s3 = inlined_call_operand.vmem [shape: f32[1,64], index: 3, kind: input, shape index: {}]
  %s4 = inlined_call_operand.vmem [shape: f32[72,1], index: 4, kind: input, shape index: {}]
  %s5 = inlined_call_operand.vmem [shape: bf16[2,16,128], index: 5, kind: output, shape index: {0}]
  %s6 = inlined_call_operand.vmem [shape: f32[2,2,128], index: 6, kind: output, shape index: {1}]
  %7 = xla_tuple %s5, %s6
  %s8 = sld [smem:[#allocation0]]
  $region65: #{dnet_forward.6} parent=0
    _
  %s10 = ssub.s32 1, %s8
  %s11 = scalar_select 0, %s10, %s8
  loop: start=0, step=1, limit=4
  $region2: #{dnet_forward.6} parent=0 // loop_pre_header
    _
  $region3: #{dnet_forward.6} parent=0 // loop_header
    %s13 = sphi 0, %s17
    %p14 = scmp.ge.s32.totalorder %s13, 4
    %s20 = sphi 0, %s32
    %s21 = sphi 0, %s28
    %s22 = sphi 0, %s20
    %s23 = sphi 0, %s21
    %s24 = sphi 0, %s22
    %s25 = sphi 0, %s23
    %s35 = sphi 0, %s37
    %s38 = sphi 0, %s35
    %s39 = sphi 0, %s38
    %s55 = sphi 0, %s39
    %s59 = sphi 0, %s59
    %s61 = sphi 0, %s59
    %s62 = sphi 0, %s61
    %s76 = sphi 0, %s62
    %s80 = sphi 0, %s80
    %s82 = sphi 0, %s80
    %s83 = sphi 0, %s82
    %s97 = sphi 0, %s83
    %s101 = sphi 0, %s101
    %s103 = sphi 0, %s101
    %s104 = sphi 0, %s103
    %s118 = sphi 0, %s104
    %s122 = sphi 0, %s122
    %s124 = sphi 0, %s122
    %s125 = sphi 0, %s124
    %s139 = sphi 0, %s125
    %s147 = sphi 0, %s149
    %s150 = sphi 0, %s147
    %s151 = sphi 0, %s150
    %s167 = sphi 0, %s151
    %s175 = sphi 0, %s177
    %s178 = sphi 0, %s175
    %s179 = sphi 0, %s178
    %s195 = sphi 0, %s179
  $region4: #{dnet_forward.6} parent=0 // loop_header_branch
    %16 = sbr.rel (%p14) target = $region8
  $region5: #{dnet_forward.6} parent=0 // loop_body
    %s18 = ssub.s32 %s13, 1
    %s19 = ssub.s32 %s13, 2
    %s26 = sadd.s32 1, %s21
    %p27 = scmp.ge.s32.totalorder %s26, 1
    %s28 = scalar_select %p27, 0, %s26
    %s29 = sadd.s32 1, %s20
    %s30 = scalar_select %p27, %s29, %s20
    %p31 = scmp.ge.s32.totalorder %s30, 2
    %s32 = scalar_select %p31, 0, %s30
    %s33 = ssub.s32 %s20, %s32
    %p34 = scmp.eq.s32.totalorder %s33, 0
    %s36 = sadd.s32 %s35, 1
    %s37 = scalar_select %p34, %s35, %s36
    %p40 = pneg %p34
    %p41 = scmp.eq.s32.totalorder %s13, 1
    %p42 = por %p40, %p41
    %p43 = scmp.ne.s32.totalorder %s35, %s38
    %p44 = scmp.eq.s32.totalorder %s13, 0
    %p45 = por %p43, %p44
    %p46 = scmp.ne.s32.totalorder %s35, %s38
    %p47 = scmp.eq.s32.totalorder %s18, 1
    %p48 = por %p46, %p47
    %p49 = scmp.ne.s32.totalorder %s38, %s39
    %p50 = scmp.eq.s32.totalorder %s18, 0
    %p51 = por %p49, %p50
    %p52 = scmp.ne.s32.totalorder %s38, %s39
    %p53 = scmp.eq.s32.totalorder %s19, 1
    %p54 = por %p52, %p53
    %p56 = scmp.ne.s32.totalorder %s39, %s55
    %p57 = scmp.eq.s32.totalorder %s19, 0
    %p58 = por %p56, %p57
    %s60 = sadd.s32 %s59, 1
    %p63 = scmp.eq.s32.totalorder %s13, 1
    %p64 = scmp.ne.s32.totalorder %s59, %s61
    %p65 = scmp.eq.s32.totalorder %s13, 0
    %p66 = por %p64, %p65
    %p67 = scmp.ne.s32.totalorder %s59, %s61
    %p68 = scmp.eq.s32.totalorder %s18, 1
    %p69 = por %p67, %p68
    %p70 = scmp.ne.s32.totalorder %s61, %s62
    %p71 = scmp.eq.s32.totalorder %s18, 0
    %p72 = por %p70, %p71
    %p73 = scmp.ne.s32.totalorder %s61, %s62
    %p74 = scmp.eq.s32.totalorder %s19, 1
    %p75 = por %p73, %p74
    %p77 = scmp.ne.s32.totalorder %s62, %s76
    %p78 = scmp.eq.s32.totalorder %s19, 0
    %p79 = por %p77, %p78
    %s81 = sadd.s32 %s80, 1
    %p84 = scmp.eq.s32.totalorder %s13, 1
    %p85 = scmp.ne.s32.totalorder %s80, %s82
    %p86 = scmp.eq.s32.totalorder %s13, 0
    %p87 = por %p85, %p86
    %p88 = scmp.ne.s32.totalorder %s80, %s82
    %p89 = scmp.eq.s32.totalorder %s18, 1
    %p90 = por %p88, %p89
    %p91 = scmp.ne.s32.totalorder %s82, %s83
    %p92 = scmp.eq.s32.totalorder %s18, 0
    %p93 = por %p91, %p92
    %p94 = scmp.ne.s32.totalorder %s82, %s83
    %p95 = scmp.eq.s32.totalorder %s19, 1
    %p96 = por %p94, %p95
    %p98 = scmp.ne.s32.totalorder %s83, %s97
    %p99 = scmp.eq.s32.totalorder %s19, 0
    %p100 = por %p98, %p99
    %s102 = sadd.s32 %s101, 1
    %p105 = scmp.eq.s32.totalorder %s13, 1
    %p106 = scmp.ne.s32.totalorder %s101, %s103
    %p107 = scmp.eq.s32.totalorder %s13, 0
    %p108 = por %p106, %p107
    %p109 = scmp.ne.s32.totalorder %s101, %s103
    %p110 = scmp.eq.s32.totalorder %s18, 1
    %p111 = por %p109, %p110
    %p112 = scmp.ne.s32.totalorder %s103, %s104
    %p113 = scmp.eq.s32.totalorder %s18, 0
    %p114 = por %p112, %p113
    %p115 = scmp.ne.s32.totalorder %s103, %s104
    %p116 = scmp.eq.s32.totalorder %s19, 1
    %p117 = por %p115, %p116
    %p119 = scmp.ne.s32.totalorder %s104, %s118
    %p120 = scmp.eq.s32.totalorder %s19, 0
    %p121 = por %p119, %p120
    %s123 = sadd.s32 %s122, 1
    %p126 = scmp.eq.s32.totalorder %s13, 1
    %p127 = scmp.ne.s32.totalorder %s122, %s124
    %p128 = scmp.eq.s32.totalorder %s13, 0
    %p129 = por %p127, %p128
    %p130 = scmp.ne.s32.totalorder %s122, %s124
    %p131 = scmp.eq.s32.totalorder %s18, 1
    %p132 = por %p130, %p131
    %p133 = scmp.ne.s32.totalorder %s124, %s125
    %p134 = scmp.eq.s32.totalorder %s18, 0
    %p135 = por %p133, %p134
    %p136 = scmp.ne.s32.totalorder %s124, %s125
    %p137 = scmp.eq.s32.totalorder %s19, 1
    %p138 = por %p136, %p137
    %p140 = scmp.ne.s32.totalorder %s125, %s139
    %p141 = scmp.eq.s32.totalorder %s19, 0
    %p142 = por %p140, %p141
    %s143 = ssub.s32 %s20, %s32
    %s144 = ssub.s32 %s21, %s28
    %s145 = sor.u32 %s143, %s144
    %p146 = scmp.eq.s32.totalorder %s145, 0
    %s148 = sadd.s32 %s147, 1
    %s149 = scalar_select %p146, %s147, %s148
    %p152 = pneg %p146
    %p153 = scmp.eq.s32.totalorder %s13, 1
    %p154 = por %p152, %p153
    %p155 = scmp.ne.s32.totalorder %s147, %s150
    %p156 = scmp.eq.s32.totalorder %s13, 0
    %p157 = por %p155, %p156
    %p158 = scmp.ne.s32.totalorder %s147, %s150
    %p159 = scmp.eq.s32.totalorder %s18, 1
    %p160 = por %p158, %p159
    %p161 = scmp.ne.s32.totalorder %s150, %s151
    %p162 = scmp.eq.s32.totalorder %s18, 0
    %p163 = por %p161, %p162
    %p164 = scmp.ne.s32.totalorder %s150, %s151
    %p165 = scmp.eq.s32.totalorder %s19, 1
    %p166 = por %p164, %p165
    %p168 = scmp.ne.s32.totalorder %s151, %s167
    %p169 = scmp.eq.s32.totalorder %s19, 0
    %p170 = por %p168, %p169
    %s171 = sadd.s32 %s20, %s21
    %s172 = sadd.s32 %s32, %s28
    %s173 = ssub.s32 %s171, %s172
    %p174 = scmp.eq.s32.totalorder %s173, 0
    %s176 = sadd.s32 %s175, 1
    %s177 = scalar_select %p174, %s175, %s176
    %p180 = pneg %p174
    %p181 = scmp.eq.s32.totalorder %s13, 1
    %p182 = por %p180, %p181
    %p183 = scmp.ne.s32.totalorder %s175, %s178
    %p184 = scmp.eq.s32.totalorder %s13, 0
    %p185 = por %p183, %p184
    %p186 = scmp.ne.s32.totalorder %s175, %s178
    %p187 = scmp.eq.s32.totalorder %s18, 1
    %p188 = por %p186, %p187
    %p189 = scmp.ne.s32.totalorder %s178, %s179
    %p190 = scmp.eq.s32.totalorder %s18, 0
    %p191 = por %p189, %p190
    %p192 = scmp.ne.s32.totalorder %s178, %s179
    %p193 = scmp.eq.s32.totalorder %s19, 1
    %p194 = por %p192, %p193
    %p196 = scmp.ne.s32.totalorder %s179, %s195
    %p197 = scmp.eq.s32.totalorder %s19, 0
    %p198 = por %p196, %p197
    %p199 = scmp.le.s32.totalorder 1, %s13
    %p200 = scmp.lt.s32.totalorder %s13, 3
    %p201 = pnand %p199, %p200
    %p202 = pneg %p201
    // Predicated region
    $region9: #{dnet_forward.6} parent=5 // pred_check
      _
    $region10: #{dnet_forward.6} parent=5 // pred_check_branch
      %204 = sbr.rel (%p201) target = $region12
    $region11: #{dnet_forward.6} parent=5 // pred_region
      %s205 = ssub.s32 %s13, 1
      // Predicated region
      $region13: #{dnet_forward.6} parent=11 // pred_check
        %p206 = pneg %p72
      $region14: #{dnet_forward.6} parent=11 // pred_check_branch
        %208 = sbr.rel (%p206) target = $region16
      $region15: #{dnet_forward.6} parent=11 // pred_region
        _
      $region16: #{dnet_forward.6} parent=11 // pred_fallthru
        _
      // Predicated region
      $region17: #{dnet_forward.6} parent=11 // pred_check
        %p209 = pneg %p93
      $region18: #{dnet_forward.6} parent=11 // pred_check_branch
        %211 = sbr.rel (%p209) target = $region20
      $region19: #{dnet_forward.6} parent=11 // pred_region
        _
      $region20: #{dnet_forward.6} parent=11 // pred_fallthru
        _
      // Predicated region
      $region21: #{dnet_forward.6} parent=11 // pred_check
        %p212 = pneg %p114
      $region22: #{dnet_forward.6} parent=11 // pred_check_branch
        %214 = sbr.rel (%p212) target = $region24
      $region23: #{dnet_forward.6} parent=11 // pred_region
        _
      $region24: #{dnet_forward.6} parent=11 // pred_fallthru
        _
      // Predicated region
      $region25: #{dnet_forward.6} parent=11 // pred_check
        %p215 = pneg %p135
      $region26: #{dnet_forward.6} parent=11 // pred_check_branch
        %217 = sbr.rel (%p215) target = $region28
      $region27: #{dnet_forward.6} parent=11 // pred_region
        _
      $region28: #{dnet_forward.6} parent=11 // pred_fallthru
        _
    $region12: #{dnet_forward.6} parent=5 // pred_fallthru
      _
    %p218 = scmp.lt.s32.totalorder %s13, 2
    // Predicated region
    $region29: #{dnet_forward.6} parent=5 // pred_check
      %p219 = pneg %p218
    $region30: #{dnet_forward.6} parent=5 // pred_check_branch
      %221 = sbr.rel (%p219) target = $region32
    $region31: #{dnet_forward.6} parent=5 // pred_region
      // Predicated region
      $region33: #{dnet_forward.6} parent=31 // pred_check
        %p222 = pneg %p45
      $region34: #{dnet_forward.6} parent=31 // pred_check_branch
        %224 = sbr.rel (%p222) target = $region36
      $region35: #{dnet_forward.6} parent=31 // pred_region
        %p225 = scmp.lt.s32.totalorder %s20, 1
        %s226 = scalar_select %p225, %s20, 1
        %s227 = smul.addr %s226, 9
        %s228 = smul.addr %s227, 4
        %s229 = scalar_lea.vmem %s0, %s228
      $region36: #{dnet_forward.6} parent=31 // pred_fallthru
        _
    $region32: #{dnet_forward.6} parent=5 // pred_fallthru
      _
    %p230 = scmp.le.s32.totalorder 1, %s13
    %p231 = scmp.lt.s32.totalorder %s13, 3
    %p232 = pnand %p230, %p231
    %p233 = pneg %p232
    // Predicated region
    $region37: #{dnet_forward.6} parent=5 // pred_check
      _
    $region38: #{dnet_forward.6} parent=5 // pred_check_branch
      %235 = sbr.rel (%p232) target = $region40
    $region39: #{dnet_forward.6} parent=5 // pred_region
      %s236 = ssub.s32 %s13, 1
      %p237 = scmp.lt.s32.totalorder %s22, 1
      %s238 = scalar_select %p237, %s22, 1
      %s239 = smul.addr %s238, 9
      %s240 = smul.addr %s239, 4
      %s241 = scalar_lea.vmem %s0, %s240
      %p242 = pneg %p51
      %p243 = pneg %p48
      %p244 = pneg %p72
      %p245 = pneg %p69
      %p246 = pneg %p93
      %p247 = pneg %p90
      %p248 = pneg %p114
      %p249 = pneg %p111
      %p250 = pneg %p135
      %p251 = pneg %p132
      %p252 = pneg %p163
      %p253 = pneg %p160
      %s254 = smul.u32 2, %s23
      %p255 = scmp.lt.s32.totalorder %s22, 1
      %s256 = scalar_select %p255, %s22, 1
      %p257 = scmp.lt.s32.totalorder %s254, 1
      %s258 = scalar_select %p257, %s254, 1
      %s259 = smul.addr %s256, 2
      %s260 = sadd.s32 %s258, %s259
      %s261 = smul.addr %s260, 4
      %s262 = scalar_lea.vmem %s5, %s261
      %p263 = pneg %p191
      %p264 = pneg %p188
      %s265 = sadd.s32 %s22, %s23
      %p266 = scmp.lt.s32.totalorder %s265, 1
      %s267 = scalar_select %p266, %s265, 1
      %s268 = smul.addr %s267, 2
      %s269 = scalar_lea.vmem %s6, %s268
      %p270 = scmp.lt.s32.totalorder %s22, 1
      %s271 = scalar_select %p270, %s22, 1
      %s272 = smul.addr %s271, 9
      %s273 = smul.addr %s272, 4
      %s274 = scalar_lea.vmem %s0, %s273
      %s275 = smul.u32 2, %s23
      %p276 = scmp.lt.s32.totalorder %s22, 1
      %s277 = scalar_select %p276, %s22, 1
      %p278 = scmp.lt.s32.totalorder %s275, 1
      %s279 = scalar_select %p278, %s275, 1
      %s280 = smul.addr %s277, 2
      %s281 = sadd.s32 %s279, %s280
      %s282 = smul.addr %s281, 4
      %s283 = scalar_lea.vmem %s5, %s282
      %s284 = smul.u32 2, %s23
      %s285 = sadd.s32 %s22, %s23
      %p286 = scmp.lt.s32.totalorder %s285, 1
      %s287 = scalar_select %p286, %s285, 1
      %s288 = smul.addr %s287, 2
      %s289 = scalar_lea.vmem %s6, %s288
      %s290 = sadd.s32 %s22, %s23
      %p292 = scmp.eq.s32.totalorder %s23, 0
      // Predicated region
      $region41: #{dnet_forward.6} parent=39 // pred_check
        %p293 = pneg %p292
      $region42: #{dnet_forward.6} parent=39 // pred_check_branch
        %295 = sbr.rel (%p293) target = $region44
      $region43: #{dnet_forward.6} parent=39 // pred_region
        %v296 = vld [vmem:[%s274] sm:$0xf]
        %v297 = vld [vmem:[%s274 + $0x4] sm:$0xf]
        %v298 = vld [vmem:[%s274 + $0x8] sm:$0xf]
        %v299 = vld [vmem:[%s274 + $0xc] sm:$0xf]
        %v300 = vld [vmem:[%s274 + $0x10] sm:$0xf]
        %v301 = vld [vmem:[%s274 + $0x14] sm:$0xf]
        %v302 = vld [vmem:[%s274 + $0x18] sm:$0xf]
        %v303 = vld [vmem:[%s274 + $0x1c] sm:$0xf]
        %v304 = vld [vmem:[%s274 + $0x20] sm:$0xf]
        %v305 = vunpack.c.l.bf16 %v296
        %v306 = vunpack.c.l.bf16 %v297
        %v307 = vunpack.c.l.bf16 %v298
        %v308 = vunpack.c.l.bf16 %v299
        %v309 = vunpack.c.l.bf16 %v300
        %v310 = vunpack.c.l.bf16 %v301
        %v311 = vunpack.c.l.bf16 %v302
        %v312 = vunpack.c.l.bf16 %v303
        %v313 = vunpack.c.l.bf16 %v304
        %v314 = vld [vmem:[%s2] sm:$0x1]
        %v316 = vlaneseq
        %v317 = vshrl.u32 %v316, 7
        %v318 = vsub.s32 0, %v317
        %v319 = vrot.slane %v314, %v318
        %v321 = vmul.f32 %v305, %v319
        %v322 = vmul.f32 %v306, %v319
        %v323 = vmul.f32 %v307, %v319
        %v324 = vmul.f32 %v308, %v319
        %v325 = vmul.f32 %v309, %v319
        %v326 = vmul.f32 %v310, %v319
        %v327 = vmul.f32 %v311, %v319
        %v328 = vmul.f32 %v312, %v319
        %v329 = vmul.f32 %v313, %v319
        %v330 = vld [vmem:[%s3] sm:$0x1]
        %v332 = vlaneseq
        %v333 = vshrl.u32 %v332, 7
        %v334 = vsub.s32 0, %v333
        %v335 = vrot.slane %v330, %v334
        %v337 = vadd.f32 %v321, %v335
        %v338 = vadd.f32 %v322, %v335
        %v339 = vadd.f32 %v323, %v335
        %v340 = vadd.f32 %v324, %v335
        %v341 = vadd.f32 %v325, %v335
        %v342 = vadd.f32 %v326, %v335
        %v343 = vadd.f32 %v327, %v335
        %v344 = vadd.f32 %v328, %v335
        %v345 = vadd.f32 %v329, %v335
        %vm346 = vcmp.gt.f32.partialorder %v337, 0.0
        %vm347 = vcmp.gt.f32.partialorder %v338, 0.0
        %vm348 = vcmp.gt.f32.partialorder %v339, 0.0
        %vm349 = vcmp.gt.f32.partialorder %v340, 0.0
        %vm350 = vcmp.gt.f32.partialorder %v341, 0.0
        %vm351 = vcmp.gt.f32.partialorder %v342, 0.0
        %vm352 = vcmp.gt.f32.partialorder %v343, 0.0
        %vm353 = vcmp.gt.f32.partialorder %v344, 0.0
        %vm354 = vcmp.gt.f32.partialorder %v345, 0.0
        %v355 = vmul.f32 %v337, 0.01
        %v356 = vmul.f32 %v338, 0.01
        %v357 = vmul.f32 %v339, 0.01
        %v358 = vmul.f32 %v340, 0.01
        %v359 = vmul.f32 %v341, 0.01
        %v360 = vmul.f32 %v342, 0.01
        %v361 = vmul.f32 %v343, 0.01
        %v362 = vmul.f32 %v344, 0.01
        %v363 = vmul.f32 %v345, 0.01
        %v364 = vsel %vm346, %v337, %v355
        %v365 = vsel %vm347, %v338, %v356
        %v366 = vsel %vm348, %v339, %v357
        %v367 = vsel %vm349, %v340, %v358
        %v368 = vsel %vm350, %v341, %v359
        %v369 = vsel %vm351, %v342, %v360
        %v370 = vsel %vm352, %v343, %v361
        %v371 = vsel %vm353, %v344, %v362
        %v372 = vsel %vm354, %v345, %v363
        %v373 = vld [vmem:[%s4] sm:$0xff]
        %v374 = vld [vmem:[%s4 + $0x8] sm:$0xff]
        %v375 = vld [vmem:[%s4 + $0x10] sm:$0xff]
        %v376 = vld [vmem:[%s4 + $0x18] sm:$0xff]
        %v377 = vld [vmem:[%s4 + $0x20] sm:$0xff]
        %v378 = vld [vmem:[%s4 + $0x28] sm:$0xff]
        %v379 = vld [vmem:[%s4 + $0x30] sm:$0xff]
        %v380 = vld [vmem:[%s4 + $0x38] sm:$0xff]
        %v381 = vld [vmem:[%s4 + $0x40] sm:$0xff]
        %383 = vset.pattern.permute.xlu0 0
        %384 = vperm.xlu0 %383, %v373
        %v385 = vpop.permute.xlu0 %384
        %388 = vset.pattern.permute.xlu0 0
        %389 = vperm.xlu0 %388, %v374
        %v390 = vpop.permute.xlu0 %389
        %393 = vset.pattern.permute.xlu0 0
        %394 = vperm.xlu0 %393, %v375
        %v395 = vpop.permute.xlu0 %394
        %398 = vset.pattern.permute.xlu0 0
        %399 = vperm.xlu0 %398, %v376
        %v400 = vpop.permute.xlu0 %399
        %403 = vset.pattern.permute.xlu0 0
        %404 = vperm.xlu0 %403, %v377
        %v405 = vpop.permute.xlu0 %404
        %408 = vset.pattern.permute.xlu0 0
        %409 = vperm.xlu0 %408, %v378
        %v410 = vpop.permute.xlu0 %409
        %413 = vset.pattern.permute.xlu0 0
        %414 = vperm.xlu0 %413, %v379
        %v415 = vpop.permute.xlu0 %414
        %418 = vset.pattern.permute.xlu0 0
        %419 = vperm.xlu0 %418, %v380
        %v420 = vpop.permute.xlu0 %419
        %423 = vset.pattern.permute.xlu0 0
        %424 = vperm.xlu0 %423, %v381
        %v425 = vpop.permute.xlu0 %424
        %v427 = vmul.f32 %v364, %v385
        %v428 = vmul.f32 %v365, %v390
        %v429 = vmul.f32 %v366, %v395
        %v430 = vmul.f32 %v367, %v400
        %v431 = vmul.f32 %v368, %v405
        %v432 = vmul.f32 %v369, %v410
        %v433 = vmul.f32 %v370, %v415
        %v434 = vmul.f32 %v371, %v420
        %v435 = vmul.f32 %v372, %v425
        %vm436 = vcmask 523264
        %437 = vst.msk [vmem:[#allocation2] sm:$0xff] %vm436, %v427
        %438 = vst.msk [vmem:[#allocation2 + $0x8] sm:$0xff] %vm436, %v428
        %439 = vst.msk [vmem:[#allocation2 + $0x10] sm:$0xff] %vm436, %v429
        %440 = vst.msk [vmem:[#allocation2 + $0x18] sm:$0xff] %vm436, %v430
        %441 = vst.msk [vmem:[#allocation2 + $0x20] sm:$0xff] %vm436, %v431
        %442 = vst.msk [vmem:[#allocation2 + $0x28] sm:$0xff] %vm436, %v432
        %443 = vst.msk [vmem:[#allocation2 + $0x30] sm:$0xff] %vm436, %v433
        %444 = vst.msk [vmem:[#allocation2 + $0x38] sm:$0xff] %vm436, %v434
        %445 = vst.msk [vmem:[#allocation2 + $0x40] sm:$0xff] %vm436, %v435
      $region44: #{dnet_forward.6} parent=39 // pred_fallthru
        _
      %v446 = vld [vmem:[#allocation2] sm:$0xff]
      %v447 = vld [vmem:[#allocation2 + $0x8] sm:$0xff]
      %v448 = vld [vmem:[#allocation2 + $0x10] sm:$0xff]
      %v449 = vld [vmem:[#allocation2 + $0x18] sm:$0xff]
      %v450 = vld [vmem:[#allocation2 + $0x1] sm:$0xff]
      %v451 = vld [vmem:[#allocation2 + $0x9] sm:$0xff]
      %v452 = vld [vmem:[#allocation2 + $0x20] sm:$0xff]
      %v453 = vld [vmem:[#allocation2 + $0x28] sm:$0xff]
      %v454 = vld [vmem:[#allocation2 + $0x30] sm:$0xff]
      %v455 = vld [vmem:[#allocation2 + $0x38] sm:$0xff]
      %v456 = vld [vmem:[#allocation2 + $0x21] sm:$0xff]
      %v457 = vld [vmem:[#allocation2 + $0x29] sm:$0xff]
      %v458 = vld [vmem:[#allocation2 + $0x3] sm:$0xff]
      %v459 = vld [vmem:[#allocation2 + $0xb] sm:$0xff]
      %v460 = vld [vmem:[#allocation2 + $0x13] sm:$0xff]
      %v461 = vld [vmem:[#allocation2 + $0x1b] sm:$0xff]
      %v462 = vld [vmem:[#allocation2 + $0x4] sm:$0xff]
      %v463 = vld [vmem:[#allocation2 + $0xc] sm:$0xff]
      %466 = vrot.lane.b32.xlu0 %v448, 64
      %v467 = vpop.permute.xlu0 %466
      %468 = vrot.lane.b32.xlu0 %v449, 64
      %v469 = vpop.permute.xlu0 %468
      %474 = vrot.lane.b32.xlu0 %v452, 64
      %v475 = vpop.permute.xlu0 %474
      %476 = vrot.lane.b32.xlu0 %v453, 64
      %v477 = vpop.permute.xlu0 %476
      %482 = vrot.lane.b32.xlu0 %v456, 64
      %v483 = vpop.permute.xlu0 %482
      %484 = vrot.lane.b32.xlu0 %v457, 64
      %v485 = vpop.permute.xlu0 %484
      %490 = vrot.lane.b32.xlu0 %v460, 64
      %v491 = vpop.permute.xlu0 %490
      %492 = vrot.lane.b32.xlu0 %v461, 64
      %v493 = vpop.permute.xlu0 %492
      %vm496 = vcmask 523264
      %v497 = vsel %vm496, %v446, %v467
      %v498 = vsel %vm496, %v447, %v469
      %v499 = vsel %vm496, %v450, %v475
      %v500 = vsel %vm496, %v451, %v477
      %v501 = vsel %vm496, %v454, %v483
      %v502 = vsel %vm496, %v455, %v485
      %v503 = vsel %vm496, %v458, %v491
      %v504 = vsel %vm496, %v459, %v493
      %v505 = vpack.c.bf16 %v498, %v497
      %v506 = vpack.c.bf16 %v500, %v499
      %v507 = vpack.c.bf16 %v502, %v501
      %v508 = vpack.c.bf16 %v504, %v503
      %v509 = vpack.c.bf16 %v463, %v462
      %v510 = vld [vmem:[%s1] sm:$0xf]
      %v511 = vld [vmem:[%s1 + $0x4] sm:$0xf]
      %v512 = vld [vmem:[%s1 + $0x8] sm:$0xf]
      %v513 = vld [vmem:[%s1 + $0xc] sm:$0xf]
      %v514 = vld [vmem:[%s1 + $0x10] sm:$0xf]
      %v515 = vld [vmem:[%s1 + $0x14] sm:$0xf]
      %v516 = vld [vmem:[%s1 + $0x18] sm:$0xf]
      %v517 = vld [vmem:[%s1 + $0x1c] sm:$0xf]
      %v518 = vld [vmem:[%s1 + $0x20] sm:$0xf]
      %v519 = vld [vmem:[%s1 + $0x24] sm:$0xf]
      %v520 = vld [vmem:[%s1 + $0x28] sm:$0xf]
      %v521 = vld [vmem:[%s1 + $0x2c] sm:$0xf]
      %v522 = vld [vmem:[%s1 + $0x30] sm:$0xf]
      %v523 = vld [vmem:[%s1 + $0x34] sm:$0xf]
      %v524 = vld [vmem:[%s1 + $0x38] sm:$0xf]
      %v525 = vld [vmem:[%s1 + $0x3c] sm:$0xf]
      %v526 = vld [vmem:[%s1 + $0x40] sm:$0xf]
      %v527 = vld [vmem:[%s1 + $0x44] sm:$0xf]
      %v528 = vld [vmem:[%s1 + $0x48] sm:$0xf]
      %v529 = vld [vmem:[%s1 + $0x4c] sm:$0xf]
      %v530 = vld [vmem:[%s1 + $0x50] sm:$0xf]
      %v531 = vld [vmem:[%s1 + $0x54] sm:$0xf]
      %v532 = vld [vmem:[%s1 + $0x58] sm:$0xf]
      %v533 = vld [vmem:[%s1 + $0x5c] sm:$0xf]
      %v534 = vld [vmem:[%s1 + $0x60] sm:$0xf]
      %v535 = vld [vmem:[%s1 + $0x64] sm:$0xf]
      %v536 = vld [vmem:[%s1 + $0x68] sm:$0xf]
      %v537 = vld [vmem:[%s1 + $0x6c] sm:$0xf]
      %v538 = vld [vmem:[%s1 + $0x70] sm:$0xf]
      %v539 = vld [vmem:[%s1 + $0x74] sm:$0xf]
      %v540 = vld [vmem:[%s1 + $0x78] sm:$0xf]
      %v541 = vld [vmem:[%s1 + $0x7c] sm:$0xf]
      %v542 = vld [vmem:[%s1 + $0x80] sm:$0xf]
      %v543 = vld [vmem:[%s1 + $0x84] sm:$0xf]
      %v544 = vld [vmem:[%s1 + $0x88] sm:$0xf]
      %v545 = vld [vmem:[%s1 + $0x8c] sm:$0xf]
      %v546 = vld [vmem:[%s1 + $0x90] sm:$0xf]
      %v547 = vld [vmem:[%s1 + $0x94] sm:$0xf]
      %v548 = vld [vmem:[%s1 + $0x98] sm:$0xf]
      %v549 = vld [vmem:[%s1 + $0x9c] sm:$0xf]
      %v550 = vld [vmem:[%s1 + $0xa0] sm:$0xf]
      %v551 = vld [vmem:[%s1 + $0xa4] sm:$0xf]
      %v552 = vld [vmem:[%s1 + $0xa8] sm:$0xf]
      %v553 = vld [vmem:[%s1 + $0xac] sm:$0xf]
      %v554 = vld [vmem:[%s1 + $0xb0] sm:$0xf]
      %v555 = vld [vmem:[%s1 + $0xb4] sm:$0xf]
      %v556 = vld [vmem:[%s1 + $0xb8] sm:$0xf]
      %v557 = vld [vmem:[%s1 + $0xbc] sm:$0xf]
      %v558 = vld [vmem:[%s1 + $0xc0] sm:$0xf]
      %v559 = vld [vmem:[%s1 + $0xc4] sm:$0xf]
      %v560 = vld [vmem:[%s1 + $0xc8] sm:$0xf]
      %v561 = vld [vmem:[%s1 + $0xcc] sm:$0xf]
      %v562 = vld [vmem:[%s1 + $0xd0] sm:$0xf]
      %v563 = vld [vmem:[%s1 + $0xd4] sm:$0xf]
      %v564 = vld [vmem:[%s1 + $0xd8] sm:$0xf]
      %v565 = vld [vmem:[%s1 + $0xdc] sm:$0xf]
      %v566 = vld [vmem:[%s1 + $0xe0] sm:$0xf]
      %v567 = vld [vmem:[%s1 + $0xe4] sm:$0xf]
      %v568 = vld [vmem:[%s1 + $0xe8] sm:$0xf]
      %v569 = vld [vmem:[%s1 + $0xec] sm:$0xf]
      %v570 = vld [vmem:[%s1 + $0xf0] sm:$0xf]
      %v571 = vld [vmem:[%s1 + $0xf4] sm:$0xf]
      %v572 = vld [vmem:[%s1 + $0xf8] sm:$0xf]
      %v573 = vld [vmem:[%s1 + $0xfc] sm:$0xf]
      %v574 = vld [vmem:[%s1 + $0x100] sm:$0xf]
      %v575 = vld [vmem:[%s1 + $0x104] sm:$0xf]
      %v576 = vld [vmem:[%s1 + $0x108] sm:$0xf]
      %v577 = vld [vmem:[%s1 + $0x10c] sm:$0xf]
      %v578 = vld [vmem:[%s1 + $0x110] sm:$0xf]
      %v579 = vld [vmem:[%s1 + $0x114] sm:$0xf]
      %v580 = vld [vmem:[%s1 + $0x118] sm:$0xf]
      %v581 = vld [vmem:[%s1 + $0x11c] sm:$0xf]
      %v654 = vunpack.c.l.b16 %v510
      %v655 = vunpack.c.l.b16 %v511
      %v656 = vunpack.c.l.b16 %v512
      %v657 = vunpack.c.l.b16 %v513
      %v658 = vunpack.c.l.b16 %v514
      %v659 = vunpack.c.l.b16 %v515
      %v660 = vunpack.c.l.b16 %v516
      %v661 = vunpack.c.l.b16 %v517
      %v662 = vunpack.c.l.b16 %v518
      %v663 = vunpack.c.l.b16 %v519
      %v664 = vunpack.c.l.b16 %v520
      %v665 = vunpack.c.l.b16 %v521
      %v666 = vunpack.c.l.b16 %v522
      %v667 = vunpack.c.l.b16 %v523
      %v668 = vunpack.c.l.b16 %v524
      %v669 = vunpack.c.l.b16 %v525
      %v670 = vunpack.c.l.b16 %v526
      %v671 = vunpack.c.l.b16 %v527
      %v672 = vunpack.c.l.b16 %v528
      %v673 = vunpack.c.l.b16 %v529
      %v674 = vunpack.c.l.b16 %v530
      %v675 = vunpack.c.l.b16 %v531
      %v676 = vunpack.c.l.b16 %v532
      %v677 = vunpack.c.l.b16 %v533
      %v678 = vunpack.c.l.b16 %v534
      %v679 = vunpack.c.l.b16 %v535
      %v680 = vunpack.c.l.b16 %v536
      %v681 = vunpack.c.l.b16 %v537
      %v682 = vunpack.c.l.b16 %v538
      %v683 = vunpack.c.l.b16 %v539
      %v684 = vunpack.c.l.b16 %v540
      %v685 = vunpack.c.l.b16 %v541
      %v686 = vunpack.c.l.b16 %v542
      %v687 = vunpack.c.l.b16 %v543
      %v688 = vunpack.c.l.b16 %v544
      %v689 = vunpack.c.l.b16 %v545
      %v690 = vunpack.c.l.b16 %v546
      %v691 = vunpack.c.l.b16 %v547
      %v692 = vunpack.c.l.b16 %v548
      %v693 = vunpack.c.l.b16 %v549
      %v694 = vunpack.c.l.b16 %v550
      %v695 = vunpack.c.l.b16 %v551
      %v696 = vunpack.c.l.b16 %v552
      %v697 = vunpack.c.l.b16 %v553
      %v698 = vunpack.c.l.b16 %v554
      %v699 = vunpack.c.l.b16 %v555
      %v700 = vunpack.c.l.b16 %v556
      %v701 = vunpack.c.l.b16 %v557
      %v702 = vunpack.c.l.b16 %v558
      %v703 = vunpack.c.l.b16 %v559
      %v704 = vunpack.c.l.b16 %v560
      %v705 = vunpack.c.l.b16 %v561
      %v706 = vunpack.c.l.b16 %v562
      %v707 = vunpack.c.l.b16 %v563
      %v708 = vunpack.c.l.b16 %v564
      %v709 = vunpack.c.l.b16 %v565
      %v710 = vunpack.c.l.b16 %v566
      %v711 = vunpack.c.l.b16 %v567
      %v712 = vunpack.c.l.b16 %v568
      %v713 = vunpack.c.l.b16 %v569
      %v714 = vunpack.c.l.b16 %v570
      %v715 = vunpack.c.l.b16 %v571
      %v716 = vunpack.c.l.b16 %v572
      %v717 = vunpack.c.l.b16 %v573
      %v718 = vunpack.c.l.b16 %v574
      %v719 = vunpack.c.l.b16 %v575
      %v720 = vunpack.c.l.b16 %v576
      %v721 = vunpack.c.l.b16 %v577
      %v722 = vunpack.c.l.b16 %v578
      %v723 = vunpack.c.l.b16 %v579
      %v724 = vunpack.c.l.b16 %v580
      %v725 = vunpack.c.l.b16 %v581
      %v726 = vpack.c.b16 %v655, %v654
      %v727 = vpack.c.b16 %v657, %v656
      %v728 = vpack.c.b16 %v659, %v658
      %v729 = vpack.c.b16 %v661, %v660
      %v730 = vpack.c.b16 %v663, %v662
      %v731 = vpack.c.b16 %v665, %v664
      %v732 = vpack.c.b16 %v667, %v666
      %v733 = vpack.c.b16 %v669, %v668
      %v734 = vpack.c.b16 %v671, %v670
      %v735 = vpack.c.b16 %v673, %v672
      %v736 = vpack.c.b16 %v675, %v674
      %v737 = vpack.c.b16 %v677, %v676
      %v738 = vpack.c.b16 %v679, %v678
      %v739 = vpack.c.b16 %v681, %v680
      %v740 = vpack.c.b16 %v683, %v682
      %v741 = vpack.c.b16 %v685, %v684
      %v742 = vpack.c.b16 %v687, %v686
      %v743 = vpack.c.b16 %v689, %v688
      %v744 = vpack.c.b16 %v691, %v690
      %v745 = vpack.c.b16 %v693, %v692
      %v746 = vpack.c.b16 %v695, %v694
      %v747 = vpack.c.b16 %v697, %v696
      %v748 = vpack.c.b16 %v699, %v698
      %v749 = vpack.c.b16 %v701, %v700
      %v750 = vpack.c.b16 %v703, %v702
      %v751 = vpack.c.b16 %v705, %v704
      %v752 = vpack.c.b16 %v707, %v706
      %v753 = vpack.c.b16 %v709, %v708
      %v754 = vpack.c.b16 %v711, %v710
      %v755 = vpack.c.b16 %v713, %v712
      %v756 = vpack.c.b16 %v715, %v714
      %v757 = vpack.c.b16 %v717, %v716
      %v758 = vpack.c.b16 %v719, %v718
      %v759 = vpack.c.b16 %v721, %v720
      %v760 = vpack.c.b16 %v723, %v722
      %v761 = vpack.c.b16 %v725, %v724
      %v799 = vsel %vm496, %v509, 0
      %801 = vmatprep.subr.bf16.mxu0 0
      %802 = vmatpush1.bf16.msra.mxu0 %v726
      %803 = vmatprep.subr.bf16.mxu0 0
      %804 = vmatpush1.bf16.msra.mxu0 %v727
      %805 = vmatprep.subr.bf16.mxu0 0
      %806 = vmatpush1.bf16.msra.mxu0 %v728
      %807 = vmatprep.subr.bf16.mxu0 0
      %808 = vmatpush1.bf16.msra.mxu0 %v729
      %809 = vmatprep.subr.bf16.mxu0 0
      %810 = vmatpush1.bf16.msra.mxu0 %v730
      %811 = vmatprep.subr.bf16.mxu0 0
      %812 = vmatpush1.bf16.msra.mxu0 %v731
      %813 = vmatprep.subr.bf16.mxu0 0
      %814 = vmatpush1.bf16.msra.mxu0 %v732
      %815 = vmatprep.subr.bf16.mxu0 0
      %816 = vmatpush1.bf16.msra.mxu0 %v733
      %817 = vmatprep.subr.bf16.mxu0 0
      %818 = vmatpush1.bf16.msra.mxu0 %v734
      %819 = vmatprep.subr.bf16.mxu0 0
      %820 = vmatpush1.bf16.msra.mxu0 %v735
      %821 = vmatprep.subr.bf16.mxu0 0
      %822 = vmatpush1.bf16.msra.mxu0 %v736
      %823 = vmatprep.subr.bf16.mxu0 0
      %824 = vmatpush1.bf16.msra.mxu0 %v737
      %825 = vmatprep.subr.bf16.mxu0 0
      %826 = vmatpush1.bf16.msra.mxu0 %v738
      %827 = vmatprep.subr.bf16.mxu0 0
      %828 = vmatpush1.bf16.msra.mxu0 %v739
      %829 = vmatprep.subr.bf16.mxu0 0
      %830 = vmatpush1.bf16.msra.mxu0 %v740
      %831 = vmatprep.subr.bf16.mxu0 0
      %832 = vmatpush1.bf16.msra.mxu0 %v741
      %833 = vmatprep.mubr.bf16.mxu0 %v506
      %834 = vmatmul.mubr.bf16.gmra.mrb[0].mxu0 %v505
      %v835 = vpop.f32.mrb[0].mxu0
      %v836 = vadd.f32 0.0, %v835
      %v837 = vpop.f32.mrb[0].mxu0
      %v838 = vpop.f32.mrb[0].mxu0
      %v839 = vadd.f32 0.0, %v838
      %v840 = vpop.f32.mrb[0].mxu0
      %841 = vdwg.mxu0
      %842 = vmatprep.subr.bf16.mxu0 0
      %843 = vmatpush1.bf16.msra.mxu0 %v742
      %844 = vmatprep.subr.bf16.mxu0 0
      %845 = vmatpush1.bf16.msra.mxu0 %v743
      %846 = vmatprep.subr.bf16.mxu0 0
      %847 = vmatpush1.bf16.msra.mxu0 %v744
      %848 = vmatprep.subr.bf16.mxu0 0
      %849 = vmatpush1.bf16.msra.mxu0 %v745
      %850 = vmatprep.subr.bf16.mxu0 0
      %851 = vmatpush1.bf16.msra.mxu0 %v746
      %852 = vmatprep.subr.bf16.mxu0 0
      %853 = vmatpush1.bf16.msra.mxu0 %v747
      %854 = vmatprep.subr.bf16.mxu0 0
      %855 = vmatpush1.bf16.msra.mxu0 %v748
      %856 = vmatprep.subr.bf16.mxu0 0
      %857 = vmatpush1.bf16.msra.mxu0 %v749
      %858 = vmatprep.subr.bf16.mxu0 0
      %859 = vmatpush1.bf16.msra.mxu0 %v750
      %860 = vmatprep.subr.bf16.mxu0 0
      %861 = vmatpush1.bf16.msra.mxu0 %v751
      %862 = vmatprep.subr.bf16.mxu0 0
      %863 = vmatpush1.bf16.msra.mxu0 %v752
      %864 = vmatprep.subr.bf16.mxu0 0
      %865 = vmatpush1.bf16.msra.mxu0 %v753
      %866 = vmatprep.subr.bf16.mxu0 0
      %867 = vmatpush1.bf16.msra.mxu0 %v754
      %868 = vmatprep.subr.bf16.mxu0 0
      %869 = vmatpush1.bf16.msra.mxu0 %v755
      %870 = vmatprep.subr.bf16.mxu0 0
      %871 = vmatpush1.bf16.msra.mxu0 %v756
      %872 = vmatprep.subr.bf16.mxu0 0
      %873 = vmatpush1.bf16.msra.mxu0 %v757
      %874 = vmatprep.mubr.bf16.mxu0 %v508
      %875 = vmatmul.mubr.bf16.gmra.mrb[0].mxu0 %v507
      %v876 = vpop.f32.mrb[0].mxu0
      %v877 = vadd.f32 %v836, %v876
      %v878 = vpop.f32.mrb[0].mxu0
      %v879 = vpop.f32.mrb[0].mxu0
      %v880 = vadd.f32 %v839, %v879
      %v881 = vpop.f32.mrb[0].mxu0
      %882 = vdwg.mxu0
      %883 = vmatprep.subr.bf16.mxu0 0
      %884 = vmatpush1.bf16.msra.mxu0 %v758
      %885 = vmatprep.subr.bf16.mxu0 0
      %886 = vmatpush1.bf16.msra.mxu0 %v759
      %887 = vmatprep.subr.bf16.mxu0 0
      %888 = vmatpush1.bf16.msra.mxu0 %v760
      %889 = vmatprep.subr.bf16.mxu0 0
      %890 = vmatpush1.bf16.msra.mxu0 %v761
      %891 = vmatprep.subr.bf16.mxu0 0
      %892 = vmatpush1.bf16.msra.mxu0 0
      %893 = vmatprep.subr.bf16.mxu0 0
      %894 = vmatpush1.bf16.msra.mxu0 0
      %895 = vmatprep.subr.bf16.mxu0 0
      %896 = vmatpush1.bf16.msra.mxu0 0
      %897 = vmatprep.subr.bf16.mxu0 0
      %898 = vmatpush1.bf16.msra.mxu0 0
      %899 = vmatprep.subr.bf16.mxu0 0
      %900 = vmatpush1.bf16.msra.mxu0 0
      %901 = vmatprep.subr.bf16.mxu0 0
      %902 = vmatpush1.bf16.msra.mxu0 0
      %903 = vmatprep.subr.bf16.mxu0 0
      %904 = vmatpush1.bf16.msra.mxu0 0
      %905 = vmatprep.subr.bf16.mxu0 0
      %906 = vmatpush1.bf16.msra.mxu0 0
      %907 = vmatprep.subr.bf16.mxu0 0
      %908 = vmatpush1.bf16.msra.mxu0 0
      %909 = vmatprep.subr.bf16.mxu0 0
      %910 = vmatpush1.bf16.msra.mxu0 0
      %911 = vmatprep.subr.bf16.mxu0 0
      %912 = vmatpush1.bf16.msra.mxu0 0
      %913 = vmatprep.subr.bf16.mxu0 0
      %914 = vmatpush1.bf16.msra.mxu0 0
      %915 = vmatprep.mubr.bf16.mxu0 0
      %916 = vmatmul.mubr.bf16.gmra.mrb[0].mxu0 %v799
      %v917 = vpop.f32.mrb[0].mxu0
      %v918 = vadd.f32 %v877, %v917
      %v919 = vpop.f32.mrb[0].mxu0
      %v920 = vpop.f32.mrb[0].mxu0
      %v921 = vadd.f32 %v880, %v920
      %v922 = vpop.f32.mrb[0].mxu0
      %923 = vdwg.mxu0
      %v924 = vpack.c.bf16 %v921, %v918
      %v926 = vunpack.c.l.b16 %v924
      %v927 = vunpack.c.h.b16 %v924
      %v928 = vpack.c.b16 %v926, %v926
      %v929 = vpack.c.b16 %v927, %v927
      %932 = vst [vmem:[%s283] sm:$0xf] %v928
      %933 = vst [vmem:[%s283 + $0x4] sm:$0xf] %v929
      %v934 = vlaneseq
      %v935 = vshrl.u32 %v934, 7
      %v936 = vadd.s32 %v935, 8
      %vm937 = vcmp.lt.s32.totalorder %v935, 0
      %v938 = vsub.s32 0, %v935
      %v939 = vsel %vm937, %v938, %v935
      %v940 = vmul.u32.u64.compose %v939, 2863311531
      %v941 = vextract.low.u32 %v940
      %v942 = vextract.high.u32 %v940
      %v943 = vshrl.u32 %v942, 1
      %v944 = vmul.u32 %v943, 3
      %v945 = vsub.s32 %v939, %v944
      %v946 = vsub.s32 0, %v945
      %v947 = vsel %vm937, %v946, %v945
      %vm948 = vcmp.lt.s32.totalorder %v936, 0
      %v949 = vsub.s32 0, %v936
      %v950 = vsel %vm948, %v949, %v936
      %v951 = vmul.u32.u64.compose %v950, 2863311531
      %v952 = vextract.low.u32 %v951
      %v953 = vextract.high.u32 %v951
      %v954 = vshrl.u32 %v953, 1
      %v955 = vmul.u32 %v954, 3
      %v956 = vsub.s32 %v950, %v955
      %v957 = vsub.s32 0, %v956
      %v958 = vsel %vm948, %v957, %v956
      %vm959 = vcmp.ne.s32.totalorder %v947, 0
      %vm960 = vcmp.ne.s32.totalorder %v958, 0
      %vm961 = vcmp.lt.s32.totalorder %v947, 0
      %vm962 = vcmp.lt.s32.totalorder %v958, 0
      %vm963 = vmand %vm961, %vm959
      %vm964 = vmand %vm962, %vm960
      %v965 = vadd.s32 %v947, 3
      %v966 = vadd.s32 %v958, 3
      %v967 = vsel %vm963, %v965, %v947
      %v968 = vsel %vm964, %v966, %v958
      %vm969 = vcmp.ne.s32.totalorder %v967, 2
      %vm970 = vcmp.ne.s32.totalorder %v968, 2
      %vm971 = vcmp.lt.s32.totalorder %v935, 6
      %vm972 = vcmp.lt.s32.totalorder %v936, 6
      %vm973 = vmand %vm969, %vm971
      %vm974 = vmand %vm970, %vm972
      %v975 = vsel %vm973, 1, 0
      %v976 = vsel %vm974, 1, 0
      %vm977 = vcmp.eq.s32.totalorder %v975, 1
      %vm978 = vcmp.eq.s32.totalorder %v976, 1
      %v979 = vsel %vm977, %v918, 0.0
      %v980 = vsel %vm978, %v921, 0.0
      %v981 = vadd.f32 %v979, %v980
      %v982 = vrot.slane %v981, 4
      %v983 = vadd.f32 %v981, %v982
      %v984 = vrot.slane %v983, 2
      %v985 = vadd.f32 %v983, %v984
      %v986 = vrot.slane %v985, 1
      %v987 = vadd.f32 %v985, %v986
      %988 = vst [vmem:[%s289] sm:$0x1] %v987
      %v989 = vmul.f32 %v979, %v979
      %v990 = vmul.f32 %v980, %v980
      %v991 = vadd.f32 %v989, %v990
      %v992 = vrot.slane %v991, 4
      %v993 = vadd.f32 %v991, %v992
      %v994 = vrot.slane %v993, 2
      %v995 = vadd.f32 %v993, %v994
      %v996 = vrot.slane %v995, 1
      %v997 = vadd.f32 %v995, %v996
      %998 = vst [vmem:[%s289 + $0x1] sm:$0x1] %v997
      %s999 = smul.u32 2, %s23
      %p1000 = scmp.lt.s32.totalorder %s22, 1
      %s1001 = scalar_select %p1000, %s22, 1
      %p1002 = scmp.lt.s32.totalorder %s999, 1
      %s1003 = scalar_select %p1002, %s999, 1
      %s1004 = smul.addr %s1001, 2
      %s1005 = sadd.s32 %s1003, %s1004
      %s1006 = smul.addr %s1005, 4
      %s1007 = scalar_lea.vmem %s5, %s1006
      %s1008 = sadd.s32 %s22, %s23
      %p1009 = scmp.lt.s32.totalorder %s1008, 1
      %s1010 = scalar_select %p1009, %s1008, 1
      %s1011 = smul.addr %s1010, 2
      %s1012 = scalar_lea.vmem %s6, %s1011
      // Predicated region
      $region45: #{dnet_forward.6} parent=39 // pred_check
        %p1013 = pneg %p160
      $region46: #{dnet_forward.6} parent=39 // pred_check_branch
        %1015 = sbr.rel (%p1013) target = $region48
      $region47: #{dnet_forward.6} parent=39 // pred_region
        %s1016 = smul.u32 2, %s23
      $region48: #{dnet_forward.6} parent=39 // pred_fallthru
        _
      // Predicated region
      $region49: #{dnet_forward.6} parent=39 // pred_check
        %p1017 = pneg %p188
      $region50: #{dnet_forward.6} parent=39 // pred_check_branch
        %1019 = sbr.rel (%p1017) target = $region52
      $region51: #{dnet_forward.6} parent=39 // pred_region
        %s1020 = sadd.s32 %s22, %s23
      $region52: #{dnet_forward.6} parent=39 // pred_fallthru
        _
    $region40: #{dnet_forward.6} parent=5 // pred_fallthru
      _
    %p1021 = scmp.le.s32.totalorder 2, %s13
    // Predicated region
    $region53: #{dnet_forward.6} parent=5 // pred_check
      %p1022 = pneg %p1021
    $region54: #{dnet_forward.6} parent=5 // pred_check_branch
      %1024 = sbr.rel (%p1022) target = $region56
    $region55: #{dnet_forward.6} parent=5 // pred_region
      %s1025 = ssub.s32 %s13, 2
      // Predicated region
      $region57: #{dnet_forward.6} parent=55 // pred_check
        %p1026 = pneg %p166
      $region58: #{dnet_forward.6} parent=55 // pred_check_branch
        %1028 = sbr.rel (%p1026) target = $region60
      $region59: #{dnet_forward.6} parent=55 // pred_region
        %s1029 = smul.u32 2, %s25
        %p1030 = scmp.lt.s32.totalorder %s24, 1
        %s1031 = scalar_select %p1030, %s24, 1
        %p1032 = scmp.lt.s32.totalorder %s1029, 1
        %s1033 = scalar_select %p1032, %s1029, 1
        %s1034 = smul.addr %s1031, 2
        %s1035 = sadd.s32 %s1033, %s1034
        %s1036 = smul.addr %s1035, 4
        %s1037 = scalar_lea.vmem %s5, %s1036
      $region60: #{dnet_forward.6} parent=55 // pred_fallthru
        _
      // Predicated region
      $region61: #{dnet_forward.6} parent=55 // pred_check
        %p1038 = pneg %p194
      $region62: #{dnet_forward.6} parent=55 // pred_check_branch
        %1040 = sbr.rel (%p1038) target = $region64
      $region63: #{dnet_forward.6} parent=55 // pred_region
        %s1041 = sadd.s32 %s24, %s25
        %p1042 = scmp.lt.s32.totalorder %s1041, 1
        %s1043 = scalar_select %p1042, %s1041, 1
        %s1044 = smul.addr %s1043, 2
        %s1045 = scalar_lea.vmem %s6, %s1044
      $region64: #{dnet_forward.6} parent=55 // pred_fallthru
        _
    $region56: #{dnet_forward.6} parent=5 // pred_fallthru
      _
  $region6: #{dnet_forward.6} parent=0 // loop_footer
    %s17 = sadd.s32 1, %s13
  $region7: #{dnet_forward.6} parent=0 // loop_footer_branch
    %12 = sbr.rel target = $region3
  $region8: #{dnet_forward.6} parent=0 // loop_exit
    _

// kernel: dnet_forward.7
$region0: #{dnet_forward.7}
  #allocation0 [shape = 'u32[]', space=smem, size = 0x4, offset = 0x4, fixed_abs, tag = 'smem constant byte address 0x4 - core index']
  #allocation1 [shape = 'u32[144,128]{1,0:T(1,128)}', space=vmem, size = 0x12000, scoped, tag = 'internal scratch']
  #allocation2 [shape = 'f32[1,1]{1,0:T(1,128)S(1)}', space=vmem, size = 0x200, scoped, tag = 'scoped memory for dnet_forward.7']
  %s0 = inlined_call_operand.vmem [shape: bf16[2,16,128], index: 0, kind: input, shape index: {}]
  %s1 = inlined_call_operand.vmem [shape: f32[1,128], index: 1, kind: input, shape index: {}]
  %s2 = inlined_call_operand.vmem [shape: f32[1,128], index: 2, kind: input, shape index: {}]
  %s3 = inlined_call_operand.vmem [shape: f32[1,128], index: 3, kind: input, shape index: {}]
  %s4 = inlined_call_operand.<no memory space> [shape: f32[1,1], index: 4, kind: input, shape index: {}]
  %s5 = inlined_call_operand.vmem [shape: f32[2,1,128], index: 5, kind: output, shape index: {}]
  %s6 = sld [smem:[#allocation0]]
  $region53: #{dnet_forward.7} parent=0
    _
  %s8 = ssub.s32 1, %s6
  %s9 = scalar_select 0, %s8, %s6
  %v10 = vstv %s4
  %11 = vst [vmem:[#allocation2] sm:$0x1] %v10
  loop: start=0, step=1, limit=4
  $region2: #{dnet_forward.7} parent=0 // loop_pre_header
    _
  $region3: #{dnet_forward.7} parent=0 // loop_header
    %s13 = sphi 0, %s17
    %p14 = scmp.ge.s32.totalorder %s13, 4
    %s23 = sphi 0, %s25
    %s26 = sphi 0, %s23
    %s27 = sphi 0, %s26
    %s43 = sphi 0, %s27
    %s47 = sphi 0, %s47
    %s49 = sphi 0, %s47
    %s50 = sphi 0, %s49
    %s64 = sphi 0, %s50
    %s68 = sphi 0, %s68
    %s70 = sphi 0, %s68
    %s71 = sphi 0, %s70
    %s85 = sphi 0, %s71
    %s89 = sphi 0, %s89
    %s91 = sphi 0, %s89
    %s92 = sphi 0, %s91
    %s106 = sphi 0, %s92
    %s110 = sphi 0, %s110
    %s112 = sphi 0, %s110
    %s113 = sphi 0, %s112
    %s127 = sphi 0, %s113
    %s133 = sphi 0, %s135
    %s136 = sphi 0, %s133
    %s137 = sphi 0, %s136
    %s153 = sphi 0, %s137
  $region4: #{dnet_forward.7} parent=0 // loop_header_branch
    %16 = sbr.rel (%p14) target = $region8
  $region5: #{dnet_forward.7} parent=0 // loop_body
    %s18 = ssub.s32 %s13, 1
    %s19 = ssub.s32 %s13, 2
    %s20 = sadd.s32 %s13, 1
    %s21 = ssub.s32 %s13, %s20
    %p22 = scmp.eq.s32.totalorder %s21, 0
    %s24 = sadd.s32 %s23, 1
    %s25 = scalar_select %p22, %s23, %s24
    %p28 = pneg %p22
    %p29 = scmp.eq.s32.totalorder %s13, 1
    %p30 = por %p28, %p29
    %p31 = scmp.ne.s32.totalorder %s23, %s26
    %p32 = scmp.eq.s32.totalorder %s13, 0
    %p33 = por %p31, %p32
    %p34 = scmp.ne.s32.totalorder %s23, %s26
    %p35 = scmp.eq.s32.totalorder %s18, 1
    %p36 = por %p34, %p35
    %p37 = scmp.ne.s32.totalorder %s26, %s27
    %p38 = scmp.eq.s32.totalorder %s18, 0
    %p39 = por %p37, %p38
    %p40 = scmp.ne.s32.totalorder %s26, %s27
    %p41 = scmp.eq.s32.totalorder %s19, 1
    %p42 = por %p40, %p41
    %p44 = scmp.ne.s32.totalorder %s27, %s43
    %p45 = scmp.eq.s32.totalorder %s19, 0
    %p46 = por %p44, %p45
    %s48 = sadd.s32 %s47, 1
    %p51 = scmp.eq.s32.totalorder %s13, 1
    %p52 = scmp.ne.s32.totalorder %s47, %s49
    %p53 = scmp.eq.s32.totalorder %s13, 0
    %p54 = por %p52, %p53
    %p55 = scmp.ne.s32.totalorder %s47, %s49
    %p56 = scmp.eq.s32.totalorder %s18, 1
    %p57 = por %p55, %p56
    %p58 = scmp.ne.s32.totalorder %s49, %s50
    %p59 = scmp.eq.s32.totalorder %s18, 0
    %p60 = por %p58, %p59
    %p61 = scmp.ne.s32.totalorder %s49, %s50
    %p62 = scmp.eq.s32.totalorder %s19, 1
    %p63 = por %p61, %p62
    %p65 = scmp.ne.s32.totalorder %s50, %s64
    %p66 = scmp.eq.s32.totalorder %s19, 0
    %p67 = por %p65, %p66
    %s69 = sadd.s32 %s68, 1
    %p72 = scmp.eq.s32.totalorder %s13, 1
    %p73 = scmp.ne.s32.totalorder %s68, %s70
    %p74 = scmp.eq.s32.totalorder %s13, 0
    %p75 = por %p73, %p74
    %p76 = scmp.ne.s32.totalorder %s68, %s70
    %p77 = scmp.eq.s32.totalorder %s18, 1
    %p78 = por %p76, %p77
    %p79 = scmp.ne.s32.totalorder %s70, %s71
    %p80 = scmp.eq.s32.totalorder %s18, 0
    %p81 = por %p79, %p80
    %p82 = scmp.ne.s32.totalorder %s70, %s71
    %p83 = scmp.eq.s32.totalorder %s19, 1
    %p84 = por %p82, %p83
    %p86 = scmp.ne.s32.totalorder %s71, %s85
    %p87 = scmp.eq.s32.totalorder %s19, 0
    %p88 = por %p86, %p87
    %s90 = sadd.s32 %s89, 1
    %p93 = scmp.eq.s32.totalorder %s13, 1
    %p94 = scmp.ne.s32.totalorder %s89, %s91
    %p95 = scmp.eq.s32.totalorder %s13, 0
    %p96 = por %p94, %p95
    %p97 = scmp.ne.s32.totalorder %s89, %s91
    %p98 = scmp.eq.s32.totalorder %s18, 1
    %p99 = por %p97, %p98
    %p100 = scmp.ne.s32.totalorder %s91, %s92
    %p101 = scmp.eq.s32.totalorder %s18, 0
    %p102 = por %p100, %p101
    %p103 = scmp.ne.s32.totalorder %s91, %s92
    %p104 = scmp.eq.s32.totalorder %s19, 1
    %p105 = por %p103, %p104
    %p107 = scmp.ne.s32.totalorder %s92, %s106
    %p108 = scmp.eq.s32.totalorder %s19, 0
    %p109 = por %p107, %p108
    %s111 = sadd.s32 %s110, 1
    %p114 = scmp.eq.s32.totalorder %s13, 1
    %p115 = scmp.ne.s32.totalorder %s110, %s112
    %p116 = scmp.eq.s32.totalorder %s13, 0
    %p117 = por %p115, %p116
    %p118 = scmp.ne.s32.totalorder %s110, %s112
    %p119 = scmp.eq.s32.totalorder %s18, 1
    %p120 = por %p118, %p119
    %p121 = scmp.ne.s32.totalorder %s112, %s113
    %p122 = scmp.eq.s32.totalorder %s18, 0
    %p123 = por %p121, %p122
    %p124 = scmp.ne.s32.totalorder %s112, %s113
    %p125 = scmp.eq.s32.totalorder %s19, 1
    %p126 = por %p124, %p125
    %p128 = scmp.ne.s32.totalorder %s113, %s127
    %p129 = scmp.eq.s32.totalorder %s19, 0
    %p130 = por %p128, %p129
    %s131 = ssub.s32 %s13, %s20
    %p132 = scmp.eq.s32.totalorder %s131, 0
    %s134 = sadd.s32 %s133, 1
    %s135 = scalar_select %p132, %s133, %s134
    %p138 = pneg %p132
    %p139 = scmp.eq.s32.totalorder %s13, 1
    %p140 = por %p138, %p139
    %p141 = scmp.ne.s32.totalorder %s133, %s136
    %p142 = scmp.eq.s32.totalorder %s13, 0
    %p143 = por %p141, %p142
    %p144 = scmp.ne.s32.totalorder %s133, %s136
    %p145 = scmp.eq.s32.totalorder %s18, 1
    %p146 = por %p144, %p145
    %p147 = scmp.ne.s32.totalorder %s136, %s137
    %p148 = scmp.eq.s32.totalorder %s18, 0
    %p149 = por %p147, %p148
    %p150 = scmp.ne.s32.totalorder %s136, %s137
    %p151 = scmp.eq.s32.totalorder %s19, 1
    %p152 = por %p150, %p151
    %p154 = scmp.ne.s32.totalorder %s137, %s153
    %p155 = scmp.eq.s32.totalorder %s19, 0
    %p156 = por %p154, %p155
    %p157 = scmp.le.s32.totalorder 1, %s13
    %p158 = scmp.lt.s32.totalorder %s13, 3
    %p159 = pnand %p157, %p158
    %p160 = pneg %p159
    // Predicated region
    $region9: #{dnet_forward.7} parent=5 // pred_check
      _
    $region10: #{dnet_forward.7} parent=5 // pred_check_branch
      %162 = sbr.rel (%p159) target = $region12
    $region11: #{dnet_forward.7} parent=5 // pred_region
      %s163 = ssub.s32 %s13, 1
      // Predicated region
      $region13: #{dnet_forward.7} parent=11 // pred_check
        %p164 = pneg %p60
      $region14: #{dnet_forward.7} parent=11 // pred_check_branch
        %166 = sbr.rel (%p164) target = $region16
      $region15: #{dnet_forward.7} parent=11 // pred_region
        _
      $region16: #{dnet_forward.7} parent=11 // pred_fallthru
        _
      // Predicated region
      $region17: #{dnet_forward.7} parent=11 // pred_check
        %p167 = pneg %p81
      $region18: #{dnet_forward.7} parent=11 // pred_check_branch
        %169 = sbr.rel (%p167) target = $region20
      $region19: #{dnet_forward.7} parent=11 // pred_region
        _
      $region20: #{dnet_forward.7} parent=11 // pred_fallthru
        _
      // Predicated region
      $region21: #{dnet_forward.7} parent=11 // pred_check
        %p170 = pneg %p102
      $region22: #{dnet_forward.7} parent=11 // pred_check_branch
        %172 = sbr.rel (%p170) target = $region24
      $region23: #{dnet_forward.7} parent=11 // pred_region
        _
      $region24: #{dnet_forward.7} parent=11 // pred_fallthru
        _
      // Predicated region
      $region25: #{dnet_forward.7} parent=11 // pred_check
        %p173 = pneg %p123
      $region26: #{dnet_forward.7} parent=11 // pred_check_branch
        %175 = sbr.rel (%p173) target = $region28
      $region27: #{dnet_forward.7} parent=11 // pred_region
        _
      $region28: #{dnet_forward.7} parent=11 // pred_fallthru
        _
    $region12: #{dnet_forward.7} parent=5 // pred_fallthru
      _
    %p176 = scmp.lt.s32.totalorder %s13, 2
    // Predicated region
    $region29: #{dnet_forward.7} parent=5 // pred_check
      %p177 = pneg %p176
    $region30: #{dnet_forward.7} parent=5 // pred_check_branch
      %179 = sbr.rel (%p177) target = $region32
    $region31: #{dnet_forward.7} parent=5 // pred_region
      // Predicated region
      $region33: #{dnet_forward.7} parent=31 // pred_check
        %p180 = pneg %p33
      $region34: #{dnet_forward.7} parent=31 // pred_check_branch
        %182 = sbr.rel (%p180) target = $region36
      $region35: #{dnet_forward.7} parent=31 // pred_region
        %p183 = scmp.lt.s32.totalorder %s13, 1
        %s184 = scalar_select %p183, %s13, 1
        %s185 = smul.addr %s184, 2
        %s186 = smul.addr %s185, 4
        %s187 = scalar_lea.vmem %s0, %s186
      $region36: #{dnet_forward.7} parent=31 // pred_fallthru
        _
    $region32: #{dnet_forward.7} parent=5 // pred_fallthru
      _
    %p188 = scmp.le.s32.totalorder 1, %s13
    %p189 = scmp.lt.s32.totalorder %s13, 3
    %p190 = pnand %p188, %p189
    %p191 = pneg %p190
    // Predicated region
    $region37: #{dnet_forward.7} parent=5 // pred_check
      _
    $region38: #{dnet_forward.7} parent=5 // pred_check_branch
      %193 = sbr.rel (%p190) target = $region40
    $region39: #{dnet_forward.7} parent=5 // pred_region
      %s194 = ssub.s32 %s13, 1
      %p195 = scmp.lt.s32.totalorder %s18, 1
      %s196 = scalar_select %p195, %s18, 1
      %s197 = smul.addr %s196, 2
      %s198 = smul.addr %s197, 4
      %s199 = scalar_lea.vmem %s0, %s198
      %p200 = pneg %p39
      %p201 = pneg %p36
      %p202 = pneg %p60
      %p203 = pneg %p57
      %p204 = pneg %p81
      %p205 = pneg %p78
      %p206 = pneg %p102
      %p207 = pneg %p99
      %p208 = pneg %p123
      %p209 = pneg %p120
      %p210 = pneg %p149
      %p211 = pneg %p146
      %p212 = scmp.lt.s32.totalorder %s18, 1
      %s213 = scalar_select %p212, %s18, 1
      %s214 = scalar_lea.vmem %s5, %s213
      %p215 = scmp.lt.s32.totalorder %s18, 1
      %s216 = scalar_select %p215, %s18, 1
      %s217 = smul.addr %s216, 2
      %s218 = smul.addr %s217, 4
      %s219 = scalar_lea.vmem %s0, %s218
      %p220 = scmp.lt.s32.totalorder %s18, 1
      %s221 = scalar_select %p220, %s18, 1
      %s222 = scalar_lea.vmem %s5, %s221
      %v223 = vld [vmem:[%s219] sm:$0xf]
      %v224 = vld [vmem:[%s219 + $0x4] sm:$0xf]
      %v225 = vunpack.c.l.bf16 %v223
      %v226 = vunpack.c.l.bf16 %v224
      %v227 = vld [vmem:[%s1] sm:$0x1]
      %v229 = vlaneseq
      %v230 = vshrl.u32 %v229, 7
      %v231 = vsub.s32 0, %v230
      %v232 = vrot.slane %v227, %v231
      %v234 = vmul.f32 %v225, %v232
      %v235 = vmul.f32 %v226, %v232
      %v236 = vld [vmem:[%s2] sm:$0x1]
      %v238 = vlaneseq
      %v239 = vshrl.u32 %v238, 7
      %v240 = vsub.s32 0, %v239
      %v241 = vrot.slane %v236, %v240
      %v243 = vadd.f32 %v234, %v241
      %v244 = vadd.f32 %v235, %v241
      %vm245 = vcmp.gt.f32.partialorder %v243, 0.0
      %vm246 = vcmp.gt.f32.partialorder %v244, 0.0
      %v247 = vmul.f32 %v243, 0.01
      %v248 = vmul.f32 %v244, 0.01
      %v249 = vsel %vm245, %v243, %v247
      %v250 = vsel %vm246, %v244, %v248
      %v251 = vlaneseq
      %v252 = vshrl.u32 %v251, 7
      %v253 = vadd.s32 %v252, 8
      %vm254 = vcmp.lt.s32.totalorder %v252, 0
      %v255 = vsub.s32 0, %v252
      %v256 = vsel %vm254, %v255, %v252
      %v257 = vmul.u32.u64.compose %v256, 2863311531
      %v258 = vextract.low.u32 %v257
      %v259 = vextract.high.u32 %v257
      %v260 = vshrl.u32 %v259, 1
      %v261 = vmul.u32 %v260, 3
      %v262 = vsub.s32 %v256, %v261
      %v263 = vsub.s32 0, %v262
      %v264 = vsel %vm254, %v263, %v262
      %vm265 = vcmp.lt.s32.totalorder %v253, 0
      %v266 = vsub.s32 0, %v253
      %v267 = vsel %vm265, %v266, %v253
      %v268 = vmul.u32.u64.compose %v267, 2863311531
      %v269 = vextract.low.u32 %v268
      %v270 = vextract.high.u32 %v268
      %v271 = vshrl.u32 %v270, 1
      %v272 = vmul.u32 %v271, 3
      %v273 = vsub.s32 %v267, %v272
      %v274 = vsub.s32 0, %v273
      %v275 = vsel %vm265, %v274, %v273
      %vm276 = vcmp.ne.s32.totalorder %v264, 0
      %vm277 = vcmp.ne.s32.totalorder %v275, 0
      %vm278 = vcmp.lt.s32.totalorder %v264, 0
      %vm279 = vcmp.lt.s32.totalorder %v275, 0
      %vm280 = vmand %vm278, %vm276
      %vm281 = vmand %vm279, %vm277
      %v282 = vadd.s32 %v264, 3
      %v283 = vadd.s32 %v275, 3
      %v284 = vsel %vm280, %v282, %v264
      %v285 = vsel %vm281, %v283, %v275
      %vm286 = vcmp.ne.s32.totalorder %v284, 2
      %vm287 = vcmp.ne.s32.totalorder %v285, 2
      %vm288 = vcmp.lt.s32.totalorder %v252, 6
      %vm289 = vcmp.lt.s32.totalorder %v253, 6
      %vm290 = vmand %vm286, %vm288
      %vm291 = vmand %vm287, %vm289
      %v292 = vsel %vm290, 1, 0
      %v293 = vsel %vm291, 1, 0
      %vm294 = vcmp.eq.s32.totalorder %v292, 1
      %vm295 = vcmp.eq.s32.totalorder %v293, 1
      %v296 = vsel %vm294, %v249, 0.0
      %v297 = vsel %vm295, %v250, 0.0
      %v298 = vadd.f32 %v296, %v297
      %v299 = vrot.slane %v298, 4
      %v300 = vadd.f32 %v298, %v299
      %v301 = vrot.slane %v300, 2
      %v302 = vadd.f32 %v300, %v301
      %v303 = vrot.slane %v302, 1
      %v304 = vadd.f32 %v302, %v303
      %v305 = vmul.f32 %v304, 0.25
      %v306 = vld [vmem:[%s3] sm:$0x1]
      %v307 = vmul.f32 %v305, %v306
      %vm308 = vcmask 1040384
      %v309 = vsel %vm308, %v307, 0.0
      %310 = vadd.xlane.f32.xlu0 %v309
      %v311 = vpop.xlane.xlu0 %310
      %v312 = vld [vmem:[#allocation2] sm:$0x1]
      %v313 = vadd.f32 %v311, %v312
      %315 = vset.pattern.permute.xlu0 0
      %316 = vperm.xlu0 %315, %v313
      %v317 = vpop.permute.xlu0 %316
      %v319 = vadd.f32 %v317, 0.0
      %320 = vst [vmem:[%s222] sm:$0x1] %v319
      %p321 = scmp.lt.s32.totalorder %s18, 1
      %s322 = scalar_select %p321, %s18, 1
      %s323 = scalar_lea.vmem %s5, %s322
      // Predicated region
      $region41: #{dnet_forward.7} parent=39 // pred_check
        %p324 = pneg %p146
      $region42: #{dnet_forward.7} parent=39 // pred_check_branch
        %326 = sbr.rel (%p324) target = $region44
      $region43: #{dnet_forward.7} parent=39 // pred_region
        _
      $region44: #{dnet_forward.7} parent=39 // pred_fallthru
        _
    $region40: #{dnet_forward.7} parent=5 // pred_fallthru
      _
    %p327 = scmp.le.s32.totalorder 2, %s13
    // Predicated region
    $region45: #{dnet_forward.7} parent=5 // pred_check
      %p328 = pneg %p327
    $region46: #{dnet_forward.7} parent=5 // pred_check_branch
      %330 = sbr.rel (%p328) target = $region48
    $region47: #{dnet_forward.7} parent=5 // pred_region
      %s331 = ssub.s32 %s13, 2
      // Predicated region
      $region49: #{dnet_forward.7} parent=47 // pred_check
        %p332 = pneg %p152
      $region50: #{dnet_forward.7} parent=47 // pred_check_branch
        %334 = sbr.rel (%p332) target = $region52
      $region51: #{dnet_forward.7} parent=47 // pred_region
        %p335 = scmp.lt.s32.totalorder %s19, 1
        %s336 = scalar_select %p335, %s19, 1
        %s337 = scalar_lea.vmem %s5, %s336
      $region52: #{dnet_forward.7} parent=47 // pred_fallthru
        _
    $region48: #{dnet_forward.7} parent=5 // pred_fallthru
      _
  $region6: #{dnet_forward.7} parent=0 // loop_footer
    %s17 = sadd.s32 1, %s13
  $region7: #{dnet_forward.7} parent=0 // loop_footer_branch
    %12 = sbr.rel target = $region3
  $region8: #{dnet_forward.7} parent=0 // loop_exit
    _

</llo_original>
